<compile_context>
chip_gen: v7x
topology: tpu7x:2x2x1
jax: 0.10.0
libtpu: 0.0.40
codegen_flags: <defaults>
</compile_context>

<pallas_src>
from functools import partial

import jax
import jax.numpy as jnp
from jax.experimental import pallas as pl
from jax.experimental.pallas import tpu as pltpu


def _silu(x):
    return x * jax.nn.sigmoid(x)


def _block_diag(w, reps):
    """(Ci,Co) -> (reps*Ci, reps*Co) block-diagonal matrix with `w` on every block."""
    ci, co = w.shape
    eye = jnp.eye(reps, dtype=w.dtype)
    return jnp.einsum("ab,ij->aibj", eye, w).reshape(reps * ci, reps * co)


# ---------------------------------------------------------------------------
# Fused MBConv kernel: one grid step == Bb samples, everything VMEM-resident.
# Activations use the lane-folded layout  a[b, h, w*C + c]  (last dim -> lanes).
# ---------------------------------------------------------------------------
def _mbconv_fused_kernel(
    x_ref,            # (Bb, H, W*Cin)    bf16 lane-dense input slab (also the residual)
    bd_exp_ref,       # (W*Cin,  W*Cexp)  bf16 block-diag expansion weights
    exp_scale_ref,    # (1, W*Cexp)       f32 folded BN scale (tiled over W)
    exp_bias_ref,     # (1, W*Cexp)
    w_dw_ref,         # (K*K, W*Cexp)     f32 depthwise tap weights (tiled over W)
    dw_scale_ref,     # (1, W*Cexp)
    dw_bias_ref,      # (1, W*Cexp)
    sel_mean_ref,     # (W*Cexp, Cexp)    averages the W groups -> per-channel mean
    se_w1_ref,        # (Cexp, Csq)
    se_b1_ref,        # (1, Csq)
    se_w2_ref,        # (Csq, Cexp)
    se_b2_ref,        # (1, Cexp)
    sel_expand_ref,   # (Cexp, W*Cexp)    tiles the per-channel SE scale over W
    bd_proj_ref,      # (W*Cexp, W*Cout)  bf16 block-diag projection weights
    proj_scale_ref,   # (1, W*Cout)
    proj_bias_ref,    # (1, W*Cout)
    o_ref,            # (Bb, H, W*Cout)   bf16 lane-dense output slab
    ypad_ref,         # VMEM scratch (Bb, H+2p, W*Cexp) f32: H-padded expanded activation
    *, Bb, H, W, K, Cexp, use_res,
):
    pad = K // 2
    WC = W * Cexp
    f32 = jnp.float32

    x3 = x_ref[...]                                   # (Bb, H, W*Cin) bf16
    x2 = x3.reshape(Bb * H, x3.shape[-1])             # row-merge: layout preserving

    # ---- 1) 1x1 expansion conv (block-diag bf16 MXU matmul) + folded BN + SiLU ----
    y2 = jnp.dot(x2, bd_exp_ref[...], preferred_element_type=f32)    # (Bb*H, W*Cexp) f32
    y2 = _silu(y2 * exp_scale_ref[...] + exp_bias_ref[...])

    # ---- 2) KxK depthwise conv (stride 1, SAME) + folded BN + SiLU ----------------
    # Only the 2*pad border rows of the scratch are zeroed; interior is overwritten.
    if pad:
        zero_rows = jnp.zeros((Bb, pad, WC), f32)
        ypad_ref[:, 0:pad, :] = zero_rows
        ypad_ref[:, pad + H:pad + H + pad, :] = zero_rows
    ypad_ref[:, pad:pad + H, :] = y2.reshape(Bb, H, WC)
    yp = ypad_ref[...]                                # (Bb, H+2p, WC) f32

    # kw-shifted copies via XLU lane rolls + edge masks; reused across all kh taps.
    lane = jax.lax.broadcasted_iota(jnp.int32, yp.shape, 2)
    shifted = []
    for dw in range(-pad, pad + 1):
        if dw == 0:
            shifted.append(yp)
        else:
            r = pltpu.roll(yp, (-dw * Cexp) % WC, 2)  # out[l] = in[l + dw*Cexp]
            if dw > 0:
                r = jnp.where(lane >= (W - dw) * Cexp, 0.0, r)
            else:
                r = jnp.where(lane < (-dw) * Cexp, 0.0, r)
            shifted.append(r)

    acc = jnp.zeros((Bb, H, WC), f32)
    for kh in range(K):
        for kw in range(K):
            acc = acc + shifted[kw][:, kh:kh + H, :] * w_dw_ref[kh * K + kw, :]
    z = _silu(acc * dw_scale_ref[...] + dw_bias_ref[...])            # (Bb, H, WC) f32

    # ---- 3) Squeeze-Excitation (per-sample, all selection/FC ops on the MXU) ------
    zmean = jnp.mean(z, axis=1)                                                   # (Bb, WC)
    mc = jnp.dot(zmean, sel_mean_ref[...], preferred_element_type=f32)            # (Bb, Cexp)
    h1 = _silu(jnp.dot(mc, se_w1_ref[...], preferred_element_type=f32) + se_b1_ref[...])
    s = jax.nn.sigmoid(jnp.dot(h1, se_w2_ref[...], preferred_element_type=f32) + se_b2_ref[...])
    s_wide = jnp.dot(s, sel_expand_ref[...], preferred_element_type=f32)          # (Bb, WC)

    # ---- 4) 1x1 projection conv + folded BN, SE rescale + residual fused ----------
    zs2 = (z * s_wide[:, None, :]).reshape(Bb * H, WC).astype(jnp.bfloat16)
    o2 = jnp.dot(zs2, bd_proj_ref[...], preferred_element_type=f32)  # (Bb*H, W*Cout) f32
    o2 = o2 * proj_scale_ref[...] + proj_bias_ref[...]
    if use_res:
        o2 = o2 + x2.astype(f32)                      # Cin == Cout, identical layout
    o_ref[...] = o2.reshape(Bb, H, o_ref.shape[-1]).astype(o_ref.dtype)


# ---------------------------------------------------------------------------
# Host-side weight repack into the lane-folded (w*c) layout.  Call ONCE per layer.
# ---------------------------------------------------------------------------
def prepare_mbconv_params(p, W):
    f32, bf16 = jnp.float32, jnp.bfloat16
    Cexp = p["w_exp"].shape[1]
    Cout = p["w_proj"].shape[1]
    Csq = p["se_w1"].shape[1]
    K = p["w_dw"].shape[0]
    return dict(
        bd_exp=_block_diag(p["w_exp"].astype(f32), W).astype(bf16),
        exp_scale=jnp.tile(p["exp_scale"], W).reshape(1, W * Cexp).astype(f32),
        exp_bias=jnp.tile(p["exp_bias"], W).reshape(1, W * Cexp).astype(f32),
        w_dw=jnp.tile(p["w_dw"].reshape(K * K, Cexp), (1, W)).astype(f32),
        dw_scale=jnp.tile(p["dw_scale"], W).reshape(1, W * Cexp).astype(f32),
        dw_bias=jnp.tile(p["dw_bias"], W).reshape(1, W * Cexp).astype(f32),
        sel_mean=(jnp.tile(jnp.eye(Cexp, dtype=f32), (W, 1)) / W),
        se_w1=p["se_w1"].astype(f32),
        se_b1=p["se_b1"].reshape(1, Csq).astype(f32),
        se_w2=p["se_w2"].astype(f32),
        se_b2=p["se_b2"].reshape(1, Cexp).astype(f32),
        sel_expand=jnp.tile(jnp.eye(Cexp, dtype=f32), (1, W)),
        bd_proj=_block_diag(p["w_proj"].astype(f32), W).astype(bf16),
        proj_scale=jnp.tile(p["proj_scale"], W).reshape(1, W * Cout).astype(f32),
        proj_bias=jnp.tile(p["proj_bias"], W).reshape(1, W * Cout).astype(f32),
    )


def _pick_batch_block(B, H, target_rows=256):
    """Largest divisor of B with ~target_rows matmul rows per grid step."""
    bb = max(1, min(B, target_rows // max(1, H)))
    while B % bb:
        bb -= 1
    return bb


# ---------------------------------------------------------------------------
# Wrapper.  Input is NCHW like the PyTorch module.
# ---------------------------------------------------------------------------
def mbconv_forward(x_nchw, packed, *, stride=1):
    assert stride == 1, "TODO(synk): stride=2 depthwise not implemented"
    B, Cin, H, W = x_nchw.shape
    Cexp = packed["w_dw"].shape[1] // W
    Cout = packed["bd_proj"].shape[1] // W
    K = int(round(packed["w_dw"].shape[0] ** 0.5))
    pad = K // 2
    use_res = (stride == 1) and (Cin == Cout)
    bf16, f32 = jnp.bfloat16, jnp.float32

    # Batch-fold so the 1x1 matmuls see M = Bb*H rows and the grid has B/Bb steps.
    # TODO(synk): on v7x prefer an even grid length so both TensorCores get work.
    Bb = _pick_batch_block(B, H)
    grid = (B // Bb,)

    # NCHW -> lane-dense bf16 (B, H, W*Cin) slab (half the HBM traffic of f32).
    x = jnp.transpose(x_nchw, (0, 2, 3, 1)).astype(bf16).reshape(B, H, W * Cin)

    kernel = partial(_mbconv_fused_kernel, Bb=Bb, H=H, W=W, K=K, Cexp=Cexp,
                     use_res=use_res)

    def full2d(a):  # grid-invariant whole-array block
        return pl.BlockSpec(a.shape, lambda b: (0, 0))

    weight_order = ["bd_exp", "exp_scale", "exp_bias", "w_dw", "dw_scale",
                    "dw_bias", "sel_mean", "se_w1", "se_b1", "se_w2", "se_b2",
                    "sel_expand", "bd_proj", "proj_scale", "proj_bias"]
    weights = [packed[k] for k in weight_order]

    out = pl.pallas_call(
        kernel,
        out_shape=jax.ShapeDtypeStruct((B, H, W * Cout), bf16),
        grid=grid,
        in_specs=[pl.BlockSpec((Bb, H, W * Cin), lambda b: (b, 0, 0))]
                 + [full2d(w) for w in weights],
        out_specs=pl.BlockSpec((Bb, H, W * Cout), lambda b: (b, 0, 0)),
        scratch_shapes=[pltpu.VMEM((Bb, H + 2 * pad, W * Cexp), f32)],
        compiler_params=pltpu.CompilerParams(
            dimension_semantics=("parallel",),
            vmem_limit_bytes=32 * 1024 * 1024,
        ),
    )(x, *weights)

    out = out.reshape(B, H, W, Cout)
    # Back to NCHW in the module's dtype (cast fuses into the transpose under jit).
    return jnp.transpose(out, (0, 3, 1, 2)).astype(x_nchw.dtype)


# ---------------------------------------------------------------------------
# Deterministic synthetic parameters (BN eval stats folded into scale/bias).
# ---------------------------------------------------------------------------
def init_params(key, Cin, Cexp, Csq, Cout, K, eps=1e-3):
    keys = jax.random.split(key, 10)

    def bn_fold(k, n):
        k1, k2, k3, k4 = jax.random.split(k, 4)
        gamma = 1.0 + 0.1 * jax.random.normal(k1, (n,), jnp.float32)
        beta = 0.1 * jax.random.normal(k2, (n,), jnp.float32)
        rmean = 0.1 * jax.random.normal(k3, (n,), jnp.float32)
        rvar = 0.5 + 0.5 * jnp.abs(jax.random.normal(k4, (n,), jnp.float32))
        scale = gamma / jnp.sqrt(rvar + eps)
        bias = beta - rmean * scale
        return scale, bias

    p = {}
    p["w_exp"] = 0.1 * jax.random.normal(keys[0], (Cin, Cexp), jnp.float32)
    p["exp_scale"], p["exp_bias"] = bn_fold(keys[1], Cexp)
    p["w_dw"] = 0.1 * jax.random.normal(keys[2], (K, K, Cexp), jnp.float32)
    p["dw_scale"], p["dw_bias"] = bn_fold(keys[3], Cexp)
    p["se_w1"] = 0.1 * jax.random.normal(keys[4], (Cexp, Csq), jnp.float32)
    p["se_b1"] = 0.1 * jax.random.normal(keys[5], (Csq,), jnp.float32)
    p["se_w2"] = 0.1 * jax.random.normal(keys[6], (Csq, Cexp), jnp.float32)
    p["se_b2"] = 0.1 * jax.random.normal(keys[7], (Cexp,), jnp.float32)
    p["w_proj"] = 0.1 * jax.random.normal(keys[8], (Cexp, Cout), jnp.float32)
    p["proj_scale"], p["proj_bias"] = bn_fold(keys[9], Cout)
    return p


# ---------------------------------------------------------------------------
# Pure-JAX reference (independent math path, f32) for the correctness check.
# ---------------------------------------------------------------------------
def ref_mbconv(x_nchw, p, *, stride=1):
    x = jnp.transpose(x_nchw, (0, 2, 3, 1)).astype(jnp.float32)
    y = jnp.einsum("bhwc,cd->bhwd", x, p["w_exp"])
    y = y * p["exp_scale"] + p["exp_bias"]
    y = y * jax.nn.sigmoid(y)
    C = y.shape[-1]
    K = p["w_dw"].shape[0]
    wdw = p["w_dw"].reshape(K, K, 1, C)
    z = jax.lax.conv_general_dilated(
        y, wdw, window_strides=(stride, stride), padding="SAME",
        dimension_numbers=("NHWC", "HWIO", "NHWC"), feature_group_count=C)
    z = z * p["dw_scale"] + p["dw_bias"]
    z = z * jax.nn.sigmoid(z)
    m = jnp.mean(z, axis=(1, 2))
    h = m @ p["se_w1"] + p["se_b1"]
    h = h * jax.nn.sigmoid(h)
    s = jax.nn.sigmoid(h @ p["se_w2"] + p["se_b2"])
    z = z * s[:, None, None, :]
    o = jnp.einsum("bhwc,cd->bhwd", z, p["w_proj"])
    o = o * p["proj_scale"] + p["proj_bias"]
    if stride == 1 and x.shape[-1] == o.shape[-1]:
        o = o + x
    return jnp.transpose(o, (0, 3, 1, 2))


if __name__ == "__main__":
    # MBConvConfig-equivalent: expand_ratio=4, kernel=3, stride=1,
    # input_channels=8, out_channels=8 -> expanded=32, squeeze=max(1, 8//4)=2
    B, Cin, H, W = 2, 8, 16, 16
    Cexp, Csq, Cout, K = 32, 2, 8, 3

    key = jax.random.PRNGKey(0)
    kx, kp = jax.random.split(key)
    x = jax.random.normal(kx, (B, Cin, H, W), jnp.float32)   # NCHW like PyTorch
    params = init_params(kp, Cin, Cexp, Csq, Cout, K)

    packed = prepare_mbconv_params(params, W)                # repacked ONCE per layer
    fwd = jax.jit(mbconv_forward)

    out = jax.block_until_ready(fwd(x, packed))
    ref = jax.block_until_ready(ref_mbconv(x, params))

    assert out.shape == (B, Cout, H, W)
    out_f32 = out.astype(jnp.float32)
    max_err = float(jnp.max(jnp.abs(out_f32 - ref)))
    # bf16 I/O + bf16 MXU operands (f32 accumulation) -> relaxed tolerance vs f32 reference.
    assert jnp.allclose(out_f32, ref, atol=5e-2, rtol=5e-2), \
        f"mismatch vs reference (max abs err {max_err})"
    print("KERNEL_OK")
</pallas_src>

<mosaic_0001>
module attributes {stable_mosaic.version = 11 : i64} {
  func.func @_mbconv_fused_kernel(%arg0: i32, %arg1: memref<2x16x128xbf16, #tpu.memory_space<vmem>>, %arg2: memref<128x512xbf16, #tpu.memory_space<vmem>>, %arg3: memref<1x512xf32, #tpu.memory_space<vmem>>, %arg4: memref<1x512xf32, #tpu.memory_space<vmem>>, %arg5: memref<9x512xf32, #tpu.memory_space<vmem>>, %arg6: memref<1x512xf32, #tpu.memory_space<vmem>>, %arg7: memref<1x512xf32, #tpu.memory_space<vmem>>, %arg8: memref<512x32xf32, #tpu.memory_space<vmem>>, %arg9: memref<32x2xf32, #tpu.memory_space<vmem>>, %arg10: memref<1x2xf32, #tpu.memory_space<vmem>>, %arg11: memref<2x32xf32, #tpu.memory_space<vmem>>, %arg12: memref<1x32xf32, #tpu.memory_space<vmem>>, %arg13: memref<32x512xf32, #tpu.memory_space<vmem>>, %arg14: memref<512x128xbf16, #tpu.memory_space<vmem>>, %arg15: memref<1x128xf32, #tpu.memory_space<vmem>>, %arg16: memref<1x128xf32, #tpu.memory_space<vmem>>, %arg17: memref<2x16x128xbf16, #tpu.memory_space<vmem>>, %arg18: memref<2x18x512xf32, #tpu.memory_space<vmem>>) attributes {dimension_semantics = [#tpu.dimension_semantics<parallel>], iteration_bounds = array<i64: 1>, scalar_prefetch = 0 : i64, scratch_operands = 1 : i64, tpu.core_type = #tpu.core_type<tc>, window_params = [{transform_indices = @transform_0, window_bounds = array<i64: 2, 16, 128>}, {pipeline_mode = #tpu.pipeline_mode<synchronous>, transform_indices = @transform_1, window_bounds = array<i64: 128, 512>}, {pipeline_mode = #tpu.pipeline_mode<synchronous>, transform_indices = @transform_2, window_bounds = array<i64: 1, 512>}, {pipeline_mode = #tpu.pipeline_mode<synchronous>, transform_indices = @transform_3, window_bounds = array<i64: 1, 512>}, {pipeline_mode = #tpu.pipeline_mode<synchronous>, transform_indices = @transform_4, window_bounds = array<i64: 9, 512>}, {pipeline_mode = #tpu.pipeline_mode<synchronous>, transform_indices = @transform_5, window_bounds = array<i64: 1, 512>}, {pipeline_mode = #tpu.pipeline_mode<synchronous>, transform_indices = @transform_6, window_bounds = array<i64: 1, 512>}, {pipeline_mode = #tpu.pipeline_mode<synchronous>, transform_indices = @transform_7, window_bounds = array<i64: 512, 32>}, {pipeline_mode = #tpu.pipeline_mode<synchronous>, transform_indices = @transform_8, window_bounds = array<i64: 32, 2>}, {pipeline_mode = #tpu.pipeline_mode<synchronous>, transform_indices = @transform_9, window_bounds = array<i64: 1, 2>}, {pipeline_mode = #tpu.pipeline_mode<synchronous>, transform_indices = @transform_10, window_bounds = array<i64: 2, 32>}, {pipeline_mode = #tpu.pipeline_mode<synchronous>, transform_indices = @transform_11, window_bounds = array<i64: 1, 32>}, {pipeline_mode = #tpu.pipeline_mode<synchronous>, transform_indices = @transform_12, window_bounds = array<i64: 32, 512>}, {pipeline_mode = #tpu.pipeline_mode<synchronous>, transform_indices = @transform_13, window_bounds = array<i64: 512, 128>}, {pipeline_mode = #tpu.pipeline_mode<synchronous>, transform_indices = @transform_14, window_bounds = array<i64: 1, 128>}, {pipeline_mode = #tpu.pipeline_mode<synchronous>, transform_indices = @transform_15, window_bounds = array<i64: 1, 128>}, {transform_indices = @transform_16, window_bounds = array<i64: 2, 16, 128>}]} {
    %c0 = arith.constant 0 : index
    %c0_0 = arith.constant 0 : index
    %c0_1 = arith.constant 0 : index
    %0 = vector.load %arg1[%c0, %c0_0, %c0_1] : memref<2x16x128xbf16, #tpu.memory_space<vmem>>, vector<2x16x128xbf16>
    %1 = vector.shape_cast %0 : vector<2x16x128xbf16> to vector<32x128xbf16>
    %c0_2 = arith.constant 0 : index
    %c0_3 = arith.constant 0 : index
    %2 = vector.load %arg2[%c0_2, %c0_3] : memref<128x512xbf16, #tpu.memory_space<vmem>>, vector<128x512xbf16>
    %cst = arith.constant dense<0.000000e+00> : vector<32x512xf32>
    %3 = tpu.matmul %1, %2, %cst {dimension_numbers = #tpu.dot_dimension_numbers<[1], [0], [0], [1], [0, 0, 1, 1], [], []>} : vector<32x128xbf16>, vector<128x512xbf16>, vector<32x512xf32> -> vector<32x512xf32>
    %c0_4 = arith.constant 0 : index
    %c0_5 = arith.constant 0 : index
    %4 = vector.load %arg3[%c0_4, %c0_5] : memref<1x512xf32, #tpu.memory_space<vmem>>, vector<1x512xf32>
    %5 = vector.broadcast %4 : vector<1x512xf32> to vector<32x512xf32>
    %6 = arith.mulf %3, %5 : vector<32x512xf32>
    %c0_6 = arith.constant 0 : index
    %c0_7 = arith.constant 0 : index
    %7 = vector.load %arg4[%c0_6, %c0_7] : memref<1x512xf32, #tpu.memory_space<vmem>>, vector<1x512xf32>
    %8 = vector.broadcast %7 : vector<1x512xf32> to vector<32x512xf32>
    %9 = arith.addf %6, %8 : vector<32x512xf32>
    %10 = arith.negf %9 : vector<32x512xf32>
    %11 = math.exp %10 : vector<32x512xf32>
    %cst_8 = arith.constant 1.000000e+00 : f32
    %12 = vector.broadcast %cst_8 : f32 to vector<32x512xf32>
    %13 = arith.addf %12, %11 : vector<32x512xf32>
    %14 = arith.divf %12, %13 : vector<32x512xf32>
    %15 = arith.mulf %9, %14 : vector<32x512xf32>
    %cst_9 = arith.constant 0.000000e+00 : f32
    %16 = vector.broadcast %cst_9 : f32 to vector<2x1x512xf32>
    %c0_10 = arith.constant 0 : index
    %c0_11 = arith.constant 0 : index
    %c0_12 = arith.constant 0 : index
    %17 = vector.load %arg18[%c0_10, %c0_11, %c0_12] : memref<2x18x512xf32, #tpu.memory_space<vmem>>, vector<2x1x512xf32>
    tpu.vector_store %arg18[%c0_10, %c0_11, %c0_12], %16 {strides = array<i32>} : memref<2x18x512xf32, #tpu.memory_space<vmem>>, vector<2x1x512xf32>,
    %c0_13 = arith.constant 0 : index
    %c17 = arith.constant 17 : index
    %c0_14 = arith.constant 0 : index
    %18 = vector.load %arg18[%c0_13, %c17, %c0_14] : memref<2x18x512xf32, #tpu.memory_space<vmem>>, vector<2x1x512xf32>
    tpu.vector_store %arg18[%c0_13, %c17, %c0_14], %16 {strides = array<i32>} : memref<2x18x512xf32, #tpu.memory_space<vmem>>, vector<2x1x512xf32>,
    %19 = vector.shape_cast %15 : vector<32x512xf32> to vector<2x16x512xf32>
    %c0_15 = arith.constant 0 : index
    %c1 = arith.constant 1 : index
    %c0_16 = arith.constant 0 : index
    %20 = vector.load %arg18[%c0_15, %c1, %c0_16] : memref<2x18x512xf32, #tpu.memory_space<vmem>>, vector<2x16x512xf32>
    tpu.vector_store %arg18[%c0_15, %c1, %c0_16], %19 {strides = array<i32>} : memref<2x18x512xf32, #tpu.memory_space<vmem>>, vector<2x16x512xf32>,
    %c0_17 = arith.constant 0 : index
    %c0_18 = arith.constant 0 : index
    %c0_19 = arith.constant 0 : index
    %21 = vector.load %arg18[%c0_17, %c0_18, %c0_19] : memref<2x18x512xf32, #tpu.memory_space<vmem>>, vector<2x18x512xf32>
    %22 = tpu.iota {dimensions = array<i32: 2>} : vector<2x18x512xi32>
    %c32_i32 = arith.constant 32 : i32
    %23 = tpu.dynamic_rotate %21 by %c32_i32 dim 2 : vector<2x18x512xf32>, i32 -> vector<2x18x512xf32>
    %c32_i32_20 = arith.constant 32 : i32
    %24 = vector.broadcast %c32_i32_20 : i32 to vector<2x18x512xi32>
    %25 = arith.cmpi slt, %22, %24 : vector<2x18x512xi32>
    %cst_21 = arith.constant 0.000000e+00 : f32
    %26 = vector.broadcast %cst_21 : f32 to vector<2x18x512xf32>
    %27 = arith.select %25, %26, %23 : vector<2x18x512xi1>, vector<2x18x512xf32>
    %c480_i32 = arith.constant 480 : i32
    %28 = tpu.dynamic_rotate %21 by %c480_i32 dim 2 : vector<2x18x512xf32>, i32 -> vector<2x18x512xf32>
    %c480_i32_22 = arith.constant 480 : i32
    %29 = vector.broadcast %c480_i32_22 : i32 to vector<2x18x512xi32>
    %30 = arith.cmpi sge, %22, %29 : vector<2x18x512xi32>
    %cst_23 = arith.constant 0.000000e+00 : f32
    %31 = vector.broadcast %cst_23 : f32 to vector<2x18x512xf32>
    %32 = arith.select %30, %31, %28 : vector<2x18x512xi1>, vector<2x18x512xf32>
    %cst_24 = arith.constant 0.000000e+00 : f32
    %33 = vector.broadcast %cst_24 : f32 to vector<2x16x512xf32>
    %34 = vector.extract_strided_slice %27 {offsets = [0, 0, 0], sizes = [2, 16, 512], strides = [1, 1, 1]} : vector<2x18x512xf32> to vector<2x16x512xf32>
    %c0_25 = arith.constant 0 : index
    %c0_26 = arith.constant 0 : index
    %35 = vector.load %arg5[%c0_25, %c0_26] : memref<9x512xf32, #tpu.memory_space<vmem>>, vector<1x512xf32>
    %36 = vector.shape_cast %35 : vector<1x512xf32> to vector<512xf32>
    %37 = vector.shape_cast %36 : vector<512xf32> to vector<1x1x512xf32>
    %38 = vector.broadcast %37 : vector<1x1x512xf32> to vector<2x16x512xf32>
    %39 = arith.mulf %34, %38 : vector<2x16x512xf32>
    %40 = arith.addf %33, %39 : vector<2x16x512xf32>
    %41 = vector.extract_strided_slice %21 {offsets = [0, 0, 0], sizes = [2, 16, 512], strides = [1, 1, 1]} : vector<2x18x512xf32> to vector<2x16x512xf32>
    %c1_27 = arith.constant 1 : index
    %c0_28 = arith.constant 0 : index
    %42 = vector.load %arg5[%c1_27, %c0_28] : memref<9x512xf32, #tpu.memory_space<vmem>>, vector<1x512xf32>
    %43 = vector.shape_cast %42 : vector<1x512xf32> to vector<512xf32>
    %44 = vector.shape_cast %43 : vector<512xf32> to vector<1x1x512xf32>
    %45 = vector.broadcast %44 : vector<1x1x512xf32> to vector<2x16x512xf32>
    %46 = arith.mulf %41, %45 : vector<2x16x512xf32>
    %47 = arith.addf %40, %46 : vector<2x16x512xf32>
    %48 = vector.extract_strided_slice %32 {offsets = [0, 0, 0], sizes = [2, 16, 512], strides = [1, 1, 1]} : vector<2x18x512xf32> to vector<2x16x512xf32>
    %c2 = arith.constant 2 : index
    %c0_29 = arith.constant 0 : index
    %49 = vector.load %arg5[%c2, %c0_29] : memref<9x512xf32, #tpu.memory_space<vmem>>, vector<1x512xf32>
    %50 = vector.shape_cast %49 : vector<1x512xf32> to vector<512xf32>
    %51 = vector.shape_cast %50 : vector<512xf32> to vector<1x1x512xf32>
    %52 = vector.broadcast %51 : vector<1x1x512xf32> to vector<2x16x512xf32>
    %53 = arith.mulf %48, %52 : vector<2x16x512xf32>
    %54 = arith.addf %47, %53 : vector<2x16x512xf32>
    %55 = vector.extract_strided_slice %27 {offsets = [0, 1, 0], sizes = [2, 16, 512], strides = [1, 1, 1]} : vector<2x18x512xf32> to vector<2x16x512xf32>
    %c3 = arith.constant 3 : index
    %c0_30 = arith.constant 0 : index
    %56 = vector.load %arg5[%c3, %c0_30] : memref<9x512xf32, #tpu.memory_space<vmem>>, vector<1x512xf32>
    %57 = vector.shape_cast %56 : vector<1x512xf32> to vector<512xf32>
    %58 = vector.shape_cast %57 : vector<512xf32> to vector<1x1x512xf32>
    %59 = vector.broadcast %58 : vector<1x1x512xf32> to vector<2x16x512xf32>
    %60 = arith.mulf %55, %59 : vector<2x16x512xf32>
    %61 = arith.addf %54, %60 : vector<2x16x512xf32>
    %62 = vector.extract_strided_slice %21 {offsets = [0, 1, 0], sizes = [2, 16, 512], strides = [1, 1, 1]} : vector<2x18x512xf32> to vector<2x16x512xf32>
    %c4 = arith.constant 4 : index
    %c0_31 = arith.constant 0 : index
    %63 = vector.load %arg5[%c4, %c0_31] : memref<9x512xf32, #tpu.memory_space<vmem>>, vector<1x512xf32>
    %64 = vector.shape_cast %63 : vector<1x512xf32> to vector<512xf32>
    %65 = vector.shape_cast %64 : vector<512xf32> to vector<1x1x512xf32>
    %66 = vector.broadcast %65 : vector<1x1x512xf32> to vector<2x16x512xf32>
    %67 = arith.mulf %62, %66 : vector<2x16x512xf32>
    %68 = arith.addf %61, %67 : vector<2x16x512xf32>
    %69 = vector.extract_strided_slice %32 {offsets = [0, 1, 0], sizes = [2, 16, 512], strides = [1, 1, 1]} : vector<2x18x512xf32> to vector<2x16x512xf32>
    %c5 = arith.constant 5 : index
    %c0_32 = arith.constant 0 : index
    %70 = vector.load %arg5[%c5, %c0_32] : memref<9x512xf32, #tpu.memory_space<vmem>>, vector<1x512xf32>
    %71 = vector.shape_cast %70 : vector<1x512xf32> to vector<512xf32>
    %72 = vector.shape_cast %71 : vector<512xf32> to vector<1x1x512xf32>
    %73 = vector.broadcast %72 : vector<1x1x512xf32> to vector<2x16x512xf32>
    %74 = arith.mulf %69, %73 : vector<2x16x512xf32>
    %75 = arith.addf %68, %74 : vector<2x16x512xf32>
    %76 = vector.extract_strided_slice %27 {offsets = [0, 2, 0], sizes = [2, 16, 512], strides = [1, 1, 1]} : vector<2x18x512xf32> to vector<2x16x512xf32>
    %c6 = arith.constant 6 : index
    %c0_33 = arith.constant 0 : index
    %77 = vector.load %arg5[%c6, %c0_33] : memref<9x512xf32, #tpu.memory_space<vmem>>, vector<1x512xf32>
    %78 = vector.shape_cast %77 : vector<1x512xf32> to vector<512xf32>
    %79 = vector.shape_cast %78 : vector<512xf32> to vector<1x1x512xf32>
    %80 = vector.broadcast %79 : vector<1x1x512xf32> to vector<2x16x512xf32>
    %81 = arith.mulf %76, %80 : vector<2x16x512xf32>
    %82 = arith.addf %75, %81 : vector<2x16x512xf32>
    %83 = vector.extract_strided_slice %21 {offsets = [0, 2, 0], sizes = [2, 16, 512], strides = [1, 1, 1]} : vector<2x18x512xf32> to vector<2x16x512xf32>
    %c7 = arith.constant 7 : index
    %c0_34 = arith.constant 0 : index
    %84 = vector.load %arg5[%c7, %c0_34] : memref<9x512xf32, #tpu.memory_space<vmem>>, vector<1x512xf32>
    %85 = vector.shape_cast %84 : vector<1x512xf32> to vector<512xf32>
    %86 = vector.shape_cast %85 : vector<512xf32> to vector<1x1x512xf32>
    %87 = vector.broadcast %86 : vector<1x1x512xf32> to vector<2x16x512xf32>
    %88 = arith.mulf %83, %87 : vector<2x16x512xf32>
    %89 = arith.addf %82, %88 : vector<2x16x512xf32>
    %90 = vector.extract_strided_slice %32 {offsets = [0, 2, 0], sizes = [2, 16, 512], strides = [1, 1, 1]} : vector<2x18x512xf32> to vector<2x16x512xf32>
    %c8 = arith.constant 8 : index
    %c0_35 = arith.constant 0 : index
    %91 = vector.load %arg5[%c8, %c0_35] : memref<9x512xf32, #tpu.memory_space<vmem>>, vector<1x512xf32>
    %92 = vector.shape_cast %91 : vector<1x512xf32> to vector<512xf32>
    %93 = vector.shape_cast %92 : vector<512xf32> to vector<1x1x512xf32>
    %94 = vector.broadcast %93 : vector<1x1x512xf32> to vector<2x16x512xf32>
    %95 = arith.mulf %90, %94 : vector<2x16x512xf32>
    %96 = arith.addf %89, %95 : vector<2x16x512xf32>
    %c0_36 = arith.constant 0 : index
    %c0_37 = arith.constant 0 : index
    %97 = vector.load %arg6[%c0_36, %c0_37] : memref<1x512xf32, #tpu.memory_space<vmem>>, vector<1x512xf32>
    %98 = vector.shape_cast %97 : vector<1x512xf32> to vector<1x1x512xf32>
    %99 = vector.broadcast %98 : vector<1x1x512xf32> to vector<2x16x512xf32>
    %100 = arith.mulf %96, %99 : vector<2x16x512xf32>
    %c0_38 = arith.constant 0 : index
    %c0_39 = arith.constant 0 : index
    %101 = vector.load %arg7[%c0_38, %c0_39] : memref<1x512xf32, #tpu.memory_space<vmem>>, vector<1x512xf32>
    %102 = vector.shape_cast %101 : vector<1x512xf32> to vector<1x1x512xf32>
    %103 = vector.broadcast %102 : vector<1x1x512xf32> to vector<2x16x512xf32>
    %104 = arith.addf %100, %103 : vector<2x16x512xf32>
    %105 = arith.negf %104 : vector<2x16x512xf32>
    %106 = math.exp %105 : vector<2x16x512xf32>
    %cst_40 = arith.constant 1.000000e+00 : f32
    %107 = vector.broadcast %cst_40 : f32 to vector<2x16x512xf32>
    %108 = arith.addf %107, %106 : vector<2x16x512xf32>
    %109 = arith.divf %107, %108 : vector<2x16x512xf32>
    %110 = arith.mulf %104, %109 : vector<2x16x512xf32>
    %cst_41 = arith.constant dense<0.000000e+00> : vector<2x512xf32>
    %111 = vector.multi_reduction <add>, %110, %cst_41 [1] : vector<2x16x512xf32> to vector<2x512xf32>
    %cst_42 = arith.constant 1.600000e+01 : f32
    %112 = vector.broadcast %cst_42 : f32 to vector<2x512xf32>
    %113 = arith.divf %111, %112 : vector<2x512xf32>
    %c0_43 = arith.constant 0 : index
    %c0_44 = arith.constant 0 : index
    %114 = vector.load %arg8[%c0_43, %c0_44] : memref<512x32xf32, #tpu.memory_space<vmem>>, vector<512x32xf32>
    %cst_45 = arith.constant dense<0.000000e+00> : vector<2x32xf32>
    %115 = tpu.matmul %113, %114, %cst_45 {dimension_numbers = #tpu.dot_dimension_numbers<[1], [0], [0], [1], [0, 0, 1, 1], [], []>} : vector<2x512xf32>, vector<512x32xf32>, vector<2x32xf32> -> vector<2x32xf32>
    %c0_46 = arith.constant 0 : index
    %c0_47 = arith.constant 0 : index
    %116 = vector.load %arg9[%c0_46, %c0_47] : memref<32x2xf32, #tpu.memory_space<vmem>>, vector<32x2xf32>
    %cst_48 = arith.constant dense<0.000000e+00> : vector<2x2xf32>
    %117 = tpu.matmul %115, %116, %cst_48 {dimension_numbers = #tpu.dot_dimension_numbers<[1], [0], [0], [1], [0, 0, 1, 1], [], []>} : vector<2x32xf32>, vector<32x2xf32>, vector<2x2xf32> -> vector<2x2xf32>
    %c0_49 = arith.constant 0 : index
    %c0_50 = arith.constant 0 : index
    %118 = vector.load %arg10[%c0_49, %c0_50] : memref<1x2xf32, #tpu.memory_space<vmem>>, vector<1x2xf32>
    %119 = vector.broadcast %118 : vector<1x2xf32> to vector<2x2xf32>
    %120 = arith.addf %117, %119 : vector<2x2xf32>
    %121 = arith.negf %120 : vector<2x2xf32>
    %122 = math.exp %121 : vector<2x2xf32>
    %cst_51 = arith.constant 1.000000e+00 : f32
    %123 = vector.broadcast %cst_51 : f32 to vector<2x2xf32>
    %124 = arith.addf %123, %122 : vector<2x2xf32>
    %125 = arith.divf %123, %124 : vector<2x2xf32>
    %126 = arith.mulf %120, %125 : vector<2x2xf32>
    %c0_52 = arith.constant 0 : index
    %c0_53 = arith.constant 0 : index
    %127 = vector.load %arg11[%c0_52, %c0_53] : memref<2x32xf32, #tpu.memory_space<vmem>>, vector<2x32xf32>
    %cst_54 = arith.constant dense<0.000000e+00> : vector<2x32xf32>
    %128 = tpu.matmul %126, %127, %cst_54 {dimension_numbers = #tpu.dot_dimension_numbers<[1], [0], [0], [1], [0, 0, 1, 1], [], []>} : vector<2x2xf32>, vector<2x32xf32>, vector<2x32xf32> -> vector<2x32xf32>
    %c0_55 = arith.constant 0 : index
    %c0_56 = arith.constant 0 : index
    %129 = vector.load %arg12[%c0_55, %c0_56] : memref<1x32xf32, #tpu.memory_space<vmem>>, vector<1x32xf32>
    %130 = vector.broadcast %129 : vector<1x32xf32> to vector<2x32xf32>
    %131 = arith.addf %128, %130 : vector<2x32xf32>
    %132 = arith.negf %131 : vector<2x32xf32>
    %133 = math.exp %132 : vector<2x32xf32>
    %cst_57 = arith.constant 1.000000e+00 : f32
    %134 = vector.broadcast %cst_57 : f32 to vector<2x32xf32>
    %135 = arith.addf %134, %133 : vector<2x32xf32>
    %136 = arith.divf %134, %135 : vector<2x32xf32>
    %c0_58 = arith.constant 0 : index
    %c0_59 = arith.constant 0 : index
    %137 = vector.load %arg13[%c0_58, %c0_59] : memref<32x512xf32, #tpu.memory_space<vmem>>, vector<32x512xf32>
    %cst_60 = arith.constant dense<0.000000e+00> : vector<2x512xf32>
    %138 = tpu.matmul %136, %137, %cst_60 {dimension_numbers = #tpu.dot_dimension_numbers<[1], [0], [0], [1], [0, 0, 1, 1], [], []>} : vector<2x32xf32>, vector<32x512xf32>, vector<2x512xf32> -> vector<2x512xf32>
    %139 = vector.shape_cast %138 : vector<2x512xf32> to vector<2x1x512xf32>
    %140 = vector.broadcast %139 : vector<2x1x512xf32> to vector<2x16x512xf32>
    %141 = arith.mulf %110, %140 : vector<2x16x512xf32>
    %142 = vector.shape_cast %141 : vector<2x16x512xf32> to vector<32x512xf32>
    %143 = arith.truncf %142 : vector<32x512xf32> to vector<32x512xbf16>
    %c0_61 = arith.constant 0 : index
    %c0_62 = arith.constant 0 : index
    %144 = vector.load %arg14[%c0_61, %c0_62] : memref<512x128xbf16, #tpu.memory_space<vmem>>, vector<512x128xbf16>
    %cst_63 = arith.constant dense<0.000000e+00> : vector<32x128xf32>
    %145 = tpu.matmul %143, %144, %cst_63 {dimension_numbers = #tpu.dot_dimension_numbers<[1], [0], [0], [1], [0, 0, 1, 1], [], []>} : vector<32x512xbf16>, vector<512x128xbf16>, vector<32x128xf32> -> vector<32x128xf32>
    %c0_64 = arith.constant 0 : index
    %c0_65 = arith.constant 0 : index
    %146 = vector.load %arg15[%c0_64, %c0_65] : memref<1x128xf32, #tpu.memory_space<vmem>>, vector<1x128xf32>
    %147 = vector.broadcast %146 : vector<1x128xf32> to vector<32x128xf32>
    %148 = arith.mulf %145, %147 : vector<32x128xf32>
    %c0_66 = arith.constant 0 : index
    %c0_67 = arith.constant 0 : index
    %149 = vector.load %arg16[%c0_66, %c0_67] : memref<1x128xf32, #tpu.memory_space<vmem>>, vector<1x128xf32>
    %150 = vector.broadcast %149 : vector<1x128xf32> to vector<32x128xf32>
    %151 = arith.addf %148, %150 : vector<32x128xf32>
    %152 = arith.extf %1 : vector<32x128xbf16> to vector<32x128xf32>
    %153 = arith.addf %151, %152 : vector<32x128xf32>
    %154 = vector.shape_cast %153 : vector<32x128xf32> to vector<2x16x128xf32>
    %155 = arith.truncf %154 : vector<2x16x128xf32> to vector<2x16x128xbf16>
    %c0_68 = arith.constant 0 : index
    %c0_69 = arith.constant 0 : index
    %c0_70 = arith.constant 0 : index
    %156 = vector.load %arg17[%c0_68, %c0_69, %c0_70] : memref<2x16x128xbf16, #tpu.memory_space<vmem>>, vector<2x16x128xbf16>
    tpu.vector_store %arg17[%c0_68, %c0_69, %c0_70], %155 {strides = array<i32>} : memref<2x16x128xbf16, #tpu.memory_space<vmem>>, vector<2x16x128xbf16>,
    return
  }
  func.func @transform_0(%arg0: i32) -> (i32, i32, i32) {
    %c0_i32 = arith.constant 0 : i32
    %c0_i32_0 = arith.constant 0 : i32
    %c0_i32_1 = arith.constant 0 : i32
    return %arg0, %c0_i32, %c0_i32_0 : i32, i32, i32
  }
  func.func @transform_1(%arg0: i32) -> (i32, i32) {
    %c0_i32 = arith.constant 0 : i32
    %c0_i32_0 = arith.constant 0 : i32
    %c0_i32_1 = arith.constant 0 : i32
    return %c0_i32, %c0_i32_0 : i32, i32
  }
  func.func @transform_2(%arg0: i32) -> (i32, i32) {
    %c0_i32 = arith.constant 0 : i32
    %c0_i32_0 = arith.constant 0 : i32
    %c0_i32_1 = arith.constant 0 : i32
    return %c0_i32, %c0_i32_0 : i32, i32
  }
  func.func @transform_3(%arg0: i32) -> (i32, i32) {
    %c0_i32 = arith.constant 0 : i32
    %c0_i32_0 = arith.constant 0 : i32
    %c0_i32_1 = arith.constant 0 : i32
    return %c0_i32, %c0_i32_0 : i32, i32
  }
  func.func @transform_4(%arg0: i32) -> (i32, i32) {
    %c0_i32 = arith.constant 0 : i32
    %c0_i32_0 = arith.constant 0 : i32
    %c0_i32_1 = arith.constant 0 : i32
    return %c0_i32, %c0_i32_0 : i32, i32
  }
  func.func @transform_5(%arg0: i32) -> (i32, i32) {
    %c0_i32 = arith.constant 0 : i32
    %c0_i32_0 = arith.constant 0 : i32
    %c0_i32_1 = arith.constant 0 : i32
    return %c0_i32, %c0_i32_0 : i32, i32
  }
  func.func @transform_6(%arg0: i32) -> (i32, i32) {
    %c0_i32 = arith.constant 0 : i32
    %c0_i32_0 = arith.constant 0 : i32
    %c0_i32_1 = arith.constant 0 : i32
    return %c0_i32, %c0_i32_0 : i32, i32
  }
  func.func @transform_7(%arg0: i32) -> (i32, i32) {
    %c0_i32 = arith.constant 0 : i32
    %c0_i32_0 = arith.constant 0 : i32
    %c0_i32_1 = arith.constant 0 : i32
    return %c0_i32, %c0_i32_0 : i32, i32
  }
  func.func @transform_8(%arg0: i32) -> (i32, i32) {
    %c0_i32 = arith.constant 0 : i32
    %c0_i32_0 = arith.constant 0 : i32
    %c0_i32_1 = arith.constant 0 : i32
    return %c0_i32, %c0_i32_0 : i32, i32
  }
  func.func @transform_9(%arg0: i32) -> (i32, i32) {
    %c0_i32 = arith.constant 0 : i32
    %c0_i32_0 = arith.constant 0 : i32
    %c0_i32_1 = arith.constant 0 : i32
    return %c0_i32, %c0_i32_0 : i32, i32
  }
  func.func @transform_10(%arg0: i32) -> (i32, i32) {
    %c0_i32 = arith.constant 0 : i32
    %c0_i32_0 = arith.constant 0 : i32
    %c0_i32_1 = arith.constant 0 : i32
    return %c0_i32, %c0_i32_0 : i32, i32
  }
  func.func @transform_11(%arg0: i32) -> (i32, i32) {
    %c0_i32 = arith.constant 0 : i32
    %c0_i32_0 = arith.constant 0 : i32
    %c0_i32_1 = arith.constant 0 : i32
    return %c0_i32, %c0_i32_0 : i32, i32
  }
  func.func @transform_12(%arg0: i32) -> (i32, i32) {
    %c0_i32 = arith.constant 0 : i32
    %c0_i32_0 = arith.constant 0 : i32
    %c0_i32_1 = arith.constant 0 : i32
    return %c0_i32, %c0_i32_0 : i32, i32
  }
  func.func @transform_13(%arg0: i32) -> (i32, i32) {
    %c0_i32 = arith.constant 0 : i32
    %c0_i32_0 = arith.constant 0 : i32
    %c0_i32_1 = arith.constant 0 : i32
    return %c0_i32, %c0_i32_0 : i32, i32
  }
  func.func @transform_14(%arg0: i32) -> (i32, i32) {
    %c0_i32 = arith.constant 0 : i32
    %c0_i32_0 = arith.constant 0 : i32
    %c0_i32_1 = arith.constant 0 : i32
    return %c0_i32, %c0_i32_0 : i32, i32
  }
  func.func @transform_15(%arg0: i32) -> (i32, i32) {
    %c0_i32 = arith.constant 0 : i32
    %c0_i32_0 = arith.constant 0 : i32
    %c0_i32_1 = arith.constant 0 : i32
    return %c0_i32, %c0_i32_0 : i32, i32
  }
  func.func @transform_16(%arg0: i32) -> (i32, i32, i32) {
    %c0_i32 = arith.constant 0 : i32
    %c0_i32_0 = arith.constant 0 : i32
    %c0_i32_1 = arith.constant 0 : i32
    return %arg0, %c0_i32, %c0_i32_0 : i32, i32, i32
  }
}

</mosaic_0001>

<llo_original>
// kernel: mbconv_forward.1
$region0: #{mbconv_forward.1}
  #allocation0 [shape = 'u32[]', space=smem, size = 0x4, offset = 0x4, fixed_abs, tag = 'smem constant byte address 0x4 - core index']
  #allocation1 [shape = 'u32[144,128]{1,0:T(1,128)}', space=vmem, size = 0x12000, scoped, tag = 'internal scratch']
  #allocation2 [shape = 'f32[2,18,512]{2,1,0:T(8,128)}', space=vmem, size = 0x18000, scoped, tag = 'scratch operand']
  %s0 = inlined_call_operand.vmem [shape: bf16[2,16,128], index: 0, kind: input, shape index: {}]
  %s1 = inlined_call_operand.vmem [shape: bf16[128,512], index: 1, kind: input, shape index: {}]
  %s2 = inlined_call_operand.vmem [shape: f32[1,512], index: 2, kind: input, shape index: {}]
  %s3 = inlined_call_operand.vmem [shape: f32[1,512], index: 3, kind: input, shape index: {}]
  %s4 = inlined_call_operand.vmem [shape: f32[9,512], index: 4, kind: input, shape index: {}]
  %s5 = inlined_call_operand.vmem [shape: f32[1,512], index: 5, kind: input, shape index: {}]
  %s6 = inlined_call_operand.vmem [shape: f32[1,512], index: 6, kind: input, shape index: {}]
  %s7 = inlined_call_operand.vmem [shape: f32[512,32], index: 7, kind: input, shape index: {}]
  %s8 = inlined_call_operand.vmem [shape: f32[32,2], index: 8, kind: input, shape index: {}]
  %s9 = inlined_call_operand.vmem [shape: f32[1,2], index: 9, kind: input, shape index: {}]
  %s10 = inlined_call_operand.vmem [shape: f32[2,32], index: 10, kind: input, shape index: {}]
  %s11 = inlined_call_operand.vmem [shape: f32[1,32], index: 11, kind: input, shape index: {}]
  %s12 = inlined_call_operand.vmem [shape: f32[32,512], index: 12, kind: input, shape index: {}]
  %s13 = inlined_call_operand.vmem [shape: bf16[512,128], index: 13, kind: input, shape index: {}]
  %s14 = inlined_call_operand.vmem [shape: f32[1,128], index: 14, kind: input, shape index: {}]
  %s15 = inlined_call_operand.vmem [shape: f32[1,128], index: 15, kind: input, shape index: {}]
  %s16 = inlined_call_operand.vmem [shape: bf16[2,16,128], index: 16, kind: output, shape index: {}]
  %s17 = sld [smem:[#allocation0]]
  $region74: #{mbconv_forward.1} parent=0
    _
  %s19 = ssub.s32 1, %s17
  %s20 = scalar_select 0, %s19, %s17
  // Predicated region
  $region2: #{mbconv_forward.1} parent=0 // pred_check
    _
  $region3: #{mbconv_forward.1} parent=0 // pred_check_branch
    %22 = sbr.rel (0) target = $region5
  $region4: #{mbconv_forward.1} parent=0 // pred_region
    _
  $region5: #{mbconv_forward.1} parent=0 // pred_fallthru
    _
  // Predicated region
  $region6: #{mbconv_forward.1} parent=0 // pred_check
    _
  $region7: #{mbconv_forward.1} parent=0 // pred_check_branch
    %24 = sbr.rel (0) target = $region9
  $region8: #{mbconv_forward.1} parent=0 // pred_region
    _
  $region9: #{mbconv_forward.1} parent=0 // pred_fallthru
    _
  // Predicated region
  $region10: #{mbconv_forward.1} parent=0 // pred_check
    _
  $region11: #{mbconv_forward.1} parent=0 // pred_check_branch
    %26 = sbr.rel (0) target = $region13
  $region12: #{mbconv_forward.1} parent=0 // pred_region
    _
  $region13: #{mbconv_forward.1} parent=0 // pred_fallthru
    _
  // Predicated region
  $region14: #{mbconv_forward.1} parent=0 // pred_check
    _
  $region15: #{mbconv_forward.1} parent=0 // pred_check_branch
    %28 = sbr.rel (0) target = $region17
  $region16: #{mbconv_forward.1} parent=0 // pred_region
    _
  $region17: #{mbconv_forward.1} parent=0 // pred_fallthru
    _
  // Predicated region
  $region18: #{mbconv_forward.1} parent=0 // pred_check
    _
  $region19: #{mbconv_forward.1} parent=0 // pred_check_branch
    %30 = sbr.rel (0) target = $region21
  $region20: #{mbconv_forward.1} parent=0 // pred_region
    _
  $region21: #{mbconv_forward.1} parent=0 // pred_fallthru
    _
  // Predicated region
  $region22: #{mbconv_forward.1} parent=0 // pred_check
    _
  $region23: #{mbconv_forward.1} parent=0 // pred_check_branch
    %32 = sbr.rel (0) target = $region25
  $region24: #{mbconv_forward.1} parent=0 // pred_region
    _
  $region25: #{mbconv_forward.1} parent=0 // pred_fallthru
    _
  // Predicated region
  $region26: #{mbconv_forward.1} parent=0 // pred_check
    _
  $region27: #{mbconv_forward.1} parent=0 // pred_check_branch
    %34 = sbr.rel (0) target = $region29
  $region28: #{mbconv_forward.1} parent=0 // pred_region
    _
  $region29: #{mbconv_forward.1} parent=0 // pred_fallthru
    _
  // Predicated region
  $region30: #{mbconv_forward.1} parent=0 // pred_check
    _
  $region31: #{mbconv_forward.1} parent=0 // pred_check_branch
    %36 = sbr.rel (0) target = $region33
  $region32: #{mbconv_forward.1} parent=0 // pred_region
    _
  $region33: #{mbconv_forward.1} parent=0 // pred_fallthru
    _
  // Predicated region
  $region34: #{mbconv_forward.1} parent=0 // pred_check
    _
  $region35: #{mbconv_forward.1} parent=0 // pred_check_branch
    %38 = sbr.rel (0) target = $region37
  $region36: #{mbconv_forward.1} parent=0 // pred_region
    _
  $region37: #{mbconv_forward.1} parent=0 // pred_fallthru
    _
  // Predicated region
  $region38: #{mbconv_forward.1} parent=0 // pred_check
    _
  $region39: #{mbconv_forward.1} parent=0 // pred_check_branch
    %40 = sbr.rel (0) target = $region41
  $region40: #{mbconv_forward.1} parent=0 // pred_region
    _
  $region41: #{mbconv_forward.1} parent=0 // pred_fallthru
    _
  // Predicated region
  $region42: #{mbconv_forward.1} parent=0 // pred_check
    _
  $region43: #{mbconv_forward.1} parent=0 // pred_check_branch
    %42 = sbr.rel (0) target = $region45
  $region44: #{mbconv_forward.1} parent=0 // pred_region
    _
  $region45: #{mbconv_forward.1} parent=0 // pred_fallthru
    _
  // Predicated region
  $region46: #{mbconv_forward.1} parent=0 // pred_check
    _
  $region47: #{mbconv_forward.1} parent=0 // pred_check_branch
    %44 = sbr.rel (0) target = $region49
  $region48: #{mbconv_forward.1} parent=0 // pred_region
    _
  $region49: #{mbconv_forward.1} parent=0 // pred_fallthru
    _
  // Predicated region
  $region50: #{mbconv_forward.1} parent=0 // pred_check
    _
  $region51: #{mbconv_forward.1} parent=0 // pred_check_branch
    %46 = sbr.rel (0) target = $region53
  $region52: #{mbconv_forward.1} parent=0 // pred_region
    _
  $region53: #{mbconv_forward.1} parent=0 // pred_fallthru
    _
  // Predicated region
  $region54: #{mbconv_forward.1} parent=0 // pred_check
    _
  $region55: #{mbconv_forward.1} parent=0 // pred_check_branch
    %48 = sbr.rel (0) target = $region57
  $region56: #{mbconv_forward.1} parent=0 // pred_region
    _
  $region57: #{mbconv_forward.1} parent=0 // pred_fallthru
    _
  // Predicated region
  $region58: #{mbconv_forward.1} parent=0 // pred_check
    _
  $region59: #{mbconv_forward.1} parent=0 // pred_check_branch
    %50 = sbr.rel (0) target = $region61
  $region60: #{mbconv_forward.1} parent=0 // pred_region
    _
  $region61: #{mbconv_forward.1} parent=0 // pred_fallthru
    _
  // Predicated region
  $region62: #{mbconv_forward.1} parent=0 // pred_check
    _
  $region63: #{mbconv_forward.1} parent=0 // pred_check_branch
    %52 = sbr.rel (0) target = $region65
  $region64: #{mbconv_forward.1} parent=0 // pred_region
    _
  $region65: #{mbconv_forward.1} parent=0 // pred_fallthru
    _
  %v54 = vld [vmem:[%s0] sm:$0xf]
  %v55 = vld [vmem:[%s0 + $0x4] sm:$0xf]
  %v56 = vld [vmem:[%s0 + $0x8] sm:$0xf]
  %v57 = vld [vmem:[%s0 + $0xc] sm:$0xf]
  %v58 = vld [vmem:[%s1] sm:$0xff]
  %v59 = vld [vmem:[%s1 + $0x8] sm:$0xff]
  %v60 = vld [vmem:[%s1 + $0x10] sm:$0xff]
  %v61 = vld [vmem:[%s1 + $0x18] sm:$0xff]
  %v62 = vld [vmem:[%s1 + $0x20] sm:$0xff]
  %v63 = vld [vmem:[%s1 + $0x28] sm:$0xff]
  %v64 = vld [vmem:[%s1 + $0x30] sm:$0xff]
  %v65 = vld [vmem:[%s1 + $0x38] sm:$0xff]
  %v66 = vld [vmem:[%s1 + $0x40] sm:$0xff]
  %v67 = vld [vmem:[%s1 + $0x48] sm:$0xff]
  %v68 = vld [vmem:[%s1 + $0x50] sm:$0xff]
  %v69 = vld [vmem:[%s1 + $0x58] sm:$0xff]
  %v70 = vld [vmem:[%s1 + $0x60] sm:$0xff]
  %v71 = vld [vmem:[%s1 + $0x68] sm:$0xff]
  %v72 = vld [vmem:[%s1 + $0x70] sm:$0xff]
  %v73 = vld [vmem:[%s1 + $0x78] sm:$0xff]
  %v74 = vld [vmem:[%s1 + $0x80] sm:$0xff]
  %v75 = vld [vmem:[%s1 + $0x88] sm:$0xff]
  %v76 = vld [vmem:[%s1 + $0x90] sm:$0xff]
  %v77 = vld [vmem:[%s1 + $0x98] sm:$0xff]
  %v78 = vld [vmem:[%s1 + $0xa0] sm:$0xff]
  %v79 = vld [vmem:[%s1 + $0xa8] sm:$0xff]
  %v80 = vld [vmem:[%s1 + $0xb0] sm:$0xff]
  %v81 = vld [vmem:[%s1 + $0xb8] sm:$0xff]
  %v82 = vld [vmem:[%s1 + $0xc0] sm:$0xff]
  %v83 = vld [vmem:[%s1 + $0xc8] sm:$0xff]
  %v84 = vld [vmem:[%s1 + $0xd0] sm:$0xff]
  %v85 = vld [vmem:[%s1 + $0xd8] sm:$0xff]
  %v86 = vld [vmem:[%s1 + $0xe0] sm:$0xff]
  %v87 = vld [vmem:[%s1 + $0xe8] sm:$0xff]
  %v88 = vld [vmem:[%s1 + $0xf0] sm:$0xff]
  %v89 = vld [vmem:[%s1 + $0xf8] sm:$0xff]
  %v94 = vunpack.c.l.b16 %v54
  %v95 = vunpack.c.l.b16 %v55
  %v96 = vunpack.c.l.b16 %v56
  %v97 = vunpack.c.l.b16 %v57
  %v98 = vpack.c.b16 %v95, %v94
  %v99 = vpack.c.b16 %v97, %v96
  %v134 = vunpack.c.l.b16 %v58
  %v135 = vunpack.c.h.b16 %v58
  %v136 = vunpack.c.l.b16 %v59
  %v137 = vunpack.c.h.b16 %v59
  %v138 = vunpack.c.l.b16 %v60
  %v139 = vunpack.c.h.b16 %v60
  %v140 = vunpack.c.l.b16 %v61
  %v141 = vunpack.c.h.b16 %v61
  %v142 = vunpack.c.l.b16 %v62
  %v143 = vunpack.c.h.b16 %v62
  %v144 = vunpack.c.l.b16 %v63
  %v145 = vunpack.c.h.b16 %v63
  %v146 = vunpack.c.l.b16 %v64
  %v147 = vunpack.c.h.b16 %v64
  %v148 = vunpack.c.l.b16 %v65
  %v149 = vunpack.c.h.b16 %v65
  %v150 = vunpack.c.l.b16 %v66
  %v151 = vunpack.c.h.b16 %v66
  %v152 = vunpack.c.l.b16 %v67
  %v153 = vunpack.c.h.b16 %v67
  %v154 = vunpack.c.l.b16 %v68
  %v155 = vunpack.c.h.b16 %v68
  %v156 = vunpack.c.l.b16 %v69
  %v157 = vunpack.c.h.b16 %v69
  %v158 = vunpack.c.l.b16 %v70
  %v159 = vunpack.c.h.b16 %v70
  %v160 = vunpack.c.l.b16 %v71
  %v161 = vunpack.c.h.b16 %v71
  %v162 = vunpack.c.l.b16 %v72
  %v163 = vunpack.c.h.b16 %v72
  %v164 = vunpack.c.l.b16 %v73
  %v165 = vunpack.c.h.b16 %v73
  %v166 = vunpack.c.l.b16 %v74
  %v167 = vunpack.c.h.b16 %v74
  %v168 = vunpack.c.l.b16 %v75
  %v169 = vunpack.c.h.b16 %v75
  %v170 = vunpack.c.l.b16 %v76
  %v171 = vunpack.c.h.b16 %v76
  %v172 = vunpack.c.l.b16 %v77
  %v173 = vunpack.c.h.b16 %v77
  %v174 = vunpack.c.l.b16 %v78
  %v175 = vunpack.c.h.b16 %v78
  %v176 = vunpack.c.l.b16 %v79
  %v177 = vunpack.c.h.b16 %v79
  %v178 = vunpack.c.l.b16 %v80
  %v179 = vunpack.c.h.b16 %v80
  %v180 = vunpack.c.l.b16 %v81
  %v181 = vunpack.c.h.b16 %v81
  %v182 = vunpack.c.l.b16 %v82
  %v183 = vunpack.c.h.b16 %v82
  %v184 = vunpack.c.l.b16 %v83
  %v185 = vunpack.c.h.b16 %v83
  %v186 = vunpack.c.l.b16 %v84
  %v187 = vunpack.c.h.b16 %v84
  %v188 = vunpack.c.l.b16 %v85
  %v189 = vunpack.c.h.b16 %v85
  %v190 = vunpack.c.l.b16 %v86
  %v191 = vunpack.c.h.b16 %v86
  %v192 = vunpack.c.l.b16 %v87
  %v193 = vunpack.c.h.b16 %v87
  %v194 = vunpack.c.l.b16 %v88
  %v195 = vunpack.c.h.b16 %v88
  %v196 = vunpack.c.l.b16 %v89
  %v197 = vunpack.c.h.b16 %v89
  %v198 = vpack.c.b16 %v138, %v134
  %v199 = vpack.c.b16 %v139, %v135
  %v200 = vpack.c.b16 %v140, %v136
  %v201 = vpack.c.b16 %v141, %v137
  %v202 = vpack.c.b16 %v146, %v142
  %v203 = vpack.c.b16 %v147, %v143
  %v204 = vpack.c.b16 %v148, %v144
  %v205 = vpack.c.b16 %v149, %v145
  %v206 = vpack.c.b16 %v154, %v150
  %v207 = vpack.c.b16 %v155, %v151
  %v208 = vpack.c.b16 %v156, %v152
  %v209 = vpack.c.b16 %v157, %v153
  %v210 = vpack.c.b16 %v162, %v158
  %v211 = vpack.c.b16 %v163, %v159
  %v212 = vpack.c.b16 %v164, %v160
  %v213 = vpack.c.b16 %v165, %v161
  %v214 = vpack.c.b16 %v170, %v166
  %v215 = vpack.c.b16 %v171, %v167
  %v216 = vpack.c.b16 %v172, %v168
  %v217 = vpack.c.b16 %v173, %v169
  %v218 = vpack.c.b16 %v178, %v174
  %v219 = vpack.c.b16 %v179, %v175
  %v220 = vpack.c.b16 %v180, %v176
  %v221 = vpack.c.b16 %v181, %v177
  %v222 = vpack.c.b16 %v186, %v182
  %v223 = vpack.c.b16 %v187, %v183
  %v224 = vpack.c.b16 %v188, %v184
  %v225 = vpack.c.b16 %v189, %v185
  %v226 = vpack.c.b16 %v194, %v190
  %v227 = vpack.c.b16 %v195, %v191
  %v228 = vpack.c.b16 %v196, %v192
  %v229 = vpack.c.b16 %v197, %v193
  %262 = vmatprep.subr.bf16.mxu0 %v199
  %263 = vmatpush1.bf16.msra.mxu0 %v198
  %264 = vmatprep.subr.bf16.mxu0 %v203
  %265 = vmatpush1.bf16.msra.mxu0 %v202
  %266 = vmatprep.subr.bf16.mxu0 %v207
  %267 = vmatpush1.bf16.msra.mxu0 %v206
  %268 = vmatprep.subr.bf16.mxu0 %v211
  %269 = vmatpush1.bf16.msra.mxu0 %v210
  %270 = vmatprep.subr.bf16.mxu0 %v215
  %271 = vmatpush1.bf16.msra.mxu0 %v214
  %272 = vmatprep.subr.bf16.mxu0 %v219
  %273 = vmatpush1.bf16.msra.mxu0 %v218
  %274 = vmatprep.subr.bf16.mxu0 %v223
  %275 = vmatpush1.bf16.msra.mxu0 %v222
  %276 = vmatprep.subr.bf16.mxu0 %v227
  %277 = vmatpush1.bf16.msra.mxu0 %v226
  %278 = vmatprep.subr.bf16.mxu0 0
  %279 = vmatpush1.bf16.msra.mxu0 0
  %280 = vmatprep.subr.bf16.mxu0 0
  %281 = vmatpush1.bf16.msra.mxu0 0
  %282 = vmatprep.subr.bf16.mxu0 0
  %283 = vmatpush1.bf16.msra.mxu0 0
  %284 = vmatprep.subr.bf16.mxu0 0
  %285 = vmatpush1.bf16.msra.mxu0 0
  %286 = vmatprep.subr.bf16.mxu0 0
  %287 = vmatpush1.bf16.msra.mxu0 0
  %288 = vmatprep.subr.bf16.mxu0 0
  %289 = vmatpush1.bf16.msra.mxu0 0
  %290 = vmatprep.subr.bf16.mxu0 0
  %291 = vmatpush1.bf16.msra.mxu0 0
  %292 = vmatprep.subr.bf16.mxu0 0
  %293 = vmatpush1.bf16.msra.mxu0 0
  %294 = vmatprep.mubr.bf16.mxu0 0
  %295 = vmatmul.mubr.bf16.gmra.mrb[0].mxu0 %v98
  %v296 = vpop.f32.mrb[0].mxu0
  %v297 = vadd.f32 0.0, %v296
  %v298 = vpop.f32.mrb[0].mxu0
  %v299 = vadd.f32 0.0, %v298
  %v300 = vpop.f32.mrb[0].mxu0
  %v301 = vadd.f32 0.0, %v300
  %v302 = vpop.f32.mrb[0].mxu0
  %v303 = vadd.f32 0.0, %v302
  %304 = vmatprep.mubr.bf16.mxu0 0
  %305 = vmatmul.mubr.bf16.gmra.mrb[0].mxu0 %v99
  %v306 = vpop.f32.mrb[0].mxu0
  %v307 = vadd.f32 0.0, %v306
  %v308 = vpop.f32.mrb[0].mxu0
  %v309 = vadd.f32 0.0, %v308
  %v310 = vpop.f32.mrb[0].mxu0
  %v311 = vadd.f32 0.0, %v310
  %v312 = vpop.f32.mrb[0].mxu0
  %v313 = vadd.f32 0.0, %v312
  %314 = vdwg.mxu0
  %315 = vmatprep.subr.bf16.mxu0 %v201
  %316 = vmatpush1.bf16.msra.mxu0 %v200
  %317 = vmatprep.subr.bf16.mxu0 %v205
  %318 = vmatpush1.bf16.msra.mxu0 %v204
  %319 = vmatprep.subr.bf16.mxu0 %v209
  %320 = vmatpush1.bf16.msra.mxu0 %v208
  %321 = vmatprep.subr.bf16.mxu0 %v213
  %322 = vmatpush1.bf16.msra.mxu0 %v212
  %323 = vmatprep.subr.bf16.mxu0 %v217
  %324 = vmatpush1.bf16.msra.mxu0 %v216
  %325 = vmatprep.subr.bf16.mxu0 %v221
  %326 = vmatpush1.bf16.msra.mxu0 %v220
  %327 = vmatprep.subr.bf16.mxu0 %v225
  %328 = vmatpush1.bf16.msra.mxu0 %v224
  %329 = vmatprep.subr.bf16.mxu0 %v229
  %330 = vmatpush1.bf16.msra.mxu0 %v228
  %331 = vmatprep.subr.bf16.mxu0 0
  %332 = vmatpush1.bf16.msra.mxu0 0
  %333 = vmatprep.subr.bf16.mxu0 0
  %334 = vmatpush1.bf16.msra.mxu0 0
  %335 = vmatprep.subr.bf16.mxu0 0
  %336 = vmatpush1.bf16.msra.mxu0 0
  %337 = vmatprep.subr.bf16.mxu0 0
  %338 = vmatpush1.bf16.msra.mxu0 0
  %339 = vmatprep.subr.bf16.mxu0 0
  %340 = vmatpush1.bf16.msra.mxu0 0
  %341 = vmatprep.subr.bf16.mxu0 0
  %342 = vmatpush1.bf16.msra.mxu0 0
  %343 = vmatprep.subr.bf16.mxu0 0
  %344 = vmatpush1.bf16.msra.mxu0 0
  %345 = vmatprep.subr.bf16.mxu0 0
  %346 = vmatpush1.bf16.msra.mxu0 0
  %347 = vmatprep.mubr.bf16.mxu0 0
  %348 = vmatmul.mubr.bf16.gmra.mrb[0].mxu0 %v98
  %v349 = vpop.f32.mrb[0].mxu0
  %v350 = vadd.f32 0.0, %v349
  %v351 = vpop.f32.mrb[0].mxu0
  %v352 = vadd.f32 0.0, %v351
  %v353 = vpop.f32.mrb[0].mxu0
  %v354 = vadd.f32 0.0, %v353
  %v355 = vpop.f32.mrb[0].mxu0
  %v356 = vadd.f32 0.0, %v355
  %357 = vmatprep.mubr.bf16.mxu0 0
  %358 = vmatmul.mubr.bf16.gmra.mrb[0].mxu0 %v99
  %v359 = vpop.f32.mrb[0].mxu0
  %v360 = vadd.f32 0.0, %v359
  %v361 = vpop.f32.mrb[0].mxu0
  %v362 = vadd.f32 0.0, %v361
  %v363 = vpop.f32.mrb[0].mxu0
  %v364 = vadd.f32 0.0, %v363
  %v365 = vpop.f32.mrb[0].mxu0
  %v366 = vadd.f32 0.0, %v365
  %367 = vdwg.mxu0
  %v368 = vld [vmem:[%s2] sm:$0xf]
  %v370 = vlaneseq
  %v371 = vshrl.u32 %v370, 7
  %v372 = vsub.s32 0, %v371
  %v373 = vrot.slane %v368, %v372
  %v374 = vlaneseq
  %v375 = vshrl.u32 %v374, 7
  %v376 = vsub.s32 1, %v375
  %v377 = vrot.slane %v368, %v376
  %v378 = vlaneseq
  %v379 = vshrl.u32 %v378, 7
  %v380 = vsub.s32 2, %v379
  %v381 = vrot.slane %v368, %v380
  %v382 = vlaneseq
  %v383 = vshrl.u32 %v382, 7
  %v384 = vsub.s32 3, %v383
  %v385 = vrot.slane %v368, %v384
  %v390 = vmul.f32 %v297, %v373
  %v391 = vmul.f32 %v299, %v377
  %v392 = vmul.f32 %v350, %v381
  %v393 = vmul.f32 %v352, %v385
  %v394 = vmul.f32 %v301, %v373
  %v395 = vmul.f32 %v303, %v377
  %v396 = vmul.f32 %v354, %v381
  %v397 = vmul.f32 %v356, %v385
  %v398 = vmul.f32 %v307, %v373
  %v399 = vmul.f32 %v309, %v377
  %v400 = vmul.f32 %v360, %v381
  %v401 = vmul.f32 %v362, %v385
  %v402 = vmul.f32 %v311, %v373
  %v403 = vmul.f32 %v313, %v377
  %v404 = vmul.f32 %v364, %v381
  %v405 = vmul.f32 %v366, %v385
  %v406 = vld [vmem:[%s3] sm:$0xf]
  %v408 = vlaneseq
  %v409 = vshrl.u32 %v408, 7
  %v410 = vsub.s32 0, %v409
  %v411 = vrot.slane %v406, %v410
  %v412 = vlaneseq
  %v413 = vshrl.u32 %v412, 7
  %v414 = vsub.s32 1, %v413
  %v415 = vrot.slane %v406, %v414
  %v416 = vlaneseq
  %v417 = vshrl.u32 %v416, 7
  %v418 = vsub.s32 2, %v417
  %v419 = vrot.slane %v406, %v418
  %v420 = vlaneseq
  %v421 = vshrl.u32 %v420, 7
  %v422 = vsub.s32 3, %v421
  %v423 = vrot.slane %v406, %v422
  %v428 = vadd.f32 %v390, %v411
  %v429 = vadd.f32 %v391, %v415
  %v430 = vadd.f32 %v392, %v419
  %v431 = vadd.f32 %v393, %v423
  %v432 = vadd.f32 %v394, %v411
  %v433 = vadd.f32 %v395, %v415
  %v434 = vadd.f32 %v396, %v419
  %v435 = vadd.f32 %v397, %v423
  %v436 = vadd.f32 %v398, %v411
  %v437 = vadd.f32 %v399, %v415
  %v438 = vadd.f32 %v400, %v419
  %v439 = vadd.f32 %v401, %v423
  %v440 = vadd.f32 %v402, %v411
  %v441 = vadd.f32 %v403, %v415
  %v442 = vadd.f32 %v404, %v419
  %v443 = vadd.f32 %v405, %v423
  %v444 = vxor.u32 %v428, 2147483648
  %v445 = vxor.u32 %v429, 2147483648
  %v446 = vxor.u32 %v430, 2147483648
  %v447 = vxor.u32 %v431, 2147483648
  %v448 = vxor.u32 %v432, 2147483648
  %v449 = vxor.u32 %v433, 2147483648
  %v450 = vxor.u32 %v434, 2147483648
  %v451 = vxor.u32 %v435, 2147483648
  %v452 = vxor.u32 %v436, 2147483648
  %v453 = vxor.u32 %v437, 2147483648
  %v454 = vxor.u32 %v438, 2147483648
  %v455 = vxor.u32 %v439, 2147483648
  %v456 = vxor.u32 %v440, 2147483648
  %v457 = vxor.u32 %v441, 2147483648
  %v458 = vxor.u32 %v442, 2147483648
  %v459 = vxor.u32 %v443, 2147483648
  %v460 = vmul.f32 %v444, 1.442695
  %v461 = vpow.pop %v460
  %v462 = vmul.f32 %v445, 1.442695
  %v463 = vpow.pop %v462
  %v464 = vmul.f32 %v446, 1.442695
  %v465 = vpow.pop %v464
  %v466 = vmul.f32 %v447, 1.442695
  %v467 = vpow.pop %v466
  %v468 = vmul.f32 %v448, 1.442695
  %v469 = vpow.pop %v468
  %v470 = vmul.f32 %v449, 1.442695
  %v471 = vpow.pop %v470
  %v472 = vmul.f32 %v450, 1.442695
  %v473 = vpow.pop %v472
  %v474 = vmul.f32 %v451, 1.442695
  %v475 = vpow.pop %v474
  %v476 = vmul.f32 %v452, 1.442695
  %v477 = vpow.pop %v476
  %v478 = vmul.f32 %v453, 1.442695
  %v479 = vpow.pop %v478
  %v480 = vmul.f32 %v454, 1.442695
  %v481 = vpow.pop %v480
  %v482 = vmul.f32 %v455, 1.442695
  %v483 = vpow.pop %v482
  %v484 = vmul.f32 %v456, 1.442695
  %v485 = vpow.pop %v484
  %v486 = vmul.f32 %v457, 1.442695
  %v487 = vpow.pop %v486
  %v488 = vmul.f32 %v458, 1.442695
  %v489 = vpow.pop %v488
  %v490 = vmul.f32 %v459, 1.442695
  %v491 = vpow.pop %v490
  %v492 = vadd.f32 %v461, 1.0
  %v493 = vadd.f32 %v463, 1.0
  %v494 = vadd.f32 %v465, 1.0
  %v495 = vadd.f32 %v467, 1.0
  %v496 = vadd.f32 %v469, 1.0
  %v497 = vadd.f32 %v471, 1.0
  %v498 = vadd.f32 %v473, 1.0
  %v499 = vadd.f32 %v475, 1.0
  %v500 = vadd.f32 %v477, 1.0
  %v501 = vadd.f32 %v479, 1.0
  %v502 = vadd.f32 %v481, 1.0
  %v503 = vadd.f32 %v483, 1.0
  %v504 = vadd.f32 %v485, 1.0
  %v505 = vadd.f32 %v487, 1.0
  %v506 = vadd.f32 %v489, 1.0
  %v507 = vadd.f32 %v491, 1.0
  %v508 = vrcp.pop %v492
  %v509 = vmul.f32 1.0, %v508
  %v510 = vrcp.pop %v493
  %v511 = vmul.f32 1.0, %v510
  %v512 = vrcp.pop %v494
  %v513 = vmul.f32 1.0, %v512
  %v514 = vrcp.pop %v495
  %v515 = vmul.f32 1.0, %v514
  %v516 = vrcp.pop %v496
  %v517 = vmul.f32 1.0, %v516
  %v518 = vrcp.pop %v497
  %v519 = vmul.f32 1.0, %v518
  %v520 = vrcp.pop %v498
  %v521 = vmul.f32 1.0, %v520
  %v522 = vrcp.pop %v499
  %v523 = vmul.f32 1.0, %v522
  %v524 = vrcp.pop %v500
  %v525 = vmul.f32 1.0, %v524
  %v526 = vrcp.pop %v501
  %v527 = vmul.f32 1.0, %v526
  %v528 = vrcp.pop %v502
  %v529 = vmul.f32 1.0, %v528
  %v530 = vrcp.pop %v503
  %v531 = vmul.f32 1.0, %v530
  %v532 = vrcp.pop %v504
  %v533 = vmul.f32 1.0, %v532
  %v534 = vrcp.pop %v505
  %v535 = vmul.f32 1.0, %v534
  %v536 = vrcp.pop %v506
  %v537 = vmul.f32 1.0, %v536
  %v538 = vrcp.pop %v507
  %v539 = vmul.f32 1.0, %v538
  %v540 = vmul.f32 %v428, %v509
  %v541 = vmul.f32 %v429, %v511
  %v542 = vmul.f32 %v430, %v513
  %v543 = vmul.f32 %v431, %v515
  %v544 = vmul.f32 %v432, %v517
  %v545 = vmul.f32 %v433, %v519
  %v546 = vmul.f32 %v434, %v521
  %v547 = vmul.f32 %v435, %v523
  %v548 = vmul.f32 %v436, %v525
  %v549 = vmul.f32 %v437, %v527
  %v550 = vmul.f32 %v438, %v529
  %v551 = vmul.f32 %v439, %v531
  %v552 = vmul.f32 %v440, %v533
  %v553 = vmul.f32 %v441, %v535
  %v554 = vmul.f32 %v442, %v537
  %v555 = vmul.f32 %v443, %v539
  %v556 = vlaneseq
  %vm557 = vcmp.ge.s32.totalorder %v556, 0
  %vm558 = vcmp.lt.s32.totalorder %v556, 512
  %vm559 = vmand %vm557, %vm558
  %560 = vst.msk [vmem:[#allocation2] ss:$8 sm:$0xf] %vm559, 0.0
  %561 = vst.msk [vmem:[#allocation2] ss:$8 sm:$0x0] %vm559, 0.0
  %s562 = scalar_lea.vmem [#allocation2], 96
  %563 = vst.msk [vmem:[%s562] ss:$8 sm:$0xf] %vm559, 0.0
  %564 = vst.msk [vmem:[%s562] ss:$8 sm:$0x0] %vm559, 0.0
  %s565 = scalar_lea.vmem [#allocation2], 65
  %566 = vst.msk [vmem:[%s565] ss:$8 sm:$0xf] %vm559, 0.0
  %567 = vst.msk [vmem:[%s565] ss:$8 sm:$0x0] %vm559, 0.0
  %s568 = scalar_lea.vmem [#allocation2], 161
  %569 = vst.msk [vmem:[%s568] ss:$8 sm:$0xf] %vm559, 0.0
  %570 = vst.msk [vmem:[%s568] ss:$8 sm:$0x0] %vm559, 0.0
  %vm587 = vcmask 1040384
  %v588 = vrot.slane %v540, 7
  %v589 = vrot.slane %v541, 7
  %v590 = vrot.slane %v542, 7
  %v591 = vrot.slane %v543, 7
  %v592 = vrot.slane %v544, 7
  %v593 = vsel %vm587, %v588, %v592
  %v594 = vrot.slane %v545, 7
  %v595 = vsel %vm587, %v589, %v594
  %v596 = vrot.slane %v546, 7
  %v597 = vsel %vm587, %v590, %v596
  %v598 = vrot.slane %v547, 7
  %v599 = vsel %vm587, %v591, %v598
  %v600 = vrot.slane %v548, 7
  %v601 = vrot.slane %v549, 7
  %v602 = vrot.slane %v550, 7
  %v603 = vrot.slane %v551, 7
  %v604 = vrot.slane %v552, 7
  %v605 = vsel %vm587, %v600, %v604
  %v606 = vrot.slane %v553, 7
  %v607 = vsel %vm587, %v601, %v606
  %v608 = vrot.slane %v554, 7
  %v609 = vsel %vm587, %v602, %v608
  %v610 = vrot.slane %v555, 7
  %v611 = vsel %vm587, %v603, %v610
  %636 = vst [vmem:[#allocation2] sm:$0xfe] %v588
  %637 = vst [vmem:[#allocation2 + $0x8] sm:$0xfe] %v589
  %638 = vst [vmem:[#allocation2 + $0x10] sm:$0xfe] %v590
  %639 = vst [vmem:[#allocation2 + $0x18] sm:$0xfe] %v591
  %640 = vst [vmem:[#allocation2 + $0x20] sm:$0xff] %v593
  %641 = vst [vmem:[#allocation2 + $0x28] sm:$0xff] %v595
  %642 = vst [vmem:[#allocation2 + $0x30] sm:$0xff] %v597
  %643 = vst [vmem:[#allocation2 + $0x38] sm:$0xff] %v599
  %644 = vst [vmem:[#allocation2 + $0x40] sm:$0x1] %v592
  %645 = vst [vmem:[#allocation2 + $0x48] sm:$0x1] %v594
  %646 = vst [vmem:[#allocation2 + $0x50] sm:$0x1] %v596
  %647 = vst [vmem:[#allocation2 + $0x58] sm:$0x1] %v598
  %648 = vst [vmem:[#allocation2 + $0x60] sm:$0xfe] %v600
  %649 = vst [vmem:[#allocation2 + $0x68] sm:$0xfe] %v601
  %650 = vst [vmem:[#allocation2 + $0x70] sm:$0xfe] %v602
  %651 = vst [vmem:[#allocation2 + $0x78] sm:$0xfe] %v603
  %652 = vst [vmem:[#allocation2 + $0x80] sm:$0xff] %v605
  %653 = vst [vmem:[#allocation2 + $0x88] sm:$0xff] %v607
  %654 = vst [vmem:[#allocation2 + $0x90] sm:$0xff] %v609
  %655 = vst [vmem:[#allocation2 + $0x98] sm:$0xff] %v611
  %656 = vst [vmem:[#allocation2 + $0xa0] sm:$0x1] %v604
  %657 = vst [vmem:[#allocation2 + $0xa8] sm:$0x1] %v606
  %658 = vst [vmem:[#allocation2 + $0xb0] sm:$0x1] %v608
  %659 = vst [vmem:[#allocation2 + $0xb8] sm:$0x1] %v610
  %v660 = vld [vmem:[#allocation2] sm:$0xff]
  %v661 = vld [vmem:[#allocation2 + $0x8] sm:$0xff]
  %v662 = vld [vmem:[#allocation2 + $0x10] sm:$0xff]
  %v663 = vld [vmem:[#allocation2 + $0x18] sm:$0xff]
  %v664 = vld [vmem:[#allocation2 + $0x20] sm:$0xff]
  %v665 = vld [vmem:[#allocation2 + $0x28] sm:$0xff]
  %v666 = vld [vmem:[#allocation2 + $0x30] sm:$0xff]
  %v667 = vld [vmem:[#allocation2 + $0x38] sm:$0xff]
  %v668 = vld [vmem:[#allocation2 + $0x40] sm:$0x3]
  %v669 = vld [vmem:[#allocation2 + $0x48] sm:$0x3]
  %v670 = vld [vmem:[#allocation2 + $0x50] sm:$0x3]
  %v671 = vld [vmem:[#allocation2 + $0x58] sm:$0x3]
  %v672 = vld [vmem:[#allocation2 + $0x60] sm:$0xff]
  %v673 = vld [vmem:[#allocation2 + $0x68] sm:$0xff]
  %v674 = vld [vmem:[#allocation2 + $0x70] sm:$0xff]
  %v675 = vld [vmem:[#allocation2 + $0x78] sm:$0xff]
  %v676 = vld [vmem:[#allocation2 + $0x80] sm:$0xff]
  %v677 = vld [vmem:[#allocation2 + $0x88] sm:$0xff]
  %v678 = vld [vmem:[#allocation2 + $0x90] sm:$0xff]
  %v679 = vld [vmem:[#allocation2 + $0x98] sm:$0xff]
  %v680 = vld [vmem:[#allocation2 + $0xa0] sm:$0x3]
  %v681 = vld [vmem:[#allocation2 + $0xa8] sm:$0x3]
  %v682 = vld [vmem:[#allocation2 + $0xb0] sm:$0x3]
  %v683 = vld [vmem:[#allocation2 + $0xb8] sm:$0x3]
  %v684 = vlaneseq
  %v685 = vand.u32 %v684, 127
  %v686 = vadd.s32 %v685, 128
  %v687 = vadd.s32 %v685, 256
  %v688 = vadd.s32 %v685, 384
  %689 = vrot.lane.b32.xlu0 %v660, 32
  %v690 = vpop.permute.xlu0 %689
  %691 = vrot.lane.b32.xlu0 %v664, 32
  %v692 = vpop.permute.xlu0 %691
  %693 = vrot.lane.b32.xlu0 %v668, 32
  %v694 = vpop.permute.xlu0 %693
  %695 = vrot.lane.b32.xlu0 %v672, 32
  %v696 = vpop.permute.xlu0 %695
  %697 = vrot.lane.b32.xlu0 %v676, 32
  %v698 = vpop.permute.xlu0 %697
  %699 = vrot.lane.b32.xlu0 %v680, 32
  %v700 = vpop.permute.xlu0 %699
  %701 = vrot.lane.b32.xlu0 %v661, 32
  %v702 = vpop.permute.xlu0 %701
  %703 = vrot.lane.b32.xlu0 %v665, 32
  %v704 = vpop.permute.xlu0 %703
  %705 = vrot.lane.b32.xlu0 %v669, 32
  %v706 = vpop.permute.xlu0 %705
  %707 = vrot.lane.b32.xlu0 %v673, 32
  %v708 = vpop.permute.xlu0 %707
  %709 = vrot.lane.b32.xlu0 %v677, 32
  %v710 = vpop.permute.xlu0 %709
  %711 = vrot.lane.b32.xlu0 %v681, 32
  %v712 = vpop.permute.xlu0 %711
  %713 = vrot.lane.b32.xlu0 %v662, 32
  %v714 = vpop.permute.xlu0 %713
  %715 = vrot.lane.b32.xlu0 %v666, 32
  %v716 = vpop.permute.xlu0 %715
  %717 = vrot.lane.b32.xlu0 %v670, 32
  %v718 = vpop.permute.xlu0 %717
  %719 = vrot.lane.b32.xlu0 %v674, 32
  %v720 = vpop.permute.xlu0 %719
  %721 = vrot.lane.b32.xlu0 %v678, 32
  %v722 = vpop.permute.xlu0 %721
  %723 = vrot.lane.b32.xlu0 %v682, 32
  %v724 = vpop.permute.xlu0 %723
  %725 = vrot.lane.b32.xlu0 %v663, 32
  %v726 = vpop.permute.xlu0 %725
  %727 = vrot.lane.b32.xlu0 %v667, 32
  %v728 = vpop.permute.xlu0 %727
  %729 = vrot.lane.b32.xlu0 %v671, 32
  %v730 = vpop.permute.xlu0 %729
  %731 = vrot.lane.b32.xlu0 %v675, 32
  %v732 = vpop.permute.xlu0 %731
  %733 = vrot.lane.b32.xlu0 %v679, 32
  %v734 = vpop.permute.xlu0 %733
  %735 = vrot.lane.b32.xlu0 %v683, 32
  %v736 = vpop.permute.xlu0 %735
  %vm737 = vcmp.lt.s32.totalorder %v685, 32
  %v738 = vsel %vm737, %v714, %v726
  %v739 = vsel %vm737, %v716, %v728
  %v740 = vsel %vm737, %v718, %v730
  %v741 = vsel %vm737, %v720, %v732
  %v742 = vsel %vm737, %v722, %v734
  %v743 = vsel %vm737, %v724, %v736
  %v744 = vsel %vm737, %v702, %v714
  %v745 = vsel %vm737, %v704, %v716
  %v746 = vsel %vm737, %v706, %v718
  %v747 = vsel %vm737, %v708, %v720
  %v748 = vsel %vm737, %v710, %v722
  %v749 = vsel %vm737, %v712, %v724
  %v750 = vsel %vm737, %v690, %v702
  %v751 = vsel %vm737, %v692, %v704
  %v752 = vsel %vm737, %v694, %v706
  %v753 = vsel %vm737, %v696, %v708
  %v754 = vsel %vm737, %v698, %v710
  %v755 = vsel %vm737, %v700, %v712
  %v756 = vsel %vm737, %v726, %v690
  %v757 = vsel %vm737, %v728, %v692
  %v758 = vsel %vm737, %v730, %v694
  %v759 = vsel %vm737, %v732, %v696
  %v760 = vsel %vm737, %v734, %v698
  %v761 = vsel %vm737, %v736, %v700
  %vm762 = vcmp.lt.s32.totalorder %v686, 32
  %vm763 = vcmp.lt.s32.totalorder %v687, 32
  %vm764 = vcmp.lt.s32.totalorder %v688, 32
  %v765 = vsel %vm737, 0.0, %v756
  %v766 = vsel %vm762, 0.0, %v750
  %v767 = vsel %vm763, 0.0, %v744
  %v768 = vsel %vm764, 0.0, %v738
  %v769 = vsel %vm737, 0.0, %v757
  %v770 = vsel %vm762, 0.0, %v751
  %v771 = vsel %vm763, 0.0, %v745
  %v772 = vsel %vm764, 0.0, %v739
  %v773 = vsel %vm737, 0.0, %v758
  %v774 = vsel %vm762, 0.0, %v752
  %v775 = vsel %vm763, 0.0, %v746
  %v776 = vsel %vm764, 0.0, %v740
  %v777 = vsel %vm737, 0.0, %v759
  %v778 = vsel %vm762, 0.0, %v753
  %v779 = vsel %vm763, 0.0, %v747
  %v780 = vsel %vm764, 0.0, %v741
  %v781 = vsel %vm737, 0.0, %v760
  %v782 = vsel %vm762, 0.0, %v754
  %v783 = vsel %vm763, 0.0, %v748
  %v784 = vsel %vm764, 0.0, %v742
  %v785 = vsel %vm737, 0.0, %v761
  %v786 = vsel %vm762, 0.0, %v755
  %v787 = vsel %vm763, 0.0, %v749
  %v788 = vsel %vm764, 0.0, %v743
  %789 = vrot.lane.b32.xlu0 %v660, 96
  %v790 = vpop.permute.xlu0 %789
  %791 = vrot.lane.b32.xlu0 %v664, 96
  %v792 = vpop.permute.xlu0 %791
  %793 = vrot.lane.b32.xlu0 %v668, 96
  %v794 = vpop.permute.xlu0 %793
  %795 = vrot.lane.b32.xlu0 %v672, 96
  %v796 = vpop.permute.xlu0 %795
  %797 = vrot.lane.b32.xlu0 %v676, 96
  %v798 = vpop.permute.xlu0 %797
  %799 = vrot.lane.b32.xlu0 %v680, 96
  %v800 = vpop.permute.xlu0 %799
  %801 = vrot.lane.b32.xlu0 %v661, 96
  %v802 = vpop.permute.xlu0 %801
  %803 = vrot.lane.b32.xlu0 %v665, 96
  %v804 = vpop.permute.xlu0 %803
  %805 = vrot.lane.b32.xlu0 %v669, 96
  %v806 = vpop.permute.xlu0 %805
  %807 = vrot.lane.b32.xlu0 %v673, 96
  %v808 = vpop.permute.xlu0 %807
  %809 = vrot.lane.b32.xlu0 %v677, 96
  %v810 = vpop.permute.xlu0 %809
  %811 = vrot.lane.b32.xlu0 %v681, 96
  %v812 = vpop.permute.xlu0 %811
  %813 = vrot.lane.b32.xlu0 %v662, 96
  %v814 = vpop.permute.xlu0 %813
  %815 = vrot.lane.b32.xlu0 %v666, 96
  %v816 = vpop.permute.xlu0 %815
  %817 = vrot.lane.b32.xlu0 %v670, 96
  %v818 = vpop.permute.xlu0 %817
  %819 = vrot.lane.b32.xlu0 %v674, 96
  %v820 = vpop.permute.xlu0 %819
  %821 = vrot.lane.b32.xlu0 %v678, 96
  %v822 = vpop.permute.xlu0 %821
  %823 = vrot.lane.b32.xlu0 %v682, 96
  %v824 = vpop.permute.xlu0 %823
  %825 = vrot.lane.b32.xlu0 %v663, 96
  %v826 = vpop.permute.xlu0 %825
  %827 = vrot.lane.b32.xlu0 %v667, 96
  %v828 = vpop.permute.xlu0 %827
  %829 = vrot.lane.b32.xlu0 %v671, 96
  %v830 = vpop.permute.xlu0 %829
  %831 = vrot.lane.b32.xlu0 %v675, 96
  %v832 = vpop.permute.xlu0 %831
  %833 = vrot.lane.b32.xlu0 %v679, 96
  %v834 = vpop.permute.xlu0 %833
  %835 = vrot.lane.b32.xlu0 %v683, 96
  %v836 = vpop.permute.xlu0 %835
  %vm837 = vcmp.lt.s32.totalorder %v685, 96
  %v838 = vsel %vm837, %v814, %v826
  %v839 = vsel %vm837, %v816, %v828
  %v840 = vsel %vm837, %v818, %v830
  %v841 = vsel %vm837, %v820, %v832
  %v842 = vsel %vm837, %v822, %v834
  %v843 = vsel %vm837, %v824, %v836
  %v844 = vsel %vm837, %v802, %v814
  %v845 = vsel %vm837, %v804, %v816
  %v846 = vsel %vm837, %v806, %v818
  %v847 = vsel %vm837, %v808, %v820
  %v848 = vsel %vm837, %v810, %v822
  %v849 = vsel %vm837, %v812, %v824
  %v850 = vsel %vm837, %v790, %v802
  %v851 = vsel %vm837, %v792, %v804
  %v852 = vsel %vm837, %v794, %v806
  %v853 = vsel %vm837, %v796, %v808
  %v854 = vsel %vm837, %v798, %v810
  %v855 = vsel %vm837, %v800, %v812
  %v856 = vsel %vm837, %v826, %v790
  %v857 = vsel %vm837, %v828, %v792
  %v858 = vsel %vm837, %v830, %v794
  %v859 = vsel %vm837, %v832, %v796
  %v860 = vsel %vm837, %v834, %v798
  %v861 = vsel %vm837, %v836, %v800
  %vm862 = vcmp.ge.s32.totalorder %v685, 480
  %vm863 = vcmp.ge.s32.totalorder %v686, 480
  %vm864 = vcmp.ge.s32.totalorder %v687, 480
  %vm865 = vcmp.ge.s32.totalorder %v688, 480
  %v866 = vsel %vm862, 0.0, %v850
  %v867 = vsel %vm863, 0.0, %v844
  %v868 = vsel %vm864, 0.0, %v838
  %v869 = vsel %vm865, 0.0, %v856
  %v870 = vsel %vm862, 0.0, %v851
  %v871 = vsel %vm863, 0.0, %v845
  %v872 = vsel %vm864, 0.0, %v839
  %v873 = vsel %vm865, 0.0, %v857
  %v874 = vsel %vm862, 0.0, %v852
  %v875 = vsel %vm863, 0.0, %v846
  %v876 = vsel %vm864, 0.0, %v840
  %v877 = vsel %vm865, 0.0, %v858
  %v878 = vsel %vm862, 0.0, %v853
  %v879 = vsel %vm863, 0.0, %v847
  %v880 = vsel %vm864, 0.0, %v841
  %v881 = vsel %vm865, 0.0, %v859
  %v882 = vsel %vm862, 0.0, %v854
  %v883 = vsel %vm863, 0.0, %v848
  %v884 = vsel %vm864, 0.0, %v842
  %v885 = vsel %vm865, 0.0, %v860
  %v886 = vsel %vm862, 0.0, %v855
  %v887 = vsel %vm863, 0.0, %v849
  %v888 = vsel %vm864, 0.0, %v843
  %v889 = vsel %vm865, 0.0, %v861
  %v890 = vld [vmem:[%s4] ss:$8 sm:$0xf]
  %v892 = vlaneseq
  %v893 = vshrl.u32 %v892, 7
  %v894 = vsub.s32 0, %v893
  %v895 = vrot.slane %v890, %v894
  %v896 = vlaneseq
  %v897 = vshrl.u32 %v896, 7
  %v898 = vsub.s32 1, %v897
  %v899 = vrot.slane %v890, %v898
  %v900 = vlaneseq
  %v901 = vshrl.u32 %v900, 7
  %v902 = vsub.s32 2, %v901
  %v903 = vrot.slane %v890, %v902
  %v904 = vlaneseq
  %v905 = vshrl.u32 %v904, 7
  %v906 = vsub.s32 3, %v905
  %v907 = vrot.slane %v890, %v906
  %v912 = vmul.f32 %v765, %v895
  %v913 = vmul.f32 %v766, %v899
  %v914 = vmul.f32 %v767, %v903
  %v915 = vmul.f32 %v768, %v907
  %v916 = vmul.f32 %v769, %v895
  %v917 = vmul.f32 %v770, %v899
  %v918 = vmul.f32 %v771, %v903
  %v919 = vmul.f32 %v772, %v907
  %v920 = vmul.f32 %v777, %v895
  %v921 = vmul.f32 %v778, %v899
  %v922 = vmul.f32 %v779, %v903
  %v923 = vmul.f32 %v780, %v907
  %v924 = vmul.f32 %v781, %v895
  %v925 = vmul.f32 %v782, %v899
  %v926 = vmul.f32 %v783, %v903
  %v927 = vmul.f32 %v784, %v907
  %v928 = vadd.f32 %v912, 0.0
  %v929 = vadd.f32 %v913, 0.0
  %v930 = vadd.f32 %v914, 0.0
  %v931 = vadd.f32 %v915, 0.0
  %v932 = vadd.f32 %v916, 0.0
  %v933 = vadd.f32 %v917, 0.0
  %v934 = vadd.f32 %v918, 0.0
  %v935 = vadd.f32 %v919, 0.0
  %v936 = vadd.f32 %v920, 0.0
  %v937 = vadd.f32 %v921, 0.0
  %v938 = vadd.f32 %v922, 0.0
  %v939 = vadd.f32 %v923, 0.0
  %v940 = vadd.f32 %v924, 0.0
  %v941 = vadd.f32 %v925, 0.0
  %v942 = vadd.f32 %v926, 0.0
  %v943 = vadd.f32 %v927, 0.0
  %s944 = scalar_lea.vmem %s4, 1
  %v945 = vld [vmem:[%s944] ss:$8 sm:$0xf]
  %v947 = vlaneseq
  %v948 = vshrl.u32 %v947, 7
  %v949 = vsub.s32 0, %v948
  %v950 = vrot.slane %v945, %v949
  %v951 = vlaneseq
  %v952 = vshrl.u32 %v951, 7
  %v953 = vsub.s32 1, %v952
  %v954 = vrot.slane %v945, %v953
  %v955 = vlaneseq
  %v956 = vshrl.u32 %v955, 7
  %v957 = vsub.s32 2, %v956
  %v958 = vrot.slane %v945, %v957
  %v959 = vlaneseq
  %v960 = vshrl.u32 %v959, 7
  %v961 = vsub.s32 3, %v960
  %v962 = vrot.slane %v945, %v961
  %v967 = vmul.f32 %v660, %v950
  %v968 = vmul.f32 %v661, %v954
  %v969 = vmul.f32 %v662, %v958
  %v970 = vmul.f32 %v663, %v962
  %v971 = vmul.f32 %v664, %v950
  %v972 = vmul.f32 %v665, %v954
  %v973 = vmul.f32 %v666, %v958
  %v974 = vmul.f32 %v667, %v962
  %v975 = vmul.f32 %v672, %v950
  %v976 = vmul.f32 %v673, %v954
  %v977 = vmul.f32 %v674, %v958
  %v978 = vmul.f32 %v675, %v962
  %v979 = vmul.f32 %v676, %v950
  %v980 = vmul.f32 %v677, %v954
  %v981 = vmul.f32 %v678, %v958
  %v982 = vmul.f32 %v679, %v962
  %v983 = vadd.f32 %v928, %v967
  %v984 = vadd.f32 %v929, %v968
  %v985 = vadd.f32 %v930, %v969
  %v986 = vadd.f32 %v931, %v970
  %v987 = vadd.f32 %v932, %v971
  %v988 = vadd.f32 %v933, %v972
  %v989 = vadd.f32 %v934, %v973
  %v990 = vadd.f32 %v935, %v974
  %v991 = vadd.f32 %v936, %v975
  %v992 = vadd.f32 %v937, %v976
  %v993 = vadd.f32 %v938, %v977
  %v994 = vadd.f32 %v939, %v978
  %v995 = vadd.f32 %v940, %v979
  %v996 = vadd.f32 %v941, %v980
  %v997 = vadd.f32 %v942, %v981
  %v998 = vadd.f32 %v943, %v982
  %s999 = scalar_lea.vmem %s4, 2
  %v1000 = vld [vmem:[%s999] ss:$8 sm:$0xf]
  %v1002 = vlaneseq
  %v1003 = vshrl.u32 %v1002, 7
  %v1004 = vsub.s32 0, %v1003
  %v1005 = vrot.slane %v1000, %v1004
  %v1006 = vlaneseq
  %v1007 = vshrl.u32 %v1006, 7
  %v1008 = vsub.s32 1, %v1007
  %v1009 = vrot.slane %v1000, %v1008
  %v1010 = vlaneseq
  %v1011 = vshrl.u32 %v1010, 7
  %v1012 = vsub.s32 2, %v1011
  %v1013 = vrot.slane %v1000, %v1012
  %v1014 = vlaneseq
  %v1015 = vshrl.u32 %v1014, 7
  %v1016 = vsub.s32 3, %v1015
  %v1017 = vrot.slane %v1000, %v1016
  %v1022 = vmul.f32 %v866, %v1005
  %v1023 = vmul.f32 %v867, %v1009
  %v1024 = vmul.f32 %v868, %v1013
  %v1025 = vmul.f32 %v869, %v1017
  %v1026 = vmul.f32 %v870, %v1005
  %v1027 = vmul.f32 %v871, %v1009
  %v1028 = vmul.f32 %v872, %v1013
  %v1029 = vmul.f32 %v873, %v1017
  %v1030 = vmul.f32 %v878, %v1005
  %v1031 = vmul.f32 %v879, %v1009
  %v1032 = vmul.f32 %v880, %v1013
  %v1033 = vmul.f32 %v881, %v1017
  %v1034 = vmul.f32 %v882, %v1005
  %v1035 = vmul.f32 %v883, %v1009
  %v1036 = vmul.f32 %v884, %v1013
  %v1037 = vmul.f32 %v885, %v1017
  %v1038 = vadd.f32 %v983, %v1022
  %v1039 = vadd.f32 %v984, %v1023
  %v1040 = vadd.f32 %v985, %v1024
  %v1041 = vadd.f32 %v986, %v1025
  %v1042 = vadd.f32 %v987, %v1026
  %v1043 = vadd.f32 %v988, %v1027
  %v1044 = vadd.f32 %v989, %v1028
  %v1045 = vadd.f32 %v990, %v1029
  %v1046 = vadd.f32 %v991, %v1030
  %v1047 = vadd.f32 %v992, %v1031
  %v1048 = vadd.f32 %v993, %v1032
  %v1049 = vadd.f32 %v994, %v1033
  %v1050 = vadd.f32 %v995, %v1034
  %v1051 = vadd.f32 %v996, %v1035
  %v1052 = vadd.f32 %v997, %v1036
  %v1053 = vadd.f32 %v998, %v1037
  %s1054 = scalar_lea.vmem %s4, 3
  %v1055 = vld [vmem:[%s1054] ss:$8 sm:$0xf]
  %v1057 = vlaneseq
  %v1058 = vshrl.u32 %v1057, 7
  %v1059 = vsub.s32 0, %v1058
  %v1060 = vrot.slane %v1055, %v1059
  %v1061 = vlaneseq
  %v1062 = vshrl.u32 %v1061, 7
  %v1063 = vsub.s32 1, %v1062
  %v1064 = vrot.slane %v1055, %v1063
  %v1065 = vlaneseq
  %v1066 = vshrl.u32 %v1065, 7
  %v1067 = vsub.s32 2, %v1066
  %v1068 = vrot.slane %v1055, %v1067
  %v1069 = vlaneseq
  %v1070 = vshrl.u32 %v1069, 7
  %v1071 = vsub.s32 3, %v1070
  %v1072 = vrot.slane %v1055, %v1071
  %v1077 = vmul.f32 %v765, %v1060
  %v1078 = vmul.f32 %v766, %v1064
  %v1079 = vmul.f32 %v767, %v1068
  %v1080 = vmul.f32 %v768, %v1072
  %v1081 = vmul.f32 %v769, %v1060
  %v1082 = vmul.f32 %v770, %v1064
  %v1083 = vmul.f32 %v771, %v1068
  %v1084 = vmul.f32 %v772, %v1072
  %v1085 = vmul.f32 %v773, %v1060
  %v1086 = vmul.f32 %v774, %v1064
  %v1087 = vmul.f32 %v775, %v1068
  %v1088 = vmul.f32 %v776, %v1072
  %v1089 = vmul.f32 %v777, %v1060
  %v1090 = vmul.f32 %v778, %v1064
  %v1091 = vmul.f32 %v779, %v1068
  %v1092 = vmul.f32 %v780, %v1072
  %v1093 = vmul.f32 %v781, %v1060
  %v1094 = vmul.f32 %v782, %v1064
  %v1095 = vmul.f32 %v783, %v1068
  %v1096 = vmul.f32 %v784, %v1072
  %v1097 = vmul.f32 %v785, %v1060
  %v1098 = vmul.f32 %v786, %v1064
  %v1099 = vmul.f32 %v787, %v1068
  %v1100 = vmul.f32 %v788, %v1072
  %vm1125 = vcmask 1046528
  %v1126 = vrot.slane %v1077, 1
  %v1127 = vrot.slane %v1081, 1
  %v1128 = vsel %vm1125, %v1126, %v1127
  %v1129 = vrot.slane %v1078, 1
  %v1130 = vrot.slane %v1082, 1
  %v1131 = vsel %vm1125, %v1129, %v1130
  %v1132 = vrot.slane %v1079, 1
  %v1133 = vrot.slane %v1083, 1
  %v1134 = vsel %vm1125, %v1132, %v1133
  %v1135 = vrot.slane %v1080, 1
  %v1136 = vrot.slane %v1084, 1
  %v1137 = vsel %vm1125, %v1135, %v1136
  %v1138 = vrot.slane %v1085, 1
  %v1139 = vsel %vm1125, %v1127, %v1138
  %v1140 = vrot.slane %v1086, 1
  %v1141 = vsel %vm1125, %v1130, %v1140
  %v1142 = vrot.slane %v1087, 1
  %v1143 = vsel %vm1125, %v1133, %v1142
  %v1144 = vrot.slane %v1088, 1
  %v1145 = vsel %vm1125, %v1136, %v1144
  %v1146 = vrot.slane %v1089, 1
  %v1147 = vrot.slane %v1093, 1
  %v1148 = vsel %vm1125, %v1146, %v1147
  %v1149 = vrot.slane %v1090, 1
  %v1150 = vrot.slane %v1094, 1
  %v1151 = vsel %vm1125, %v1149, %v1150
  %v1152 = vrot.slane %v1091, 1
  %v1153 = vrot.slane %v1095, 1
  %v1154 = vsel %vm1125, %v1152, %v1153
  %v1155 = vrot.slane %v1092, 1
  %v1156 = vrot.slane %v1096, 1
  %v1157 = vsel %vm1125, %v1155, %v1156
  %v1158 = vrot.slane %v1097, 1
  %v1159 = vsel %vm1125, %v1147, %v1158
  %v1160 = vrot.slane %v1098, 1
  %v1161 = vsel %vm1125, %v1150, %v1160
  %v1162 = vrot.slane %v1099, 1
  %v1163 = vsel %vm1125, %v1153, %v1162
  %v1164 = vrot.slane %v1100, 1
  %v1165 = vsel %vm1125, %v1156, %v1164
  %v1182 = vadd.f32 %v1038, %v1128
  %v1183 = vadd.f32 %v1039, %v1131
  %v1184 = vadd.f32 %v1040, %v1134
  %v1185 = vadd.f32 %v1041, %v1137
  %v1186 = vadd.f32 %v1042, %v1139
  %v1187 = vadd.f32 %v1043, %v1141
  %v1188 = vadd.f32 %v1044, %v1143
  %v1189 = vadd.f32 %v1045, %v1145
  %v1190 = vadd.f32 %v1046, %v1148
  %v1191 = vadd.f32 %v1047, %v1151
  %v1192 = vadd.f32 %v1048, %v1154
  %v1193 = vadd.f32 %v1049, %v1157
  %v1194 = vadd.f32 %v1050, %v1159
  %v1195 = vadd.f32 %v1051, %v1161
  %v1196 = vadd.f32 %v1052, %v1163
  %v1197 = vadd.f32 %v1053, %v1165
  %s1198 = scalar_lea.vmem %s4, 4
  %v1199 = vld [vmem:[%s1198] ss:$8 sm:$0xf]
  %v1201 = vlaneseq
  %v1202 = vshrl.u32 %v1201, 7
  %v1203 = vsub.s32 0, %v1202
  %v1204 = vrot.slane %v1199, %v1203
  %v1205 = vlaneseq
  %v1206 = vshrl.u32 %v1205, 7
  %v1207 = vsub.s32 1, %v1206
  %v1208 = vrot.slane %v1199, %v1207
  %v1209 = vlaneseq
  %v1210 = vshrl.u32 %v1209, 7
  %v1211 = vsub.s32 2, %v1210
  %v1212 = vrot.slane %v1199, %v1211
  %v1213 = vlaneseq
  %v1214 = vshrl.u32 %v1213, 7
  %v1215 = vsub.s32 3, %v1214
  %v1216 = vrot.slane %v1199, %v1215
  %v1221 = vmul.f32 %v660, %v1204
  %v1222 = vmul.f32 %v661, %v1208
  %v1223 = vmul.f32 %v662, %v1212
  %v1224 = vmul.f32 %v663, %v1216
  %v1225 = vmul.f32 %v664, %v1204
  %v1226 = vmul.f32 %v665, %v1208
  %v1227 = vmul.f32 %v666, %v1212
  %v1228 = vmul.f32 %v667, %v1216
  %v1229 = vmul.f32 %v668, %v1204
  %v1230 = vmul.f32 %v669, %v1208
  %v1231 = vmul.f32 %v670, %v1212
  %v1232 = vmul.f32 %v671, %v1216
  %v1233 = vmul.f32 %v672, %v1204
  %v1234 = vmul.f32 %v673, %v1208
  %v1235 = vmul.f32 %v674, %v1212
  %v1236 = vmul.f32 %v675, %v1216
  %v1237 = vmul.f32 %v676, %v1204
  %v1238 = vmul.f32 %v677, %v1208
  %v1239 = vmul.f32 %v678, %v1212
  %v1240 = vmul.f32 %v679, %v1216
  %v1241 = vmul.f32 %v680, %v1204
  %v1242 = vmul.f32 %v681, %v1208
  %v1243 = vmul.f32 %v682, %v1212
  %v1244 = vmul.f32 %v683, %v1216
  %v1269 = vrot.slane %v1221, 1
  %v1270 = vrot.slane %v1225, 1
  %v1271 = vsel %vm1125, %v1269, %v1270
  %v1272 = vrot.slane %v1222, 1
  %v1273 = vrot.slane %v1226, 1
  %v1274 = vsel %vm1125, %v1272, %v1273
  %v1275 = vrot.slane %v1223, 1
  %v1276 = vrot.slane %v1227, 1
  %v1277 = vsel %vm1125, %v1275, %v1276
  %v1278 = vrot.slane %v1224, 1
  %v1279 = vrot.slane %v1228, 1
  %v1280 = vsel %vm1125, %v1278, %v1279
  %v1281 = vrot.slane %v1229, 1
  %v1282 = vsel %vm1125, %v1270, %v1281
  %v1283 = vrot.slane %v1230, 1
  %v1284 = vsel %vm1125, %v1273, %v1283
  %v1285 = vrot.slane %v1231, 1
  %v1286 = vsel %vm1125, %v1276, %v1285
  %v1287 = vrot.slane %v1232, 1
  %v1288 = vsel %vm1125, %v1279, %v1287
  %v1289 = vrot.slane %v1233, 1
  %v1290 = vrot.slane %v1237, 1
  %v1291 = vsel %vm1125, %v1289, %v1290
  %v1292 = vrot.slane %v1234, 1
  %v1293 = vrot.slane %v1238, 1
  %v1294 = vsel %vm1125, %v1292, %v1293
  %v1295 = vrot.slane %v1235, 1
  %v1296 = vrot.slane %v1239, 1
  %v1297 = vsel %vm1125, %v1295, %v1296
  %v1298 = vrot.slane %v1236, 1
  %v1299 = vrot.slane %v1240, 1
  %v1300 = vsel %vm1125, %v1298, %v1299
  %v1301 = vrot.slane %v1241, 1
  %v1302 = vsel %vm1125, %v1290, %v1301
  %v1303 = vrot.slane %v1242, 1
  %v1304 = vsel %vm1125, %v1293, %v1303
  %v1305 = vrot.slane %v1243, 1
  %v1306 = vsel %vm1125, %v1296, %v1305
  %v1307 = vrot.slane %v1244, 1
  %v1308 = vsel %vm1125, %v1299, %v1307
  %v1325 = vadd.f32 %v1182, %v1271
  %v1326 = vadd.f32 %v1183, %v1274
  %v1327 = vadd.f32 %v1184, %v1277
  %v1328 = vadd.f32 %v1185, %v1280
  %v1329 = vadd.f32 %v1186, %v1282
  %v1330 = vadd.f32 %v1187, %v1284
  %v1331 = vadd.f32 %v1188, %v1286
  %v1332 = vadd.f32 %v1189, %v1288
  %v1333 = vadd.f32 %v1190, %v1291
  %v1334 = vadd.f32 %v1191, %v1294
  %v1335 = vadd.f32 %v1192, %v1297
  %v1336 = vadd.f32 %v1193, %v1300
  %v1337 = vadd.f32 %v1194, %v1302
  %v1338 = vadd.f32 %v1195, %v1304
  %v1339 = vadd.f32 %v1196, %v1306
  %v1340 = vadd.f32 %v1197, %v1308
  %s1341 = scalar_lea.vmem %s4, 5
  %v1342 = vld [vmem:[%s1341] ss:$8 sm:$0xf]
  %v1344 = vlaneseq
  %v1345 = vshrl.u32 %v1344, 7
  %v1346 = vsub.s32 0, %v1345
  %v1347 = vrot.slane %v1342, %v1346
  %v1348 = vlaneseq
  %v1349 = vshrl.u32 %v1348, 7
  %v1350 = vsub.s32 1, %v1349
  %v1351 = vrot.slane %v1342, %v1350
  %v1352 = vlaneseq
  %v1353 = vshrl.u32 %v1352, 7
  %v1354 = vsub.s32 2, %v1353
  %v1355 = vrot.slane %v1342, %v1354
  %v1356 = vlaneseq
  %v1357 = vshrl.u32 %v1356, 7
  %v1358 = vsub.s32 3, %v1357
  %v1359 = vrot.slane %v1342, %v1358
  %v1364 = vmul.f32 %v866, %v1347
  %v1365 = vmul.f32 %v867, %v1351
  %v1366 = vmul.f32 %v868, %v1355
  %v1367 = vmul.f32 %v869, %v1359
  %v1368 = vmul.f32 %v870, %v1347
  %v1369 = vmul.f32 %v871, %v1351
  %v1370 = vmul.f32 %v872, %v1355
  %v1371 = vmul.f32 %v873, %v1359
  %v1372 = vmul.f32 %v874, %v1347
  %v1373 = vmul.f32 %v875, %v1351
  %v1374 = vmul.f32 %v876, %v1355
  %v1375 = vmul.f32 %v877, %v1359
  %v1376 = vmul.f32 %v878, %v1347
  %v1377 = vmul.f32 %v879, %v1351
  %v1378 = vmul.f32 %v880, %v1355
  %v1379 = vmul.f32 %v881, %v1359
  %v1380 = vmul.f32 %v882, %v1347
  %v1381 = vmul.f32 %v883, %v1351
  %v1382 = vmul.f32 %v884, %v1355
  %v1383 = vmul.f32 %v885, %v1359
  %v1384 = vmul.f32 %v886, %v1347
  %v1385 = vmul.f32 %v887, %v1351
  %v1386 = vmul.f32 %v888, %v1355
  %v1387 = vmul.f32 %v889, %v1359
  %v1412 = vrot.slane %v1364, 1
  %v1413 = vrot.slane %v1368, 1
  %v1414 = vsel %vm1125, %v1412, %v1413
  %v1415 = vrot.slane %v1365, 1
  %v1416 = vrot.slane %v1369, 1
  %v1417 = vsel %vm1125, %v1415, %v1416
  %v1418 = vrot.slane %v1366, 1
  %v1419 = vrot.slane %v1370, 1
  %v1420 = vsel %vm1125, %v1418, %v1419
  %v1421 = vrot.slane %v1367, 1
  %v1422 = vrot.slane %v1371, 1
  %v1423 = vsel %vm1125, %v1421, %v1422
  %v1424 = vrot.slane %v1372, 1
  %v1425 = vsel %vm1125, %v1413, %v1424
  %v1426 = vrot.slane %v1373, 1
  %v1427 = vsel %vm1125, %v1416, %v1426
  %v1428 = vrot.slane %v1374, 1
  %v1429 = vsel %vm1125, %v1419, %v1428
  %v1430 = vrot.slane %v1375, 1
  %v1431 = vsel %vm1125, %v1422, %v1430
  %v1432 = vrot.slane %v1376, 1
  %v1433 = vrot.slane %v1380, 1
  %v1434 = vsel %vm1125, %v1432, %v1433
  %v1435 = vrot.slane %v1377, 1
  %v1436 = vrot.slane %v1381, 1
  %v1437 = vsel %vm1125, %v1435, %v1436
  %v1438 = vrot.slane %v1378, 1
  %v1439 = vrot.slane %v1382, 1
  %v1440 = vsel %vm1125, %v1438, %v1439
  %v1441 = vrot.slane %v1379, 1
  %v1442 = vrot.slane %v1383, 1
  %v1443 = vsel %vm1125, %v1441, %v1442
  %v1444 = vrot.slane %v1384, 1
  %v1445 = vsel %vm1125, %v1433, %v1444
  %v1446 = vrot.slane %v1385, 1
  %v1447 = vsel %vm1125, %v1436, %v1446
  %v1448 = vrot.slane %v1386, 1
  %v1449 = vsel %vm1125, %v1439, %v1448
  %v1450 = vrot.slane %v1387, 1
  %v1451 = vsel %vm1125, %v1442, %v1450
  %v1468 = vadd.f32 %v1325, %v1414
  %v1469 = vadd.f32 %v1326, %v1417
  %v1470 = vadd.f32 %v1327, %v1420
  %v1471 = vadd.f32 %v1328, %v1423
  %v1472 = vadd.f32 %v1329, %v1425
  %v1473 = vadd.f32 %v1330, %v1427
  %v1474 = vadd.f32 %v1331, %v1429
  %v1475 = vadd.f32 %v1332, %v1431
  %v1476 = vadd.f32 %v1333, %v1434
  %v1477 = vadd.f32 %v1334, %v1437
  %v1478 = vadd.f32 %v1335, %v1440
  %v1479 = vadd.f32 %v1336, %v1443
  %v1480 = vadd.f32 %v1337, %v1445
  %v1481 = vadd.f32 %v1338, %v1447
  %v1482 = vadd.f32 %v1339, %v1449
  %v1483 = vadd.f32 %v1340, %v1451
  %s1484 = scalar_lea.vmem %s4, 6
  %v1485 = vld [vmem:[%s1484] ss:$8 sm:$0xf]
  %v1487 = vlaneseq
  %v1488 = vshrl.u32 %v1487, 7
  %v1489 = vsub.s32 0, %v1488
  %v1490 = vrot.slane %v1485, %v1489
  %v1491 = vlaneseq
  %v1492 = vshrl.u32 %v1491, 7
  %v1493 = vsub.s32 1, %v1492
  %v1494 = vrot.slane %v1485, %v1493
  %v1495 = vlaneseq
  %v1496 = vshrl.u32 %v1495, 7
  %v1497 = vsub.s32 2, %v1496
  %v1498 = vrot.slane %v1485, %v1497
  %v1499 = vlaneseq
  %v1500 = vshrl.u32 %v1499, 7
  %v1501 = vsub.s32 3, %v1500
  %v1502 = vrot.slane %v1485, %v1501
  %v1507 = vmul.f32 %v765, %v1490
  %v1508 = vmul.f32 %v766, %v1494
  %v1509 = vmul.f32 %v767, %v1498
  %v1510 = vmul.f32 %v768, %v1502
  %v1511 = vmul.f32 %v769, %v1490
  %v1512 = vmul.f32 %v770, %v1494
  %v1513 = vmul.f32 %v771, %v1498
  %v1514 = vmul.f32 %v772, %v1502
  %v1515 = vmul.f32 %v773, %v1490
  %v1516 = vmul.f32 %v774, %v1494
  %v1517 = vmul.f32 %v775, %v1498
  %v1518 = vmul.f32 %v776, %v1502
  %v1519 = vmul.f32 %v777, %v1490
  %v1520 = vmul.f32 %v778, %v1494
  %v1521 = vmul.f32 %v779, %v1498
  %v1522 = vmul.f32 %v780, %v1502
  %v1523 = vmul.f32 %v781, %v1490
  %v1524 = vmul.f32 %v782, %v1494
  %v1525 = vmul.f32 %v783, %v1498
  %v1526 = vmul.f32 %v784, %v1502
  %v1527 = vmul.f32 %v785, %v1490
  %v1528 = vmul.f32 %v786, %v1494
  %v1529 = vmul.f32 %v787, %v1498
  %v1530 = vmul.f32 %v788, %v1502
  %vm1555 = vcmask 1045504
  %v1556 = vrot.slane %v1507, 2
  %v1557 = vrot.slane %v1511, 2
  %v1558 = vsel %vm1555, %v1556, %v1557
  %v1559 = vrot.slane %v1508, 2
  %v1560 = vrot.slane %v1512, 2
  %v1561 = vsel %vm1555, %v1559, %v1560
  %v1562 = vrot.slane %v1509, 2
  %v1563 = vrot.slane %v1513, 2
  %v1564 = vsel %vm1555, %v1562, %v1563
  %v1565 = vrot.slane %v1510, 2
  %v1566 = vrot.slane %v1514, 2
  %v1567 = vsel %vm1555, %v1565, %v1566
  %v1568 = vrot.slane %v1515, 2
  %v1569 = vsel %vm1555, %v1557, %v1568
  %v1570 = vrot.slane %v1516, 2
  %v1571 = vsel %vm1555, %v1560, %v1570
  %v1572 = vrot.slane %v1517, 2
  %v1573 = vsel %vm1555, %v1563, %v1572
  %v1574 = vrot.slane %v1518, 2
  %v1575 = vsel %vm1555, %v1566, %v1574
  %v1576 = vrot.slane %v1519, 2
  %v1577 = vrot.slane %v1523, 2
  %v1578 = vsel %vm1555, %v1576, %v1577
  %v1579 = vrot.slane %v1520, 2
  %v1580 = vrot.slane %v1524, 2
  %v1581 = vsel %vm1555, %v1579, %v1580
  %v1582 = vrot.slane %v1521, 2
  %v1583 = vrot.slane %v1525, 2
  %v1584 = vsel %vm1555, %v1582, %v1583
  %v1585 = vrot.slane %v1522, 2
  %v1586 = vrot.slane %v1526, 2
  %v1587 = vsel %vm1555, %v1585, %v1586
  %v1588 = vrot.slane %v1527, 2
  %v1589 = vsel %vm1555, %v1577, %v1588
  %v1590 = vrot.slane %v1528, 2
  %v1591 = vsel %vm1555, %v1580, %v1590
  %v1592 = vrot.slane %v1529, 2
  %v1593 = vsel %vm1555, %v1583, %v1592
  %v1594 = vrot.slane %v1530, 2
  %v1595 = vsel %vm1555, %v1586, %v1594
  %v1612 = vadd.f32 %v1468, %v1558
  %v1613 = vadd.f32 %v1469, %v1561
  %v1614 = vadd.f32 %v1470, %v1564
  %v1615 = vadd.f32 %v1471, %v1567
  %v1616 = vadd.f32 %v1472, %v1569
  %v1617 = vadd.f32 %v1473, %v1571
  %v1618 = vadd.f32 %v1474, %v1573
  %v1619 = vadd.f32 %v1475, %v1575
  %v1620 = vadd.f32 %v1476, %v1578
  %v1621 = vadd.f32 %v1477, %v1581
  %v1622 = vadd.f32 %v1478, %v1584
  %v1623 = vadd.f32 %v1479, %v1587
  %v1624 = vadd.f32 %v1480, %v1589
  %v1625 = vadd.f32 %v1481, %v1591
  %v1626 = vadd.f32 %v1482, %v1593
  %v1627 = vadd.f32 %v1483, %v1595
  %s1628 = scalar_lea.vmem %s4, 7
  %v1629 = vld [vmem:[%s1628] ss:$8 sm:$0xf]
  %v1631 = vlaneseq
  %v1632 = vshrl.u32 %v1631, 7
  %v1633 = vsub.s32 0, %v1632
  %v1634 = vrot.slane %v1629, %v1633
  %v1635 = vlaneseq
  %v1636 = vshrl.u32 %v1635, 7
  %v1637 = vsub.s32 1, %v1636
  %v1638 = vrot.slane %v1629, %v1637
  %v1639 = vlaneseq
  %v1640 = vshrl.u32 %v1639, 7
  %v1641 = vsub.s32 2, %v1640
  %v1642 = vrot.slane %v1629, %v1641
  %v1643 = vlaneseq
  %v1644 = vshrl.u32 %v1643, 7
  %v1645 = vsub.s32 3, %v1644
  %v1646 = vrot.slane %v1629, %v1645
  %v1651 = vmul.f32 %v660, %v1634
  %v1652 = vmul.f32 %v661, %v1638
  %v1653 = vmul.f32 %v662, %v1642
  %v1654 = vmul.f32 %v663, %v1646
  %v1655 = vmul.f32 %v664, %v1634
  %v1656 = vmul.f32 %v665, %v1638
  %v1657 = vmul.f32 %v666, %v1642
  %v1658 = vmul.f32 %v667, %v1646
  %v1659 = vmul.f32 %v668, %v1634
  %v1660 = vmul.f32 %v669, %v1638
  %v1661 = vmul.f32 %v670, %v1642
  %v1662 = vmul.f32 %v671, %v1646
  %v1663 = vmul.f32 %v672, %v1634
  %v1664 = vmul.f32 %v673, %v1638
  %v1665 = vmul.f32 %v674, %v1642
  %v1666 = vmul.f32 %v675, %v1646
  %v1667 = vmul.f32 %v676, %v1634
  %v1668 = vmul.f32 %v677, %v1638
  %v1669 = vmul.f32 %v678, %v1642
  %v1670 = vmul.f32 %v679, %v1646
  %v1671 = vmul.f32 %v680, %v1634
  %v1672 = vmul.f32 %v681, %v1638
  %v1673 = vmul.f32 %v682, %v1642
  %v1674 = vmul.f32 %v683, %v1646
  %v1699 = vrot.slane %v1651, 2
  %v1700 = vrot.slane %v1655, 2
  %v1701 = vsel %vm1555, %v1699, %v1700
  %v1702 = vrot.slane %v1652, 2
  %v1703 = vrot.slane %v1656, 2
  %v1704 = vsel %vm1555, %v1702, %v1703
  %v1705 = vrot.slane %v1653, 2
  %v1706 = vrot.slane %v1657, 2
  %v1707 = vsel %vm1555, %v1705, %v1706
  %v1708 = vrot.slane %v1654, 2
  %v1709 = vrot.slane %v1658, 2
  %v1710 = vsel %vm1555, %v1708, %v1709
  %v1711 = vrot.slane %v1659, 2
  %v1712 = vsel %vm1555, %v1700, %v1711
  %v1713 = vrot.slane %v1660, 2
  %v1714 = vsel %vm1555, %v1703, %v1713
  %v1715 = vrot.slane %v1661, 2
  %v1716 = vsel %vm1555, %v1706, %v1715
  %v1717 = vrot.slane %v1662, 2
  %v1718 = vsel %vm1555, %v1709, %v1717
  %v1719 = vrot.slane %v1663, 2
  %v1720 = vrot.slane %v1667, 2
  %v1721 = vsel %vm1555, %v1719, %v1720
  %v1722 = vrot.slane %v1664, 2
  %v1723 = vrot.slane %v1668, 2
  %v1724 = vsel %vm1555, %v1722, %v1723
  %v1725 = vrot.slane %v1665, 2
  %v1726 = vrot.slane %v1669, 2
  %v1727 = vsel %vm1555, %v1725, %v1726
  %v1728 = vrot.slane %v1666, 2
  %v1729 = vrot.slane %v1670, 2
  %v1730 = vsel %vm1555, %v1728, %v1729
  %v1731 = vrot.slane %v1671, 2
  %v1732 = vsel %vm1555, %v1720, %v1731
  %v1733 = vrot.slane %v1672, 2
  %v1734 = vsel %vm1555, %v1723, %v1733
  %v1735 = vrot.slane %v1673, 2
  %v1736 = vsel %vm1555, %v1726, %v1735
  %v1737 = vrot.slane %v1674, 2
  %v1738 = vsel %vm1555, %v1729, %v1737
  %v1755 = vadd.f32 %v1612, %v1701
  %v1756 = vadd.f32 %v1613, %v1704
  %v1757 = vadd.f32 %v1614, %v1707
  %v1758 = vadd.f32 %v1615, %v1710
  %v1759 = vadd.f32 %v1616, %v1712
  %v1760 = vadd.f32 %v1617, %v1714
  %v1761 = vadd.f32 %v1618, %v1716
  %v1762 = vadd.f32 %v1619, %v1718
  %v1763 = vadd.f32 %v1620, %v1721
  %v1764 = vadd.f32 %v1621, %v1724
  %v1765 = vadd.f32 %v1622, %v1727
  %v1766 = vadd.f32 %v1623, %v1730
  %v1767 = vadd.f32 %v1624, %v1732
  %v1768 = vadd.f32 %v1625, %v1734
  %v1769 = vadd.f32 %v1626, %v1736
  %v1770 = vadd.f32 %v1627, %v1738
  %s1771 = scalar_lea.vmem %s4, 32
  %v1772 = vld [vmem:[%s1771] ss:$8 sm:$0xf]
  %v1774 = vlaneseq
  %v1775 = vshrl.u32 %v1774, 7
  %v1776 = vsub.s32 0, %v1775
  %v1777 = vrot.slane %v1772, %v1776
  %v1778 = vlaneseq
  %v1779 = vshrl.u32 %v1778, 7
  %v1780 = vsub.s32 1, %v1779
  %v1781 = vrot.slane %v1772, %v1780
  %v1782 = vlaneseq
  %v1783 = vshrl.u32 %v1782, 7
  %v1784 = vsub.s32 2, %v1783
  %v1785 = vrot.slane %v1772, %v1784
  %v1786 = vlaneseq
  %v1787 = vshrl.u32 %v1786, 7
  %v1788 = vsub.s32 3, %v1787
  %v1789 = vrot.slane %v1772, %v1788
  %v1794 = vmul.f32 %v866, %v1777
  %v1795 = vmul.f32 %v867, %v1781
  %v1796 = vmul.f32 %v868, %v1785
  %v1797 = vmul.f32 %v869, %v1789
  %v1798 = vmul.f32 %v870, %v1777
  %v1799 = vmul.f32 %v871, %v1781
  %v1800 = vmul.f32 %v872, %v1785
  %v1801 = vmul.f32 %v873, %v1789
  %v1802 = vmul.f32 %v874, %v1777
  %v1803 = vmul.f32 %v875, %v1781
  %v1804 = vmul.f32 %v876, %v1785
  %v1805 = vmul.f32 %v877, %v1789
  %v1806 = vmul.f32 %v878, %v1777
  %v1807 = vmul.f32 %v879, %v1781
  %v1808 = vmul.f32 %v880, %v1785
  %v1809 = vmul.f32 %v881, %v1789
  %v1810 = vmul.f32 %v882, %v1777
  %v1811 = vmul.f32 %v883, %v1781
  %v1812 = vmul.f32 %v884, %v1785
  %v1813 = vmul.f32 %v885, %v1789
  %v1814 = vmul.f32 %v886, %v1777
  %v1815 = vmul.f32 %v887, %v1781
  %v1816 = vmul.f32 %v888, %v1785
  %v1817 = vmul.f32 %v889, %v1789
  %v1842 = vrot.slane %v1794, 2
  %v1843 = vrot.slane %v1798, 2
  %v1844 = vsel %vm1555, %v1842, %v1843
  %v1845 = vrot.slane %v1795, 2
  %v1846 = vrot.slane %v1799, 2
  %v1847 = vsel %vm1555, %v1845, %v1846
  %v1848 = vrot.slane %v1796, 2
  %v1849 = vrot.slane %v1800, 2
  %v1850 = vsel %vm1555, %v1848, %v1849
  %v1851 = vrot.slane %v1797, 2
  %v1852 = vrot.slane %v1801, 2
  %v1853 = vsel %vm1555, %v1851, %v1852
  %v1854 = vrot.slane %v1802, 2
  %v1855 = vsel %vm1555, %v1843, %v1854
  %v1856 = vrot.slane %v1803, 2
  %v1857 = vsel %vm1555, %v1846, %v1856
  %v1858 = vrot.slane %v1804, 2
  %v1859 = vsel %vm1555, %v1849, %v1858
  %v1860 = vrot.slane %v1805, 2
  %v1861 = vsel %vm1555, %v1852, %v1860
  %v1862 = vrot.slane %v1806, 2
  %v1863 = vrot.slane %v1810, 2
  %v1864 = vsel %vm1555, %v1862, %v1863
  %v1865 = vrot.slane %v1807, 2
  %v1866 = vrot.slane %v1811, 2
  %v1867 = vsel %vm1555, %v1865, %v1866
  %v1868 = vrot.slane %v1808, 2
  %v1869 = vrot.slane %v1812, 2
  %v1870 = vsel %vm1555, %v1868, %v1869
  %v1871 = vrot.slane %v1809, 2
  %v1872 = vrot.slane %v1813, 2
  %v1873 = vsel %vm1555, %v1871, %v1872
  %v1874 = vrot.slane %v1814, 2
  %v1875 = vsel %vm1555, %v1863, %v1874
  %v1876 = vrot.slane %v1815, 2
  %v1877 = vsel %vm1555, %v1866, %v1876
  %v1878 = vrot.slane %v1816, 2
  %v1879 = vsel %vm1555, %v1869, %v1878
  %v1880 = vrot.slane %v1817, 2
  %v1881 = vsel %vm1555, %v1872, %v1880
  %v1898 = vadd.f32 %v1755, %v1844
  %v1899 = vadd.f32 %v1756, %v1847
  %v1900 = vadd.f32 %v1757, %v1850
  %v1901 = vadd.f32 %v1758, %v1853
  %v1902 = vadd.f32 %v1759, %v1855
  %v1903 = vadd.f32 %v1760, %v1857
  %v1904 = vadd.f32 %v1761, %v1859
  %v1905 = vadd.f32 %v1762, %v1861
  %v1906 = vadd.f32 %v1763, %v1864
  %v1907 = vadd.f32 %v1764, %v1867
  %v1908 = vadd.f32 %v1765, %v1870
  %v1909 = vadd.f32 %v1766, %v1873
  %v1910 = vadd.f32 %v1767, %v1875
  %v1911 = vadd.f32 %v1768, %v1877
  %v1912 = vadd.f32 %v1769, %v1879
  %v1913 = vadd.f32 %v1770, %v1881
  %v1914 = vld [vmem:[%s5] sm:$0xf]
  %v1916 = vlaneseq
  %v1917 = vshrl.u32 %v1916, 7
  %v1918 = vsub.s32 0, %v1917
  %v1919 = vrot.slane %v1914, %v1918
  %v1920 = vlaneseq
  %v1921 = vshrl.u32 %v1920, 7
  %v1922 = vsub.s32 1, %v1921
  %v1923 = vrot.slane %v1914, %v1922
  %v1924 = vlaneseq
  %v1925 = vshrl.u32 %v1924, 7
  %v1926 = vsub.s32 2, %v1925
  %v1927 = vrot.slane %v1914, %v1926
  %v1928 = vlaneseq
  %v1929 = vshrl.u32 %v1928, 7
  %v1930 = vsub.s32 3, %v1929
  %v1931 = vrot.slane %v1914, %v1930
  %v1936 = vmul.f32 %v1898, %v1919
  %v1937 = vmul.f32 %v1899, %v1923
  %v1938 = vmul.f32 %v1900, %v1927
  %v1939 = vmul.f32 %v1901, %v1931
  %v1940 = vmul.f32 %v1902, %v1919
  %v1941 = vmul.f32 %v1903, %v1923
  %v1942 = vmul.f32 %v1904, %v1927
  %v1943 = vmul.f32 %v1905, %v1931
  %v1944 = vmul.f32 %v1906, %v1919
  %v1945 = vmul.f32 %v1907, %v1923
  %v1946 = vmul.f32 %v1908, %v1927
  %v1947 = vmul.f32 %v1909, %v1931
  %v1948 = vmul.f32 %v1910, %v1919
  %v1949 = vmul.f32 %v1911, %v1923
  %v1950 = vmul.f32 %v1912, %v1927
  %v1951 = vmul.f32 %v1913, %v1931
  %v1952 = vld [vmem:[%s6] sm:$0xf]
  %v1954 = vlaneseq
  %v1955 = vshrl.u32 %v1954, 7
  %v1956 = vsub.s32 0, %v1955
  %v1957 = vrot.slane %v1952, %v1956
  %v1958 = vlaneseq
  %v1959 = vshrl.u32 %v1958, 7
  %v1960 = vsub.s32 1, %v1959
  %v1961 = vrot.slane %v1952, %v1960
  %v1962 = vlaneseq
  %v1963 = vshrl.u32 %v1962, 7
  %v1964 = vsub.s32 2, %v1963
  %v1965 = vrot.slane %v1952, %v1964
  %v1966 = vlaneseq
  %v1967 = vshrl.u32 %v1966, 7
  %v1968 = vsub.s32 3, %v1967
  %v1969 = vrot.slane %v1952, %v1968
  %v1974 = vadd.f32 %v1936, %v1957
  %v1975 = vadd.f32 %v1937, %v1961
  %v1976 = vadd.f32 %v1938, %v1965
  %v1977 = vadd.f32 %v1939, %v1969
  %v1978 = vadd.f32 %v1940, %v1957
  %v1979 = vadd.f32 %v1941, %v1961
  %v1980 = vadd.f32 %v1942, %v1965
  %v1981 = vadd.f32 %v1943, %v1969
  %v1982 = vadd.f32 %v1944, %v1957
  %v1983 = vadd.f32 %v1945, %v1961
  %v1984 = vadd.f32 %v1946, %v1965
  %v1985 = vadd.f32 %v1947, %v1969
  %v1986 = vadd.f32 %v1948, %v1957
  %v1987 = vadd.f32 %v1949, %v1961
  %v1988 = vadd.f32 %v1950, %v1965
  %v1989 = vadd.f32 %v1951, %v1969
  %v1990 = vxor.u32 %v1974, 2147483648
  %v1991 = vxor.u32 %v1975, 2147483648
  %v1992 = vxor.u32 %v1976, 2147483648
  %v1993 = vxor.u32 %v1977, 2147483648
  %v1994 = vxor.u32 %v1978, 2147483648
  %v1995 = vxor.u32 %v1979, 2147483648
  %v1996 = vxor.u32 %v1980, 2147483648
  %v1997 = vxor.u32 %v1981, 2147483648
  %v1998 = vxor.u32 %v1982, 2147483648
  %v1999 = vxor.u32 %v1983, 2147483648
  %v2000 = vxor.u32 %v1984, 2147483648
  %v2001 = vxor.u32 %v1985, 2147483648
  %v2002 = vxor.u32 %v1986, 2147483648
  %v2003 = vxor.u32 %v1987, 2147483648
  %v2004 = vxor.u32 %v1988, 2147483648
  %v2005 = vxor.u32 %v1989, 2147483648
  %v2006 = vmul.f32 %v1990, 1.442695
  %v2007 = vpow.pop %v2006
  %v2008 = vmul.f32 %v1991, 1.442695
  %v2009 = vpow.pop %v2008
  %v2010 = vmul.f32 %v1992, 1.442695
  %v2011 = vpow.pop %v2010
  %v2012 = vmul.f32 %v1993, 1.442695
  %v2013 = vpow.pop %v2012
  %v2014 = vmul.f32 %v1994, 1.442695
  %v2015 = vpow.pop %v2014
  %v2016 = vmul.f32 %v1995, 1.442695
  %v2017 = vpow.pop %v2016
  %v2018 = vmul.f32 %v1996, 1.442695
  %v2019 = vpow.pop %v2018
  %v2020 = vmul.f32 %v1997, 1.442695
  %v2021 = vpow.pop %v2020
  %v2022 = vmul.f32 %v1998, 1.442695
  %v2023 = vpow.pop %v2022
  %v2024 = vmul.f32 %v1999, 1.442695
  %v2025 = vpow.pop %v2024
  %v2026 = vmul.f32 %v2000, 1.442695
  %v2027 = vpow.pop %v2026
  %v2028 = vmul.f32 %v2001, 1.442695
  %v2029 = vpow.pop %v2028
  %v2030 = vmul.f32 %v2002, 1.442695
  %v2031 = vpow.pop %v2030
  %v2032 = vmul.f32 %v2003, 1.442695
  %v2033 = vpow.pop %v2032
  %v2034 = vmul.f32 %v2004, 1.442695
  %v2035 = vpow.pop %v2034
  %v2036 = vmul.f32 %v2005, 1.442695
  %v2037 = vpow.pop %v2036
  %v2038 = vadd.f32 %v2007, 1.0
  %v2039 = vadd.f32 %v2009, 1.0
  %v2040 = vadd.f32 %v2011, 1.0
  %v2041 = vadd.f32 %v2013, 1.0
  %v2042 = vadd.f32 %v2015, 1.0
  %v2043 = vadd.f32 %v2017, 1.0
  %v2044 = vadd.f32 %v2019, 1.0
  %v2045 = vadd.f32 %v2021, 1.0
  %v2046 = vadd.f32 %v2023, 1.0
  %v2047 = vadd.f32 %v2025, 1.0
  %v2048 = vadd.f32 %v2027, 1.0
  %v2049 = vadd.f32 %v2029, 1.0
  %v2050 = vadd.f32 %v2031, 1.0
  %v2051 = vadd.f32 %v2033, 1.0
  %v2052 = vadd.f32 %v2035, 1.0
  %v2053 = vadd.f32 %v2037, 1.0
  %v2054 = vrcp.pop %v2038
  %v2055 = vmul.f32 1.0, %v2054
  %v2056 = vrcp.pop %v2039
  %v2057 = vmul.f32 1.0, %v2056
  %v2058 = vrcp.pop %v2040
  %v2059 = vmul.f32 1.0, %v2058
  %v2060 = vrcp.pop %v2041
  %v2061 = vmul.f32 1.0, %v2060
  %v2062 = vrcp.pop %v2042
  %v2063 = vmul.f32 1.0, %v2062
  %v2064 = vrcp.pop %v2043
  %v2065 = vmul.f32 1.0, %v2064
  %v2066 = vrcp.pop %v2044
  %v2067 = vmul.f32 1.0, %v2066
  %v2068 = vrcp.pop %v2045
  %v2069 = vmul.f32 1.0, %v2068
  %v2070 = vrcp.pop %v2046
  %v2071 = vmul.f32 1.0, %v2070
  %v2072 = vrcp.pop %v2047
  %v2073 = vmul.f32 1.0, %v2072
  %v2074 = vrcp.pop %v2048
  %v2075 = vmul.f32 1.0, %v2074
  %v2076 = vrcp.pop %v2049
  %v2077 = vmul.f32 1.0, %v2076
  %v2078 = vrcp.pop %v2050
  %v2079 = vmul.f32 1.0, %v2078
  %v2080 = vrcp.pop %v2051
  %v2081 = vmul.f32 1.0, %v2080
  %v2082 = vrcp.pop %v2052
  %v2083 = vmul.f32 1.0, %v2082
  %v2084 = vrcp.pop %v2053
  %v2085 = vmul.f32 1.0, %v2084
  %v2086 = vmul.f32 %v1974, %v2055
  %v2087 = vmul.f32 %v1975, %v2057
  %v2088 = vmul.f32 %v1976, %v2059
  %v2089 = vmul.f32 %v1977, %v2061
  %v2090 = vmul.f32 %v1978, %v2063
  %v2091 = vmul.f32 %v1979, %v2065
  %v2092 = vmul.f32 %v1980, %v2067
  %v2093 = vmul.f32 %v1981, %v2069
  %v2094 = vmul.f32 %v1982, %v2071
  %v2095 = vmul.f32 %v1983, %v2073
  %v2096 = vmul.f32 %v1984, %v2075
  %v2097 = vmul.f32 %v1985, %v2077
  %v2098 = vmul.f32 %v1986, %v2079
  %v2099 = vmul.f32 %v1987, %v2081
  %v2100 = vmul.f32 %v1988, %v2083
  %v2101 = vmul.f32 %v1989, %v2085
  %v2102 = vadd.f32 %v2086, %v2090
  %v2103 = vrot.slane %v2102, 4
  %v2104 = vadd.f32 %v2102, %v2103
  %v2105 = vrot.slane %v2104, 2
  %v2106 = vadd.f32 %v2104, %v2105
  %v2107 = vrot.slane %v2106, 1
  %v2108 = vadd.f32 %v2106, %v2107
  %v2109 = vadd.f32 %v2087, %v2091
  %v2110 = vrot.slane %v2109, 4
  %v2111 = vadd.f32 %v2109, %v2110
  %v2112 = vrot.slane %v2111, 2
  %v2113 = vadd.f32 %v2111, %v2112
  %v2114 = vrot.slane %v2113, 1
  %v2115 = vadd.f32 %v2113, %v2114
  %v2116 = vadd.f32 %v2088, %v2092
  %v2117 = vrot.slane %v2116, 4
  %v2118 = vadd.f32 %v2116, %v2117
  %v2119 = vrot.slane %v2118, 2
  %v2120 = vadd.f32 %v2118, %v2119
  %v2121 = vrot.slane %v2120, 1
  %v2122 = vadd.f32 %v2120, %v2121
  %v2123 = vadd.f32 %v2089, %v2093
  %v2124 = vrot.slane %v2123, 4
  %v2125 = vadd.f32 %v2123, %v2124
  %v2126 = vrot.slane %v2125, 2
  %v2127 = vadd.f32 %v2125, %v2126
  %v2128 = vrot.slane %v2127, 1
  %v2129 = vadd.f32 %v2127, %v2128
  %v2130 = vadd.f32 %v2094, %v2098
  %v2131 = vrot.slane %v2130, 4
  %v2132 = vadd.f32 %v2130, %v2131
  %v2133 = vrot.slane %v2132, 2
  %v2134 = vadd.f32 %v2132, %v2133
  %v2135 = vrot.slane %v2134, 1
  %v2136 = vadd.f32 %v2134, %v2135
  %v2137 = vadd.f32 %v2095, %v2099
  %v2138 = vrot.slane %v2137, 4
  %v2139 = vadd.f32 %v2137, %v2138
  %v2140 = vrot.slane %v2139, 2
  %v2141 = vadd.f32 %v2139, %v2140
  %v2142 = vrot.slane %v2141, 1
  %v2143 = vadd.f32 %v2141, %v2142
  %v2144 = vadd.f32 %v2096, %v2100
  %v2145 = vrot.slane %v2144, 4
  %v2146 = vadd.f32 %v2144, %v2145
  %v2147 = vrot.slane %v2146, 2
  %v2148 = vadd.f32 %v2146, %v2147
  %v2149 = vrot.slane %v2148, 1
  %v2150 = vadd.f32 %v2148, %v2149
  %v2151 = vadd.f32 %v2097, %v2101
  %v2152 = vrot.slane %v2151, 4
  %v2153 = vadd.f32 %v2151, %v2152
  %v2154 = vrot.slane %v2153, 2
  %v2155 = vadd.f32 %v2153, %v2154
  %v2156 = vrot.slane %v2155, 1
  %v2157 = vadd.f32 %v2155, %v2156
  %v2158 = vrcp.pop 16.0
  %v2159 = vmul.f32 %v2108, %v2158
  %v2160 = vmul.f32 %v2115, %v2158
  %v2161 = vmul.f32 %v2122, %v2158
  %v2162 = vmul.f32 %v2129, %v2158
  %v2163 = vmul.f32 %v2136, %v2158
  %v2164 = vmul.f32 %v2143, %v2158
  %v2165 = vmul.f32 %v2150, %v2158
  %v2166 = vmul.f32 %v2157, %v2158
  %v2167 = vld [vmem:[%s7] sm:$0xff]
  %v2168 = vld [vmem:[%s7 + $0x8] sm:$0xff]
  %v2169 = vld [vmem:[%s7 + $0x10] sm:$0xff]
  %v2170 = vld [vmem:[%s7 + $0x18] sm:$0xff]
  %v2171 = vld [vmem:[%s7 + $0x20] sm:$0xff]
  %v2172 = vld [vmem:[%s7 + $0x28] sm:$0xff]
  %v2173 = vld [vmem:[%s7 + $0x30] sm:$0xff]
  %v2174 = vld [vmem:[%s7 + $0x38] sm:$0xff]
  %v2175 = vld [vmem:[%s7 + $0x40] sm:$0xff]
  %v2176 = vld [vmem:[%s7 + $0x48] sm:$0xff]
  %v2177 = vld [vmem:[%s7 + $0x50] sm:$0xff]
  %v2178 = vld [vmem:[%s7 + $0x58] sm:$0xff]
  %v2179 = vld [vmem:[%s7 + $0x60] sm:$0xff]
  %v2180 = vld [vmem:[%s7 + $0x68] sm:$0xff]
  %v2181 = vld [vmem:[%s7 + $0x70] sm:$0xff]
  %v2182 = vld [vmem:[%s7 + $0x78] sm:$0xff]
  %v2183 = vld [vmem:[%s7 + $0x80] sm:$0xff]
  %v2184 = vld [vmem:[%s7 + $0x88] sm:$0xff]
  %v2185 = vld [vmem:[%s7 + $0x90] sm:$0xff]
  %v2186 = vld [vmem:[%s7 + $0x98] sm:$0xff]
  %v2187 = vld [vmem:[%s7 + $0xa0] sm:$0xff]
  %v2188 = vld [vmem:[%s7 + $0xa8] sm:$0xff]
  %v2189 = vld [vmem:[%s7 + $0xb0] sm:$0xff]
  %v2190 = vld [vmem:[%s7 + $0xb8] sm:$0xff]
  %v2191 = vld [vmem:[%s7 + $0xc0] sm:$0xff]
  %v2192 = vld [vmem:[%s7 + $0xc8] sm:$0xff]
  %v2193 = vld [vmem:[%s7 + $0xd0] sm:$0xff]
  %v2194 = vld [vmem:[%s7 + $0xd8] sm:$0xff]
  %v2195 = vld [vmem:[%s7 + $0xe0] sm:$0xff]
  %v2196 = vld [vmem:[%s7 + $0xe8] sm:$0xff]
  %v2197 = vld [vmem:[%s7 + $0xf0] sm:$0xff]
  %v2198 = vld [vmem:[%s7 + $0xf8] sm:$0xff]
  %v2199 = vld [vmem:[%s7 + $0x100] sm:$0xff]
  %v2200 = vld [vmem:[%s7 + $0x108] sm:$0xff]
  %v2201 = vld [vmem:[%s7 + $0x110] sm:$0xff]
  %v2202 = vld [vmem:[%s7 + $0x118] sm:$0xff]
  %v2203 = vld [vmem:[%s7 + $0x120] sm:$0xff]
  %v2204 = vld [vmem:[%s7 + $0x128] sm:$0xff]
  %v2205 = vld [vmem:[%s7 + $0x130] sm:$0xff]
  %v2206 = vld [vmem:[%s7 + $0x138] sm:$0xff]
  %v2207 = vld [vmem:[%s7 + $0x140] sm:$0xff]
  %v2208 = vld [vmem:[%s7 + $0x148] sm:$0xff]
  %v2209 = vld [vmem:[%s7 + $0x150] sm:$0xff]
  %v2210 = vld [vmem:[%s7 + $0x158] sm:$0xff]
  %v2211 = vld [vmem:[%s7 + $0x160] sm:$0xff]
  %v2212 = vld [vmem:[%s7 + $0x168] sm:$0xff]
  %v2213 = vld [vmem:[%s7 + $0x170] sm:$0xff]
  %v2214 = vld [vmem:[%s7 + $0x178] sm:$0xff]
  %v2215 = vld [vmem:[%s7 + $0x180] sm:$0xff]
  %v2216 = vld [vmem:[%s7 + $0x188] sm:$0xff]
  %v2217 = vld [vmem:[%s7 + $0x190] sm:$0xff]
  %v2218 = vld [vmem:[%s7 + $0x198] sm:$0xff]
  %v2219 = vld [vmem:[%s7 + $0x1a0] sm:$0xff]
  %v2220 = vld [vmem:[%s7 + $0x1a8] sm:$0xff]
  %v2221 = vld [vmem:[%s7 + $0x1b0] sm:$0xff]
  %v2222 = vld [vmem:[%s7 + $0x1b8] sm:$0xff]
  %v2223 = vld [vmem:[%s7 + $0x1c0] sm:$0xff]
  %v2224 = vld [vmem:[%s7 + $0x1c8] sm:$0xff]
  %v2225 = vld [vmem:[%s7 + $0x1d0] sm:$0xff]
  %v2226 = vld [vmem:[%s7 + $0x1d8] sm:$0xff]
  %v2227 = vld [vmem:[%s7 + $0x1e0] sm:$0xff]
  %v2228 = vld [vmem:[%s7 + $0x1e8] sm:$0xff]
  %v2229 = vld [vmem:[%s7 + $0x1f0] sm:$0xff]
  %v2230 = vld [vmem:[%s7 + $0x1f8] sm:$0xff]
  %vm2239 = vcmask 1041409
  %v2240 = vsel %vm2239, %v2163, %v2159
  %v2241 = vsel %vm2239, %v2164, %v2160
  %v2242 = vsel %vm2239, %v2165, %v2161
  %v2243 = vsel %vm2239, %v2166, %v2162
  %2248 = vmatprep.subr.mxu0 0.0
  %2249 = vmatpush1.msra.mxu0 %v2167
  %2250 = vmatprep.subr.mxu0 0.0
  %2251 = vmatpush1.msra.mxu0 %v2168
  %2252 = vmatprep.subr.mxu0 0.0
  %2253 = vmatpush1.msra.mxu0 %v2169
  %2254 = vmatprep.subr.mxu0 0.0
  %2255 = vmatpush1.msra.mxu0 %v2170
  %2256 = vmatprep.subr.mxu0 0.0
  %2257 = vmatpush1.msra.mxu0 %v2171
  %2258 = vmatprep.subr.mxu0 0.0
  %2259 = vmatpush1.msra.mxu0 %v2172
  %2260 = vmatprep.subr.mxu0 0.0
  %2261 = vmatpush1.msra.mxu0 %v2173
  %2262 = vmatprep.subr.mxu0 0.0
  %2263 = vmatpush1.msra.mxu0 %v2174
  %2264 = vmatprep.subr.mxu0 0.0
  %2265 = vmatpush1.msra.mxu0 %v2175
  %2266 = vmatprep.subr.mxu0 0.0
  %2267 = vmatpush1.msra.mxu0 %v2176
  %2268 = vmatprep.subr.mxu0 0.0
  %2269 = vmatpush1.msra.mxu0 %v2177
  %2270 = vmatprep.subr.mxu0 0.0
  %2271 = vmatpush1.msra.mxu0 %v2178
  %2272 = vmatprep.subr.mxu0 0.0
  %2273 = vmatpush1.msra.mxu0 %v2179
  %2274 = vmatprep.subr.mxu0 0.0
  %2275 = vmatpush1.msra.mxu0 %v2180
  %2276 = vmatprep.subr.mxu0 0.0
  %2277 = vmatpush1.msra.mxu0 %v2181
  %2278 = vmatprep.subr.mxu0 0.0
  %2279 = vmatpush1.msra.mxu0 %v2182
  %2280 = vmatprep.subr.mxu0 0.0
  %2281 = vmatpush1.msra.mxu0 %v2183
  %2282 = vmatprep.subr.mxu0 0.0
  %2283 = vmatpush1.msra.mxu0 %v2184
  %2284 = vmatprep.subr.mxu0 0.0
  %2285 = vmatpush1.msra.mxu0 %v2185
  %2286 = vmatprep.subr.mxu0 0.0
  %2287 = vmatpush1.msra.mxu0 %v2186
  %2288 = vmatprep.subr.mxu0 0.0
  %2289 = vmatpush1.msra.mxu0 %v2187
  %2290 = vmatprep.subr.mxu0 0.0
  %2291 = vmatpush1.msra.mxu0 %v2188
  %2292 = vmatprep.subr.mxu0 0.0
  %2293 = vmatpush1.msra.mxu0 %v2189
  %2294 = vmatprep.subr.mxu0 0.0
  %2295 = vmatpush1.msra.mxu0 %v2190
  %2296 = vmatprep.subr.mxu0 0.0
  %2297 = vmatpush1.msra.mxu0 %v2191
  %2298 = vmatprep.subr.mxu0 0.0
  %2299 = vmatpush1.msra.mxu0 %v2192
  %2300 = vmatprep.subr.mxu0 0.0
  %2301 = vmatpush1.msra.mxu0 %v2193
  %2302 = vmatprep.subr.mxu0 0.0
  %2303 = vmatpush1.msra.mxu0 %v2194
  %2304 = vmatprep.subr.mxu0 0.0
  %2305 = vmatpush1.msra.mxu0 %v2195
  %2306 = vmatprep.subr.mxu0 0.0
  %2307 = vmatpush1.msra.mxu0 %v2196
  %2308 = vmatprep.subr.mxu0 0.0
  %2309 = vmatpush1.msra.mxu0 %v2197
  %2310 = vmatprep.subr.mxu0 0.0
  %2311 = vmatpush1.msra.mxu0 %v2198
  %2312 = vmatprep.mubr.f32.mxu0 %v2241
  %2313 = vmatmul.mubr.f32.gmra.mrb[0].mxu0 %v2240
  %v2314 = vpop.f32.mrb[0].mxu0
  %v2315 = vadd.f32 0.0, %v2314
  %v2316 = vpop.f32.mrb[0].mxu0
  %2317 = vdwg.mxu0
  %2318 = vmatprep.subr.mxu0 0.0
  %2319 = vmatpush1.msra.mxu0 %v2199
  %2320 = vmatprep.subr.mxu0 0.0
  %2321 = vmatpush1.msra.mxu0 %v2200
  %2322 = vmatprep.subr.mxu0 0.0
  %2323 = vmatpush1.msra.mxu0 %v2201
  %2324 = vmatprep.subr.mxu0 0.0
  %2325 = vmatpush1.msra.mxu0 %v2202
  %2326 = vmatprep.subr.mxu0 0.0
  %2327 = vmatpush1.msra.mxu0 %v2203
  %2328 = vmatprep.subr.mxu0 0.0
  %2329 = vmatpush1.msra.mxu0 %v2204
  %2330 = vmatprep.subr.mxu0 0.0
  %2331 = vmatpush1.msra.mxu0 %v2205
  %2332 = vmatprep.subr.mxu0 0.0
  %2333 = vmatpush1.msra.mxu0 %v2206
  %2334 = vmatprep.subr.mxu0 0.0
  %2335 = vmatpush1.msra.mxu0 %v2207
  %2336 = vmatprep.subr.mxu0 0.0
  %2337 = vmatpush1.msra.mxu0 %v2208
  %2338 = vmatprep.subr.mxu0 0.0
  %2339 = vmatpush1.msra.mxu0 %v2209
  %2340 = vmatprep.subr.mxu0 0.0
  %2341 = vmatpush1.msra.mxu0 %v2210
  %2342 = vmatprep.subr.mxu0 0.0
  %2343 = vmatpush1.msra.mxu0 %v2211
  %2344 = vmatprep.subr.mxu0 0.0
  %2345 = vmatpush1.msra.mxu0 %v2212
  %2346 = vmatprep.subr.mxu0 0.0
  %2347 = vmatpush1.msra.mxu0 %v2213
  %2348 = vmatprep.subr.mxu0 0.0
  %2349 = vmatpush1.msra.mxu0 %v2214
  %2350 = vmatprep.subr.mxu0 0.0
  %2351 = vmatpush1.msra.mxu0 %v2215
  %2352 = vmatprep.subr.mxu0 0.0
  %2353 = vmatpush1.msra.mxu0 %v2216
  %2354 = vmatprep.subr.mxu0 0.0
  %2355 = vmatpush1.msra.mxu0 %v2217
  %2356 = vmatprep.subr.mxu0 0.0
  %2357 = vmatpush1.msra.mxu0 %v2218
  %2358 = vmatprep.subr.mxu0 0.0
  %2359 = vmatpush1.msra.mxu0 %v2219
  %2360 = vmatprep.subr.mxu0 0.0
  %2361 = vmatpush1.msra.mxu0 %v2220
  %2362 = vmatprep.subr.mxu0 0.0
  %2363 = vmatpush1.msra.mxu0 %v2221
  %2364 = vmatprep.subr.mxu0 0.0
  %2365 = vmatpush1.msra.mxu0 %v2222
  %2366 = vmatprep.subr.mxu0 0.0
  %2367 = vmatpush1.msra.mxu0 %v2223
  %2368 = vmatprep.subr.mxu0 0.0
  %2369 = vmatpush1.msra.mxu0 %v2224
  %2370 = vmatprep.subr.mxu0 0.0
  %2371 = vmatpush1.msra.mxu0 %v2225
  %2372 = vmatprep.subr.mxu0 0.0
  %2373 = vmatpush1.msra.mxu0 %v2226
  %2374 = vmatprep.subr.mxu0 0.0
  %2375 = vmatpush1.msra.mxu0 %v2227
  %2376 = vmatprep.subr.mxu0 0.0
  %2377 = vmatpush1.msra.mxu0 %v2228
  %2378 = vmatprep.subr.mxu0 0.0
  %2379 = vmatpush1.msra.mxu0 %v2229
  %2380 = vmatprep.subr.mxu0 0.0
  %2381 = vmatpush1.msra.mxu0 %v2230
  %2382 = vmatprep.mubr.f32.mxu0 %v2243
  %2383 = vmatmul.mubr.f32.gmra.mrb[0].mxu0 %v2242
  %v2384 = vpop.f32.mrb[0].mxu0
  %v2385 = vadd.f32 %v2315, %v2384
  %v2386 = vpop.f32.mrb[0].mxu0
  %2387 = vdwg.mxu0
  %v2388 = vld [vmem:[%s8] sm:$0xff]
  %v2389 = vld [vmem:[%s8 + $0x8] sm:$0xff]
  %v2390 = vld [vmem:[%s8 + $0x10] sm:$0xff]
  %v2391 = vld [vmem:[%s8 + $0x18] sm:$0xff]
  %v2392 = vld [vmem:[%s9] sm:$0x1]
  %v2394 = vlaneseq
  %v2395 = vshrl.u32 %v2394, 7
  %v2396 = vsub.s32 0, %v2395
  %v2397 = vrot.slane %v2392, %v2396
  %vm2399 = vcmask 261120
  %v2401 = vsel %vm2399, %v2385, 0
  %2403 = vmatprep.subr.mxu0 0.0
  %2404 = vmatpush1.msra.mxu0 %v2388
  %2405 = vmatprep.subr.mxu0 0.0
  %2406 = vmatpush1.msra.mxu0 %v2389
  %2407 = vmatprep.subr.mxu0 0.0
  %2408 = vmatpush1.msra.mxu0 %v2390
  %2409 = vmatprep.subr.mxu0 0.0
  %2410 = vmatpush1.msra.mxu0 %v2391
  %2411 = vmatprep.subr.mxu0 0.0
  %2412 = vmatpush1.msra.mxu0 0.0
  %2413 = vmatprep.subr.mxu0 0.0
  %2414 = vmatpush1.msra.mxu0 0.0
  %2415 = vmatprep.subr.mxu0 0.0
  %2416 = vmatpush1.msra.mxu0 0.0
  %2417 = vmatprep.subr.mxu0 0.0
  %2418 = vmatpush1.msra.mxu0 0.0
  %2419 = vmatprep.subr.mxu0 0.0
  %2420 = vmatpush1.msra.mxu0 0.0
  %2421 = vmatprep.subr.mxu0 0.0
  %2422 = vmatpush1.msra.mxu0 0.0
  %2423 = vmatprep.subr.mxu0 0.0
  %2424 = vmatpush1.msra.mxu0 0.0
  %2425 = vmatprep.subr.mxu0 0.0
  %2426 = vmatpush1.msra.mxu0 0.0
  %2427 = vmatprep.subr.mxu0 0.0
  %2428 = vmatpush1.msra.mxu0 0.0
  %2429 = vmatprep.subr.mxu0 0.0
  %2430 = vmatpush1.msra.mxu0 0.0
  %2431 = vmatprep.subr.mxu0 0.0
  %2432 = vmatpush1.msra.mxu0 0.0
  %2433 = vmatprep.subr.mxu0 0.0
  %2434 = vmatpush1.msra.mxu0 0.0
  %2435 = vmatprep.subr.mxu0 0.0
  %2436 = vmatpush1.msra.mxu0 0.0
  %2437 = vmatprep.subr.mxu0 0.0
  %2438 = vmatpush1.msra.mxu0 0.0
  %2439 = vmatprep.subr.mxu0 0.0
  %2440 = vmatpush1.msra.mxu0 0.0
  %2441 = vmatprep.subr.mxu0 0.0
  %2442 = vmatpush1.msra.mxu0 0.0
  %2443 = vmatprep.subr.mxu0 0.0
  %2444 = vmatpush1.msra.mxu0 0.0
  %2445 = vmatprep.subr.mxu0 0.0
  %2446 = vmatpush1.msra.mxu0 0.0
  %2447 = vmatprep.subr.mxu0 0.0
  %2448 = vmatpush1.msra.mxu0 0.0
  %2449 = vmatprep.subr.mxu0 0.0
  %2450 = vmatpush1.msra.mxu0 0.0
  %2451 = vmatprep.subr.mxu0 0.0
  %2452 = vmatpush1.msra.mxu0 0.0
  %2453 = vmatprep.subr.mxu0 0.0
  %2454 = vmatpush1.msra.mxu0 0.0
  %2455 = vmatprep.subr.mxu0 0.0
  %2456 = vmatpush1.msra.mxu0 0.0
  %2457 = vmatprep.subr.mxu0 0.0
  %2458 = vmatpush1.msra.mxu0 0.0
  %2459 = vmatprep.subr.mxu0 0.0
  %2460 = vmatpush1.msra.mxu0 0.0
  %2461 = vmatprep.subr.mxu0 0.0
  %2462 = vmatpush1.msra.mxu0 0.0
  %2463 = vmatprep.subr.mxu0 0.0
  %2464 = vmatpush1.msra.mxu0 0.0
  %2465 = vmatprep.subr.mxu0 0.0
  %2466 = vmatpush1.msra.mxu0 0.0
  %2467 = vmatprep.mubr.f32.mxu0 0.0
  %2468 = vmatmul.mubr.f32.gmra.mrb[0].mxu0 %v2401
  %v2469 = vpop.f32.mrb[0].mxu0
  %v2470 = vadd.f32 %v2397, %v2469
  %v2471 = vpop.f32.mrb[0].mxu0
  %2472 = vdwg.mxu0
  %v2473 = vxor.u32 %v2470, 2147483648
  %v2474 = vmul.f32 %v2473, 1.442695
  %v2475 = vpow.pop %v2474
  %v2476 = vadd.f32 %v2475, 1.0
  %v2477 = vrcp.pop %v2476
  %v2478 = vmul.f32 1.0, %v2477
  %v2479 = vmul.f32 %v2470, %v2478
  %v2480 = vld [vmem:[%s10] sm:$0x3]
  %v2481 = vld [vmem:[%s11] sm:$0x1]
  %v2483 = vlaneseq
  %v2484 = vshrl.u32 %v2483, 7
  %v2485 = vsub.s32 0, %v2484
  %v2486 = vrot.slane %v2481, %v2485
  %vm2488 = vcmask 15360
  %v2490 = vsel %vm2488, %v2479, 0
  %vm2492 = vcmask 1041408
  %v2494 = vsel %vm2492, %v2480, 0
  %2496 = vmatprep.subr.mxu0 0.0
  %2497 = vmatpush1.msra.mxu0 %v2494
  %2498 = vmatprep.subr.mxu0 0.0
  %2499 = vmatpush1.msra.mxu0 0.0
  %2500 = vmatprep.subr.mxu0 0.0
  %2501 = vmatpush1.msra.mxu0 0.0
  %2502 = vmatprep.subr.mxu0 0.0
  %2503 = vmatpush1.msra.mxu0 0.0
  %2504 = vmatprep.subr.mxu0 0.0
  %2505 = vmatpush1.msra.mxu0 0.0
  %2506 = vmatprep.subr.mxu0 0.0
  %2507 = vmatpush1.msra.mxu0 0.0
  %2508 = vmatprep.subr.mxu0 0.0
  %2509 = vmatpush1.msra.mxu0 0.0
  %2510 = vmatprep.subr.mxu0 0.0
  %2511 = vmatpush1.msra.mxu0 0.0
  %2512 = vmatprep.subr.mxu0 0.0
  %2513 = vmatpush1.msra.mxu0 0.0
  %2514 = vmatprep.subr.mxu0 0.0
  %2515 = vmatpush1.msra.mxu0 0.0
  %2516 = vmatprep.subr.mxu0 0.0
  %2517 = vmatpush1.msra.mxu0 0.0
  %2518 = vmatprep.subr.mxu0 0.0
  %2519 = vmatpush1.msra.mxu0 0.0
  %2520 = vmatprep.subr.mxu0 0.0
  %2521 = vmatpush1.msra.mxu0 0.0
  %2522 = vmatprep.subr.mxu0 0.0
  %2523 = vmatpush1.msra.mxu0 0.0
  %2524 = vmatprep.subr.mxu0 0.0
  %2525 = vmatpush1.msra.mxu0 0.0
  %2526 = vmatprep.subr.mxu0 0.0
  %2527 = vmatpush1.msra.mxu0 0.0
  %2528 = vmatprep.subr.mxu0 0.0
  %2529 = vmatpush1.msra.mxu0 0.0
  %2530 = vmatprep.subr.mxu0 0.0
  %2531 = vmatpush1.msra.mxu0 0.0
  %2532 = vmatprep.subr.mxu0 0.0
  %2533 = vmatpush1.msra.mxu0 0.0
  %2534 = vmatprep.subr.mxu0 0.0
  %2535 = vmatpush1.msra.mxu0 0.0
  %2536 = vmatprep.subr.mxu0 0.0
  %2537 = vmatpush1.msra.mxu0 0.0
  %2538 = vmatprep.subr.mxu0 0.0
  %2539 = vmatpush1.msra.mxu0 0.0
  %2540 = vmatprep.subr.mxu0 0.0
  %2541 = vmatpush1.msra.mxu0 0.0
  %2542 = vmatprep.subr.mxu0 0.0
  %2543 = vmatpush1.msra.mxu0 0.0
  %2544 = vmatprep.subr.mxu0 0.0
  %2545 = vmatpush1.msra.mxu0 0.0
  %2546 = vmatprep.subr.mxu0 0.0
  %2547 = vmatpush1.msra.mxu0 0.0
  %2548 = vmatprep.subr.mxu0 0.0
  %2549 = vmatpush1.msra.mxu0 0.0
  %2550 = vmatprep.subr.mxu0 0.0
  %2551 = vmatpush1.msra.mxu0 0.0
  %2552 = vmatprep.subr.mxu0 0.0
  %2553 = vmatpush1.msra.mxu0 0.0
  %2554 = vmatprep.subr.mxu0 0.0
  %2555 = vmatpush1.msra.mxu0 0.0
  %2556 = vmatprep.subr.mxu0 0.0
  %2557 = vmatpush1.msra.mxu0 0.0
  %2558 = vmatprep.subr.mxu0 0.0
  %2559 = vmatpush1.msra.mxu0 0.0
  %2560 = vmatprep.mubr.f32.mxu0 0.0
  %2561 = vmatmul.mubr.f32.gmra.mrb[0].mxu0 %v2490
  %v2562 = vpop.f32.mrb[0].mxu0
  %v2563 = vadd.f32 %v2486, %v2562
  %v2564 = vpop.f32.mrb[0].mxu0
  %2565 = vdwg.mxu0
  %v2566 = vxor.u32 %v2563, 2147483648
  %v2567 = vmul.f32 %v2566, 1.442695
  %v2568 = vpow.pop %v2567
  %v2569 = vadd.f32 %v2568, 1.0
  %v2570 = vrcp.pop %v2569
  %v2571 = vmul.f32 1.0, %v2570
  %v2572 = vld [vmem:[%s12] sm:$0xff]
  %v2573 = vld [vmem:[%s12 + $0x8] sm:$0xff]
  %v2574 = vld [vmem:[%s12 + $0x10] sm:$0xff]
  %v2575 = vld [vmem:[%s12 + $0x18] sm:$0xff]
  %v2576 = vld [vmem:[%s12 + $0x20] sm:$0xff]
  %v2577 = vld [vmem:[%s12 + $0x28] sm:$0xff]
  %v2578 = vld [vmem:[%s12 + $0x30] sm:$0xff]
  %v2579 = vld [vmem:[%s12 + $0x38] sm:$0xff]
  %v2580 = vld [vmem:[%s12 + $0x40] sm:$0xff]
  %v2581 = vld [vmem:[%s12 + $0x48] sm:$0xff]
  %v2582 = vld [vmem:[%s12 + $0x50] sm:$0xff]
  %v2583 = vld [vmem:[%s12 + $0x58] sm:$0xff]
  %v2584 = vld [vmem:[%s12 + $0x60] sm:$0xff]
  %v2585 = vld [vmem:[%s12 + $0x68] sm:$0xff]
  %v2586 = vld [vmem:[%s12 + $0x70] sm:$0xff]
  %v2587 = vld [vmem:[%s12 + $0x78] sm:$0xff]
  %v2589 = vsel %vm2399, %v2571, 0
  %2591 = vmatprep.subr.mxu0 %v2573
  %2592 = vmatpush1.msra.mxu0 %v2572
  %2593 = vmatprep.subr.mxu0 %v2577
  %2594 = vmatpush1.msra.mxu0 %v2576
  %2595 = vmatprep.subr.mxu0 %v2581
  %2596 = vmatpush1.msra.mxu0 %v2580
  %2597 = vmatprep.subr.mxu0 %v2585
  %2598 = vmatpush1.msra.mxu0 %v2584
  %2599 = vmatprep.subr.mxu0 0.0
  %2600 = vmatpush1.msra.mxu0 0.0
  %2601 = vmatprep.subr.mxu0 0.0
  %2602 = vmatpush1.msra.mxu0 0.0
  %2603 = vmatprep.subr.mxu0 0.0
  %2604 = vmatpush1.msra.mxu0 0.0
  %2605 = vmatprep.subr.mxu0 0.0
  %2606 = vmatpush1.msra.mxu0 0.0
  %2607 = vmatprep.subr.mxu0 0.0
  %2608 = vmatpush1.msra.mxu0 0.0
  %2609 = vmatprep.subr.mxu0 0.0
  %2610 = vmatpush1.msra.mxu0 0.0
  %2611 = vmatprep.subr.mxu0 0.0
  %2612 = vmatpush1.msra.mxu0 0.0
  %2613 = vmatprep.subr.mxu0 0.0
  %2614 = vmatpush1.msra.mxu0 0.0
  %2615 = vmatprep.subr.mxu0 0.0
  %2616 = vmatpush1.msra.mxu0 0.0
  %2617 = vmatprep.subr.mxu0 0.0
  %2618 = vmatpush1.msra.mxu0 0.0
  %2619 = vmatprep.subr.mxu0 0.0
  %2620 = vmatpush1.msra.mxu0 0.0
  %2621 = vmatprep.subr.mxu0 0.0
  %2622 = vmatpush1.msra.mxu0 0.0
  %2623 = vmatprep.subr.mxu0 0.0
  %2624 = vmatpush1.msra.mxu0 0.0
  %2625 = vmatprep.subr.mxu0 0.0
  %2626 = vmatpush1.msra.mxu0 0.0
  %2627 = vmatprep.subr.mxu0 0.0
  %2628 = vmatpush1.msra.mxu0 0.0
  %2629 = vmatprep.subr.mxu0 0.0
  %2630 = vmatpush1.msra.mxu0 0.0
  %2631 = vmatprep.subr.mxu0 0.0
  %2632 = vmatpush1.msra.mxu0 0.0
  %2633 = vmatprep.subr.mxu0 0.0
  %2634 = vmatpush1.msra.mxu0 0.0
  %2635 = vmatprep.subr.mxu0 0.0
  %2636 = vmatpush1.msra.mxu0 0.0
  %2637 = vmatprep.subr.mxu0 0.0
  %2638 = vmatpush1.msra.mxu0 0.0
  %2639 = vmatprep.subr.mxu0 0.0
  %2640 = vmatpush1.msra.mxu0 0.0
  %2641 = vmatprep.subr.mxu0 0.0
  %2642 = vmatpush1.msra.mxu0 0.0
  %2643 = vmatprep.subr.mxu0 0.0
  %2644 = vmatpush1.msra.mxu0 0.0
  %2645 = vmatprep.subr.mxu0 0.0
  %2646 = vmatpush1.msra.mxu0 0.0
  %2647 = vmatprep.subr.mxu0 0.0
  %2648 = vmatpush1.msra.mxu0 0.0
  %2649 = vmatprep.subr.mxu0 0.0
  %2650 = vmatpush1.msra.mxu0 0.0
  %2651 = vmatprep.subr.mxu0 0.0
  %2652 = vmatpush1.msra.mxu0 0.0
  %2653 = vmatprep.subr.mxu0 0.0
  %2654 = vmatpush1.msra.mxu0 0.0
  %2655 = vmatprep.mubr.f32.mxu0 0.0
  %2656 = vmatmul.mubr.f32.gmra.mrb[0].mxu0 %v2589
  %v2657 = vpop.f32.mrb[0].mxu0
  %v2658 = vadd.f32 0.0, %v2657
  %v2659 = vpop.f32.mrb[0].mxu0
  %v2660 = vadd.f32 0.0, %v2659
  %2661 = vdwg.mxu0
  %2662 = vmatprep.subr.mxu0 %v2575
  %2663 = vmatpush1.msra.mxu0 %v2574
  %2664 = vmatprep.subr.mxu0 %v2579
  %2665 = vmatpush1.msra.mxu0 %v2578
  %2666 = vmatprep.subr.mxu0 %v2583
  %2667 = vmatpush1.msra.mxu0 %v2582
  %2668 = vmatprep.subr.mxu0 %v2587
  %2669 = vmatpush1.msra.mxu0 %v2586
  %2670 = vmatprep.subr.mxu0 0.0
  %2671 = vmatpush1.msra.mxu0 0.0
  %2672 = vmatprep.subr.mxu0 0.0
  %2673 = vmatpush1.msra.mxu0 0.0
  %2674 = vmatprep.subr.mxu0 0.0
  %2675 = vmatpush1.msra.mxu0 0.0
  %2676 = vmatprep.subr.mxu0 0.0
  %2677 = vmatpush1.msra.mxu0 0.0
  %2678 = vmatprep.subr.mxu0 0.0
  %2679 = vmatpush1.msra.mxu0 0.0
  %2680 = vmatprep.subr.mxu0 0.0
  %2681 = vmatpush1.msra.mxu0 0.0
  %2682 = vmatprep.subr.mxu0 0.0
  %2683 = vmatpush1.msra.mxu0 0.0
  %2684 = vmatprep.subr.mxu0 0.0
  %2685 = vmatpush1.msra.mxu0 0.0
  %2686 = vmatprep.subr.mxu0 0.0
  %2687 = vmatpush1.msra.mxu0 0.0
  %2688 = vmatprep.subr.mxu0 0.0
  %2689 = vmatpush1.msra.mxu0 0.0
  %2690 = vmatprep.subr.mxu0 0.0
  %2691 = vmatpush1.msra.mxu0 0.0
  %2692 = vmatprep.subr.mxu0 0.0
  %2693 = vmatpush1.msra.mxu0 0.0
  %2694 = vmatprep.subr.mxu0 0.0
  %2695 = vmatpush1.msra.mxu0 0.0
  %2696 = vmatprep.subr.mxu0 0.0
  %2697 = vmatpush1.msra.mxu0 0.0
  %2698 = vmatprep.subr.mxu0 0.0
  %2699 = vmatpush1.msra.mxu0 0.0
  %2700 = vmatprep.subr.mxu0 0.0
  %2701 = vmatpush1.msra.mxu0 0.0
  %2702 = vmatprep.subr.mxu0 0.0
  %2703 = vmatpush1.msra.mxu0 0.0
  %2704 = vmatprep.subr.mxu0 0.0
  %2705 = vmatpush1.msra.mxu0 0.0
  %2706 = vmatprep.subr.mxu0 0.0
  %2707 = vmatpush1.msra.mxu0 0.0
  %2708 = vmatprep.subr.mxu0 0.0
  %2709 = vmatpush1.msra.mxu0 0.0
  %2710 = vmatprep.subr.mxu0 0.0
  %2711 = vmatpush1.msra.mxu0 0.0
  %2712 = vmatprep.subr.mxu0 0.0
  %2713 = vmatpush1.msra.mxu0 0.0
  %2714 = vmatprep.subr.mxu0 0.0
  %2715 = vmatpush1.msra.mxu0 0.0
  %2716 = vmatprep.subr.mxu0 0.0
  %2717 = vmatpush1.msra.mxu0 0.0
  %2718 = vmatprep.subr.mxu0 0.0
  %2719 = vmatpush1.msra.mxu0 0.0
  %2720 = vmatprep.subr.mxu0 0.0
  %2721 = vmatpush1.msra.mxu0 0.0
  %2722 = vmatprep.subr.mxu0 0.0
  %2723 = vmatpush1.msra.mxu0 0.0
  %2724 = vmatprep.subr.mxu0 0.0
  %2725 = vmatpush1.msra.mxu0 0.0
  %2726 = vmatprep.mubr.f32.mxu0 0.0
  %2727 = vmatmul.mubr.f32.gmra.mrb[0].mxu0 %v2589
  %v2728 = vpop.f32.mrb[0].mxu0
  %v2729 = vadd.f32 0.0, %v2728
  %v2730 = vpop.f32.mrb[0].mxu0
  %v2731 = vadd.f32 0.0, %v2730
  %2732 = vdwg.mxu0
  %v2737 = vcombine.low %v2658, %v2660
  %v2738 = vcombine.low %v2729, %v2731
  %v2740 = vunpack.c.l.s4 1966171168
  %v2741 = vunpack.c.0.s8 %v2740
  %v2742 = vlaneseq
  %v2743 = vshrl.u32 %v2742, 7
  %v2744 = vsub.s32 %v2741, %v2743
  %v2745 = vrot.slane %v2737, %v2744
  %v2747 = vunpack.c.l.s4 1966171168
  %v2748 = vunpack.c.0.s8 %v2747
  %v2749 = vlaneseq
  %v2750 = vshrl.u32 %v2749, 7
  %v2751 = vsub.s32 %v2748, %v2750
  %v2752 = vrot.slane %v2738, %v2751
  %v2753 = vcombine.low %v2745, %v2752
  %v2754 = vcombine.high %v2745, %v2752
  %v2756 = vunpack.c.l.s4 1966171168
  %v2757 = vunpack.c.0.s8 %v2756
  %v2758 = vlaneseq
  %v2759 = vshrl.u32 %v2758, 7
  %v2760 = vsub.s32 %v2757, %v2759
  %v2761 = vrot.slane %v2753, %v2760
  %v2763 = vunpack.c.l.s4 1966171168
  %v2764 = vunpack.c.0.s8 %v2763
  %v2765 = vlaneseq
  %v2766 = vshrl.u32 %v2765, 7
  %v2767 = vsub.s32 %v2764, %v2766
  %v2768 = vrot.slane %v2754, %v2767
  %v2769 = vlaneseq
  %v2770 = vshrl.u32 %v2769, 7
  %v2771 = vsub.s32 0, %v2770
  %v2772 = vrot.slane %v2761, %v2771
  %v2773 = vlaneseq
  %v2774 = vshrl.u32 %v2773, 7
  %v2775 = vsub.s32 1, %v2774
  %v2776 = vrot.slane %v2761, %v2775
  %v2777 = vlaneseq
  %v2778 = vshrl.u32 %v2777, 7
  %v2779 = vsub.s32 2, %v2778
  %v2780 = vrot.slane %v2761, %v2779
  %v2781 = vlaneseq
  %v2782 = vshrl.u32 %v2781, 7
  %v2783 = vsub.s32 3, %v2782
  %v2784 = vrot.slane %v2761, %v2783
  %v2785 = vlaneseq
  %v2786 = vshrl.u32 %v2785, 7
  %v2787 = vsub.s32 0, %v2786
  %v2788 = vrot.slane %v2768, %v2787
  %v2789 = vlaneseq
  %v2790 = vshrl.u32 %v2789, 7
  %v2791 = vsub.s32 1, %v2790
  %v2792 = vrot.slane %v2768, %v2791
  %v2793 = vlaneseq
  %v2794 = vshrl.u32 %v2793, 7
  %v2795 = vsub.s32 2, %v2794
  %v2796 = vrot.slane %v2768, %v2795
  %v2797 = vlaneseq
  %v2798 = vshrl.u32 %v2797, 7
  %v2799 = vsub.s32 3, %v2798
  %v2800 = vrot.slane %v2768, %v2799
  %v2809 = vmul.f32 %v2086, %v2772
  %v2810 = vmul.f32 %v2087, %v2776
  %v2811 = vmul.f32 %v2088, %v2780
  %v2812 = vmul.f32 %v2089, %v2784
  %v2813 = vmul.f32 %v2090, %v2772
  %v2814 = vmul.f32 %v2091, %v2776
  %v2815 = vmul.f32 %v2092, %v2780
  %v2816 = vmul.f32 %v2093, %v2784
  %v2817 = vmul.f32 %v2094, %v2788
  %v2818 = vmul.f32 %v2095, %v2792
  %v2819 = vmul.f32 %v2096, %v2796
  %v2820 = vmul.f32 %v2097, %v2800
  %v2821 = vmul.f32 %v2098, %v2788
  %v2822 = vmul.f32 %v2099, %v2792
  %v2823 = vmul.f32 %v2100, %v2796
  %v2824 = vmul.f32 %v2101, %v2800
  %v2825 = vpack.c.bf16 %v2813, %v2809
  %v2826 = vpack.c.bf16 %v2814, %v2810
  %v2827 = vpack.c.bf16 %v2815, %v2811
  %v2828 = vpack.c.bf16 %v2816, %v2812
  %v2829 = vpack.c.bf16 %v2821, %v2817
  %v2830 = vpack.c.bf16 %v2822, %v2818
  %v2831 = vpack.c.bf16 %v2823, %v2819
  %v2832 = vpack.c.bf16 %v2824, %v2820
  %v2833 = vld [vmem:[%s13] sm:$0xf]
  %v2834 = vld [vmem:[%s13 + $0x4] sm:$0xf]
  %v2835 = vld [vmem:[%s13 + $0x8] sm:$0xf]
  %v2836 = vld [vmem:[%s13 + $0xc] sm:$0xf]
  %v2837 = vld [vmem:[%s13 + $0x10] sm:$0xf]
  %v2838 = vld [vmem:[%s13 + $0x14] sm:$0xf]
  %v2839 = vld [vmem:[%s13 + $0x18] sm:$0xf]
  %v2840 = vld [vmem:[%s13 + $0x1c] sm:$0xf]
  %v2841 = vld [vmem:[%s13 + $0x20] sm:$0xf]
  %v2842 = vld [vmem:[%s13 + $0x24] sm:$0xf]
  %v2843 = vld [vmem:[%s13 + $0x28] sm:$0xf]
  %v2844 = vld [vmem:[%s13 + $0x2c] sm:$0xf]
  %v2845 = vld [vmem:[%s13 + $0x30] sm:$0xf]
  %v2846 = vld [vmem:[%s13 + $0x34] sm:$0xf]
  %v2847 = vld [vmem:[%s13 + $0x38] sm:$0xf]
  %v2848 = vld [vmem:[%s13 + $0x3c] sm:$0xf]
  %v2849 = vld [vmem:[%s13 + $0x40] sm:$0xf]
  %v2850 = vld [vmem:[%s13 + $0x44] sm:$0xf]
  %v2851 = vld [vmem:[%s13 + $0x48] sm:$0xf]
  %v2852 = vld [vmem:[%s13 + $0x4c] sm:$0xf]
  %v2853 = vld [vmem:[%s13 + $0x50] sm:$0xf]
  %v2854 = vld [vmem:[%s13 + $0x54] sm:$0xf]
  %v2855 = vld [vmem:[%s13 + $0x58] sm:$0xf]
  %v2856 = vld [vmem:[%s13 + $0x5c] sm:$0xf]
  %v2857 = vld [vmem:[%s13 + $0x60] sm:$0xf]
  %v2858 = vld [vmem:[%s13 + $0x64] sm:$0xf]
  %v2859 = vld [vmem:[%s13 + $0x68] sm:$0xf]
  %v2860 = vld [vmem:[%s13 + $0x6c] sm:$0xf]
  %v2861 = vld [vmem:[%s13 + $0x70] sm:$0xf]
  %v2862 = vld [vmem:[%s13 + $0x74] sm:$0xf]
  %v2863 = vld [vmem:[%s13 + $0x78] sm:$0xf]
  %v2864 = vld [vmem:[%s13 + $0x7c] sm:$0xf]
  %v2865 = vld [vmem:[%s13 + $0x80] sm:$0xf]
  %v2866 = vld [vmem:[%s13 + $0x84] sm:$0xf]
  %v2867 = vld [vmem:[%s13 + $0x88] sm:$0xf]
  %v2868 = vld [vmem:[%s13 + $0x8c] sm:$0xf]
  %v2869 = vld [vmem:[%s13 + $0x90] sm:$0xf]
  %v2870 = vld [vmem:[%s13 + $0x94] sm:$0xf]
  %v2871 = vld [vmem:[%s13 + $0x98] sm:$0xf]
  %v2872 = vld [vmem:[%s13 + $0x9c] sm:$0xf]
  %v2873 = vld [vmem:[%s13 + $0xa0] sm:$0xf]
  %v2874 = vld [vmem:[%s13 + $0xa4] sm:$0xf]
  %v2875 = vld [vmem:[%s13 + $0xa8] sm:$0xf]
  %v2876 = vld [vmem:[%s13 + $0xac] sm:$0xf]
  %v2877 = vld [vmem:[%s13 + $0xb0] sm:$0xf]
  %v2878 = vld [vmem:[%s13 + $0xb4] sm:$0xf]
  %v2879 = vld [vmem:[%s13 + $0xb8] sm:$0xf]
  %v2880 = vld [vmem:[%s13 + $0xbc] sm:$0xf]
  %v2881 = vld [vmem:[%s13 + $0xc0] sm:$0xf]
  %v2882 = vld [vmem:[%s13 + $0xc4] sm:$0xf]
  %v2883 = vld [vmem:[%s13 + $0xc8] sm:$0xf]
  %v2884 = vld [vmem:[%s13 + $0xcc] sm:$0xf]
  %v2885 = vld [vmem:[%s13 + $0xd0] sm:$0xf]
  %v2886 = vld [vmem:[%s13 + $0xd4] sm:$0xf]
  %v2887 = vld [vmem:[%s13 + $0xd8] sm:$0xf]
  %v2888 = vld [vmem:[%s13 + $0xdc] sm:$0xf]
  %v2889 = vld [vmem:[%s13 + $0xe0] sm:$0xf]
  %v2890 = vld [vmem:[%s13 + $0xe4] sm:$0xf]
  %v2891 = vld [vmem:[%s13 + $0xe8] sm:$0xf]
  %v2892 = vld [vmem:[%s13 + $0xec] sm:$0xf]
  %v2893 = vld [vmem:[%s13 + $0xf0] sm:$0xf]
  %v2894 = vld [vmem:[%s13 + $0xf4] sm:$0xf]
  %v2895 = vld [vmem:[%s13 + $0xf8] sm:$0xf]
  %v2896 = vld [vmem:[%s13 + $0xfc] sm:$0xf]
  %v2961 = vunpack.c.l.b16 %v2833
  %v2962 = vunpack.c.l.b16 %v2834
  %v2963 = vunpack.c.l.b16 %v2835
  %v2964 = vunpack.c.l.b16 %v2836
  %v2965 = vunpack.c.l.b16 %v2837
  %v2966 = vunpack.c.l.b16 %v2838
  %v2967 = vunpack.c.l.b16 %v2839
  %v2968 = vunpack.c.l.b16 %v2840
  %v2969 = vunpack.c.l.b16 %v2841
  %v2970 = vunpack.c.l.b16 %v2842
  %v2971 = vunpack.c.l.b16 %v2843
  %v2972 = vunpack.c.l.b16 %v2844
  %v2973 = vunpack.c.l.b16 %v2845
  %v2974 = vunpack.c.l.b16 %v2846
  %v2975 = vunpack.c.l.b16 %v2847
  %v2976 = vunpack.c.l.b16 %v2848
  %v2977 = vunpack.c.l.b16 %v2849
  %v2978 = vunpack.c.l.b16 %v2850
  %v2979 = vunpack.c.l.b16 %v2851
  %v2980 = vunpack.c.l.b16 %v2852
  %v2981 = vunpack.c.l.b16 %v2853
  %v2982 = vunpack.c.l.b16 %v2854
  %v2983 = vunpack.c.l.b16 %v2855
  %v2984 = vunpack.c.l.b16 %v2856
  %v2985 = vunpack.c.l.b16 %v2857
  %v2986 = vunpack.c.l.b16 %v2858
  %v2987 = vunpack.c.l.b16 %v2859
  %v2988 = vunpack.c.l.b16 %v2860
  %v2989 = vunpack.c.l.b16 %v2861
  %v2990 = vunpack.c.l.b16 %v2862
  %v2991 = vunpack.c.l.b16 %v2863
  %v2992 = vunpack.c.l.b16 %v2864
  %v2993 = vunpack.c.l.b16 %v2865
  %v2994 = vunpack.c.l.b16 %v2866
  %v2995 = vunpack.c.l.b16 %v2867
  %v2996 = vunpack.c.l.b16 %v2868
  %v2997 = vunpack.c.l.b16 %v2869
  %v2998 = vunpack.c.l.b16 %v2870
  %v2999 = vunpack.c.l.b16 %v2871
  %v3000 = vunpack.c.l.b16 %v2872
  %v3001 = vunpack.c.l.b16 %v2873
  %v3002 = vunpack.c.l.b16 %v2874
  %v3003 = vunpack.c.l.b16 %v2875
  %v3004 = vunpack.c.l.b16 %v2876
  %v3005 = vunpack.c.l.b16 %v2877
  %v3006 = vunpack.c.l.b16 %v2878
  %v3007 = vunpack.c.l.b16 %v2879
  %v3008 = vunpack.c.l.b16 %v2880
  %v3009 = vunpack.c.l.b16 %v2881
  %v3010 = vunpack.c.l.b16 %v2882
  %v3011 = vunpack.c.l.b16 %v2883
  %v3012 = vunpack.c.l.b16 %v2884
  %v3013 = vunpack.c.l.b16 %v2885
  %v3014 = vunpack.c.l.b16 %v2886
  %v3015 = vunpack.c.l.b16 %v2887
  %v3016 = vunpack.c.l.b16 %v2888
  %v3017 = vunpack.c.l.b16 %v2889
  %v3018 = vunpack.c.l.b16 %v2890
  %v3019 = vunpack.c.l.b16 %v2891
  %v3020 = vunpack.c.l.b16 %v2892
  %v3021 = vunpack.c.l.b16 %v2893
  %v3022 = vunpack.c.l.b16 %v2894
  %v3023 = vunpack.c.l.b16 %v2895
  %v3024 = vunpack.c.l.b16 %v2896
  %v3025 = vpack.c.b16 %v2962, %v2961
  %v3026 = vpack.c.b16 %v2964, %v2963
  %v3027 = vpack.c.b16 %v2966, %v2965
  %v3028 = vpack.c.b16 %v2968, %v2967
  %v3029 = vpack.c.b16 %v2970, %v2969
  %v3030 = vpack.c.b16 %v2972, %v2971
  %v3031 = vpack.c.b16 %v2974, %v2973
  %v3032 = vpack.c.b16 %v2976, %v2975
  %v3033 = vpack.c.b16 %v2978, %v2977
  %v3034 = vpack.c.b16 %v2980, %v2979
  %v3035 = vpack.c.b16 %v2982, %v2981
  %v3036 = vpack.c.b16 %v2984, %v2983
  %v3037 = vpack.c.b16 %v2986, %v2985
  %v3038 = vpack.c.b16 %v2988, %v2987
  %v3039 = vpack.c.b16 %v2990, %v2989
  %v3040 = vpack.c.b16 %v2992, %v2991
  %v3041 = vpack.c.b16 %v2994, %v2993
  %v3042 = vpack.c.b16 %v2996, %v2995
  %v3043 = vpack.c.b16 %v2998, %v2997
  %v3044 = vpack.c.b16 %v3000, %v2999
  %v3045 = vpack.c.b16 %v3002, %v3001
  %v3046 = vpack.c.b16 %v3004, %v3003
  %v3047 = vpack.c.b16 %v3006, %v3005
  %v3048 = vpack.c.b16 %v3008, %v3007
  %v3049 = vpack.c.b16 %v3010, %v3009
  %v3050 = vpack.c.b16 %v3012, %v3011
  %v3051 = vpack.c.b16 %v3014, %v3013
  %v3052 = vpack.c.b16 %v3016, %v3015
  %v3053 = vpack.c.b16 %v3018, %v3017
  %v3054 = vpack.c.b16 %v3020, %v3019
  %v3055 = vpack.c.b16 %v3022, %v3021
  %v3056 = vpack.c.b16 %v3024, %v3023
  %3089 = vmatprep.subr.bf16.mxu0 0
  %3090 = vmatpush1.bf16.msra.mxu0 %v3025
  %3091 = vmatprep.subr.bf16.mxu0 0
  %3092 = vmatpush1.bf16.msra.mxu0 %v3026
  %3093 = vmatprep.subr.bf16.mxu0 0
  %3094 = vmatpush1.bf16.msra.mxu0 %v3027
  %3095 = vmatprep.subr.bf16.mxu0 0
  %3096 = vmatpush1.bf16.msra.mxu0 %v3028
  %3097 = vmatprep.subr.bf16.mxu0 0
  %3098 = vmatpush1.bf16.msra.mxu0 %v3029
  %3099 = vmatprep.subr.bf16.mxu0 0
  %3100 = vmatpush1.bf16.msra.mxu0 %v3030
  %3101 = vmatprep.subr.bf16.mxu0 0
  %3102 = vmatpush1.bf16.msra.mxu0 %v3031
  %3103 = vmatprep.subr.bf16.mxu0 0
  %3104 = vmatpush1.bf16.msra.mxu0 %v3032
  %3105 = vmatprep.subr.bf16.mxu0 0
  %3106 = vmatpush1.bf16.msra.mxu0 %v3033
  %3107 = vmatprep.subr.bf16.mxu0 0
  %3108 = vmatpush1.bf16.msra.mxu0 %v3034
  %3109 = vmatprep.subr.bf16.mxu0 0
  %3110 = vmatpush1.bf16.msra.mxu0 %v3035
  %3111 = vmatprep.subr.bf16.mxu0 0
  %3112 = vmatpush1.bf16.msra.mxu0 %v3036
  %3113 = vmatprep.subr.bf16.mxu0 0
  %3114 = vmatpush1.bf16.msra.mxu0 %v3037
  %3115 = vmatprep.subr.bf16.mxu0 0
  %3116 = vmatpush1.bf16.msra.mxu0 %v3038
  %3117 = vmatprep.subr.bf16.mxu0 0
  %3118 = vmatpush1.bf16.msra.mxu0 %v3039
  %3119 = vmatprep.subr.bf16.mxu0 0
  %3120 = vmatpush1.bf16.msra.mxu0 %v3040
  %3121 = vmatprep.mubr.bf16.mxu0 %v2826
  %3122 = vmatmul.mubr.bf16.gmra.mrb[0].mxu0 %v2825
  %v3123 = vpop.f32.mrb[0].mxu0
  %v3124 = vadd.f32 0.0, %v3123
  %v3125 = vpop.f32.mrb[0].mxu0
  %v3126 = vpop.f32.mrb[0].mxu0
  %v3127 = vadd.f32 0.0, %v3126
  %v3128 = vpop.f32.mrb[0].mxu0
  %3129 = vmatprep.mubr.bf16.mxu0 %v2830
  %3130 = vmatmul.mubr.bf16.gmra.mrb[0].mxu0 %v2829
  %v3131 = vpop.f32.mrb[0].mxu0
  %v3132 = vadd.f32 0.0, %v3131
  %v3133 = vpop.f32.mrb[0].mxu0
  %v3134 = vpop.f32.mrb[0].mxu0
  %v3135 = vadd.f32 0.0, %v3134
  %v3136 = vpop.f32.mrb[0].mxu0
  %3137 = vdwg.mxu0
  %3138 = vmatprep.subr.bf16.mxu0 0
  %3139 = vmatpush1.bf16.msra.mxu0 %v3041
  %3140 = vmatprep.subr.bf16.mxu0 0
  %3141 = vmatpush1.bf16.msra.mxu0 %v3042
  %3142 = vmatprep.subr.bf16.mxu0 0
  %3143 = vmatpush1.bf16.msra.mxu0 %v3043
  %3144 = vmatprep.subr.bf16.mxu0 0
  %3145 = vmatpush1.bf16.msra.mxu0 %v3044
  %3146 = vmatprep.subr.bf16.mxu0 0
  %3147 = vmatpush1.bf16.msra.mxu0 %v3045
  %3148 = vmatprep.subr.bf16.mxu0 0
  %3149 = vmatpush1.bf16.msra.mxu0 %v3046
  %3150 = vmatprep.subr.bf16.mxu0 0
  %3151 = vmatpush1.bf16.msra.mxu0 %v3047
  %3152 = vmatprep.subr.bf16.mxu0 0
  %3153 = vmatpush1.bf16.msra.mxu0 %v3048
  %3154 = vmatprep.subr.bf16.mxu0 0
  %3155 = vmatpush1.bf16.msra.mxu0 %v3049
  %3156 = vmatprep.subr.bf16.mxu0 0
  %3157 = vmatpush1.bf16.msra.mxu0 %v3050
  %3158 = vmatprep.subr.bf16.mxu0 0
  %3159 = vmatpush1.bf16.msra.mxu0 %v3051
  %3160 = vmatprep.subr.bf16.mxu0 0
  %3161 = vmatpush1.bf16.msra.mxu0 %v3052
  %3162 = vmatprep.subr.bf16.mxu0 0
  %3163 = vmatpush1.bf16.msra.mxu0 %v3053
  %3164 = vmatprep.subr.bf16.mxu0 0
  %3165 = vmatpush1.bf16.msra.mxu0 %v3054
  %3166 = vmatprep.subr.bf16.mxu0 0
  %3167 = vmatpush1.bf16.msra.mxu0 %v3055
  %3168 = vmatprep.subr.bf16.mxu0 0
  %3169 = vmatpush1.bf16.msra.mxu0 %v3056
  %3170 = vmatprep.mubr.bf16.mxu0 %v2828
  %3171 = vmatmul.mubr.bf16.gmra.mrb[0].mxu0 %v2827
  %v3172 = vpop.f32.mrb[0].mxu0
  %v3173 = vadd.f32 %v3124, %v3172
  %v3174 = vpop.f32.mrb[0].mxu0
  %v3175 = vpop.f32.mrb[0].mxu0
  %v3176 = vadd.f32 %v3127, %v3175
  %v3177 = vpop.f32.mrb[0].mxu0
  %3178 = vmatprep.mubr.bf16.mxu0 %v2832
  %3179 = vmatmul.mubr.bf16.gmra.mrb[0].mxu0 %v2831
  %v3180 = vpop.f32.mrb[0].mxu0
  %v3181 = vadd.f32 %v3132, %v3180
  %v3182 = vpop.f32.mrb[0].mxu0
  %v3183 = vpop.f32.mrb[0].mxu0
  %v3184 = vadd.f32 %v3135, %v3183
  %v3185 = vpop.f32.mrb[0].mxu0
  %3186 = vdwg.mxu0
  %v3187 = vld [vmem:[%s14] sm:$0x1]
  %v3189 = vlaneseq
  %v3190 = vshrl.u32 %v3189, 7
  %v3191 = vsub.s32 0, %v3190
  %v3192 = vrot.slane %v3187, %v3191
  %v3194 = vmul.f32 %v3173, %v3192
  %v3195 = vmul.f32 %v3176, %v3192
  %v3196 = vmul.f32 %v3181, %v3192
  %v3197 = vmul.f32 %v3184, %v3192
  %v3198 = vld [vmem:[%s15] sm:$0x1]
  %v3200 = vlaneseq
  %v3201 = vshrl.u32 %v3200, 7
  %v3202 = vsub.s32 0, %v3201
  %v3203 = vrot.slane %v3198, %v3202
  %v3205 = vadd.f32 %v3194, %v3203
  %v3206 = vadd.f32 %v3195, %v3203
  %v3207 = vadd.f32 %v3196, %v3203
  %v3208 = vadd.f32 %v3197, %v3203
  %v3209 = vunpack.c.l.bf16 %v54
  %v3210 = vunpack.c.l.bf16 %v55
  %v3211 = vunpack.c.l.bf16 %v56
  %v3212 = vunpack.c.l.bf16 %v57
  %v3213 = vadd.f32 %v3205, %v3209
  %v3214 = vadd.f32 %v3206, %v3210
  %v3215 = vadd.f32 %v3207, %v3211
  %v3216 = vadd.f32 %v3208, %v3212
  %v3217 = vpack.c.bf16 %v3214, %v3213
  %v3218 = vpack.c.bf16 %v3216, %v3215
  %v3221 = vunpack.c.l.b16 %v3217
  %v3222 = vunpack.c.h.b16 %v3217
  %v3223 = vunpack.c.l.b16 %v3218
  %v3224 = vunpack.c.h.b16 %v3218
  %v3225 = vpack.c.b16 %v3221, %v3221
  %v3226 = vpack.c.b16 %v3222, %v3222
  %v3227 = vpack.c.b16 %v3223, %v3223
  %v3228 = vpack.c.b16 %v3224, %v3224
  %3233 = vst [vmem:[%s16] sm:$0xf] %v3225
  %3234 = vst [vmem:[%s16 + $0x4] sm:$0xf] %v3226
  %3235 = vst [vmem:[%s16 + $0x8] sm:$0xf] %v3227
  %3236 = vst [vmem:[%s16 + $0xc] sm:$0xf] %v3228
  // Predicated region
  $region66: #{mbconv_forward.1} parent=0 // pred_check
    _
  $region67: #{mbconv_forward.1} parent=0 // pred_check_branch
    %3238 = sbr.rel (0) target = $region69
  $region68: #{mbconv_forward.1} parent=0 // pred_region
    _
  $region69: #{mbconv_forward.1} parent=0 // pred_fallthru
    _
  // Predicated region
  $region70: #{mbconv_forward.1} parent=0 // pred_check
    _
  $region71: #{mbconv_forward.1} parent=0 // pred_check_branch
    %3240 = sbr.rel (0) target = $region73
  $region72: #{mbconv_forward.1} parent=0 // pred_region
    _
  $region73: #{mbconv_forward.1} parent=0 // pred_fallthru
    _

</llo_original>
